<compile_context>
chip_gen: v6e
topology: v6e:2x2x1
jax: 0.10.0
libtpu: 0.0.40
codegen_flags: <defaults>
</compile_context>

<pallas_src>
import math

import jax
import jax.numpy as jnp
from jax import lax
from jax.experimental import pallas as pl
from jax.experimental.pallas import tpu as pltpu

# Model hyper-parameters (small, consistent with the module's forward).
D_MODEL = 32
NHEAD = 4
HEAD_DIM = D_MODEL // NHEAD
DIM_FF = 64
NUM_LAYERS = 2
LN_EPS = 1e-5
LANES = 128

# ---- bf16 weight slab layout: (W_ROWS, 128) per layer -----------------------
# Each weight that contracts against a 128-lane (zero-padded) activation gets a
# full 128-sublane slot; unused rows/cols are zero, so padded activation lanes
# contribute exactly zero.  All offsets are multiples of 16 (bf16 packing).
WROW_QK = 0      # rows [  0,128): [Wq^T | Wk^T] in rows 0..31, cols 0..63
WROW_V = 128     # rows [128,256): Wv^T in rows 0..31, cols 0..31
WROW_1 = 256     # rows [256,384): W1^T in rows 0..31, cols 0..63
WROW_2 = 384     # rows [384,512): W2^T in rows 0..63, cols 0..31
WROW_O = 512     # rows [512,544): Wo^T (32 rows), cols 0..31
W_ROWS = 544

# ---- f32 vector slab (biases + LayerNorm params), zero padded to 128 lanes --
VROW_BQK = 0     # [bq | bk] cols 0..63
VROW_BV = 1      # cols 0..31
VROW_BO = 2      # cols 0..31
VROW_B1 = 3      # cols 0..63
VROW_B2 = 4      # cols 0..31
VROW_LN1W = 5
VROW_LN1B = 6
VROW_LN2W = 7
VROW_LN2B = 8
VEC_ROWS = 16


def make_fused_encoder_kernel(num_layers, pe_only_at_begin):
    """All layers fused; one batch element per grid step; activations in VMEM."""
    scale = 1.0 / math.sqrt(HEAD_DIM)
    inv_d = 1.0 / D_MODEL
    d = D_MODEL

    def kernel(x_ref, pos_ref, w_ref, vec_ref, out_ref):
        # x/pos blocks: (1, S, 128) f32, lanes >= D are zero (wrapper pads).
        x = x_ref[0]
        pos = pos_ref[0]
        # TODO(synk): src_mask / src_key_padding_mask not implemented (None only).

        for l in range(num_layers):                      # static unrolled layers
            # bf16 weight tiles, full 128-lane width (zero padded).
            wqk_t = w_ref[l, WROW_QK:WROW_QK + LANES, :]   # (128,128)
            wv_t = w_ref[l, WROW_V:WROW_V + LANES, :]      # (128,128)
            w1_t = w_ref[l, WROW_1:WROW_1 + LANES, :]      # (128,128)
            w2_t = w_ref[l, WROW_2:WROW_2 + LANES, :]      # (128,128)
            wo_t = w_ref[l, WROW_O:WROW_O + d, :]          # (32,128)
            # f32 bias / LayerNorm rows, full 128-lane width (zero padded).
            bqk = vec_ref[l, VROW_BQK:VROW_BQK + 1, :]
            bv = vec_ref[l, VROW_BV:VROW_BV + 1, :]
            bo = vec_ref[l, VROW_BO:VROW_BO + 1, :]
            b1 = vec_ref[l, VROW_B1:VROW_B1 + 1, :]
            b2 = vec_ref[l, VROW_B2:VROW_B2 + 1, :]
            ln1w = vec_ref[l, VROW_LN1W:VROW_LN1W + 1, :]
            ln1b = vec_ref[l, VROW_LN1B:VROW_LN1B + 1, :]
            ln2w = vec_ref[l, VROW_LN2W:VROW_LN2W + 1, :]
            ln2b = vec_ref[l, VROW_LN2B:VROW_LN2B + 1, :]

            use_pos = (l == 0) or (not pe_only_at_begin)
            qk_in = x + pos if use_pos else x            # with_pos_embed(src, pos)

            # Fused q|k projection and v projection: bf16 on the MXU, f32 acc.
            qk = jnp.dot(qk_in.astype(jnp.bfloat16), wqk_t,
                         preferred_element_type=jnp.float32) + bqk   # (S,128)=[q|k|0]
            v = jnp.dot(x.astype(jnp.bfloat16), wv_t,
                        preferred_element_type=jnp.float32) + bv     # (S,128)=[v|0]

            # Multi-head attention, no mask (single batch element here).
            o_heads = []
            for h in range(NHEAD):
                lo, hi = h * HEAD_DIM, (h + 1) * HEAD_DIM
                q_h = qk[:, lo:hi] * scale               # (S, dh), pre-scaled q
                k_h = qk[:, d + lo:d + hi]
                v_h = v[:, lo:hi]
                # trans_b contraction -> no XLU transpose of k.  Tiny dots stay f32.
                s = lax.dot_general(q_h, k_h, (((1,), (1,)), ((), ())),
                                    preferred_element_type=jnp.float32)
                s = s - jnp.max(s, axis=-1, keepdims=True)
                e = jnp.exp(s)
                p = e / jnp.sum(e, axis=-1, keepdims=True)           # exact softmax
                o_heads.append(jnp.dot(p, v_h, preferred_element_type=jnp.float32))
            ctx = jnp.concatenate(o_heads, axis=-1)                  # (S, D)
            attn = jnp.dot(ctx.astype(jnp.bfloat16), wo_t,
                           preferred_element_type=jnp.float32) + bo  # (S,128)

            # residual + LayerNorm1 (stats over the D logical lanes; padding = 0,
            # so sums over 128 lanes equal sums over D; biased var like PyTorch).
            y = x + attn
            mu = jnp.sum(y, axis=-1, keepdims=True) * inv_d
            var = jnp.sum(y * y, axis=-1, keepdims=True) * inv_d - mu * mu
            y = (y - mu) * lax.rsqrt(var + LN_EPS) * ln1w + ln1b     # pads -> 0

            # FFN
            h1 = jnp.maximum(
                jnp.dot(y.astype(jnp.bfloat16), w1_t,
                        preferred_element_type=jnp.float32) + b1, 0.0)
            h2 = jnp.dot(h1.astype(jnp.bfloat16), w2_t,
                         preferred_element_type=jnp.float32) + b2

            # residual + LayerNorm2
            z = y + h2
            mu2 = jnp.sum(z, axis=-1, keepdims=True) * inv_d
            var2 = jnp.sum(z * z, axis=-1, keepdims=True) * inv_d - mu2 * mu2
            x = (z - mu2) * lax.rsqrt(var2 + LN_EPS) * ln2w + ln2b   # pads -> 0

        out_ref[0] = x.astype(out_ref.dtype)             # full-lane-width store

    return kernel


# ---------------- host-side weight packing (call ONCE, outside the hot path) -

def pack_weight_slab(params_list):
    """Pack all layers' matmul weights (pre-transposed) into a bf16 slab."""
    d, f = D_MODEL, DIM_FF
    slabs = []
    for p in params_list:
        wqkv = p["wqkv"].astype(jnp.float32)             # (3D, D) in_proj_weight
        s = jnp.zeros((W_ROWS, LANES), jnp.float32)
        s = s.at[WROW_QK:WROW_QK + d, 0:d].set(wqkv[0:d, :].T)          # Wq^T
        s = s.at[WROW_QK:WROW_QK + d, d:2 * d].set(wqkv[d:2 * d, :].T)  # Wk^T
        s = s.at[WROW_V:WROW_V + d, 0:d].set(wqkv[2 * d:3 * d, :].T)    # Wv^T
        s = s.at[WROW_1:WROW_1 + d, 0:f].set(p["w1"].astype(jnp.float32).T)
        s = s.at[WROW_2:WROW_2 + f, 0:d].set(p["w2"].astype(jnp.float32).T)
        s = s.at[WROW_O:WROW_O + d, 0:d].set(p["wo"].astype(jnp.float32).T)
        slabs.append(s)
    return jnp.stack(slabs).astype(jnp.bfloat16)         # (L, W_ROWS, 128) bf16


def pack_vector_slab(params_list):
    """Pack all layers' biases / LayerNorm params into an f32 slab."""
    d, f = D_MODEL, DIM_FF
    slabs = []
    for p in params_list:
        b = p["bqkv"].astype(jnp.float32).reshape(-1)
        s = jnp.zeros((VEC_ROWS, LANES), jnp.float32)
        s = s.at[VROW_BQK, 0:2 * d].set(b[0:2 * d])
        s = s.at[VROW_BV, 0:d].set(b[2 * d:3 * d])
        s = s.at[VROW_BO, 0:d].set(p["bo"].astype(jnp.float32).reshape(-1))
        s = s.at[VROW_B1, 0:f].set(p["b1"].astype(jnp.float32).reshape(-1))
        s = s.at[VROW_B2, 0:d].set(p["b2"].astype(jnp.float32).reshape(-1))
        s = s.at[VROW_LN1W, 0:d].set(p["ln1w"].astype(jnp.float32).reshape(-1))
        s = s.at[VROW_LN1B, 0:d].set(p["ln1b"].astype(jnp.float32).reshape(-1))
        s = s.at[VROW_LN2W, 0:d].set(p["ln2w"].astype(jnp.float32).reshape(-1))
        s = s.at[VROW_LN2B, 0:d].set(p["ln2b"].astype(jnp.float32).reshape(-1))
        slabs.append(s)
    return jnp.stack(slabs)                               # (L, 16, 128) f32


def transformer_encoder(src, w_slab, vec_slab, pos=None, pe_only_at_begin=False):
    """Mirror of TransformerEncoder.forward (norm=None, return_atten_map=False).

    src, pos: (S, B, D) seq-first (PyTorch convention). Returns (S, B, D).
    w_slab / vec_slab: pre-packed with pack_weight_slab / pack_vector_slab.
    """
    S, B, D = src.shape
    assert D == D_MODEL
    num_layers = w_slab.shape[0]

    # Batch-major layout: attention is per batch element, so no mask is needed
    # and no cross-batch score work is done.
    x = jnp.transpose(src, (1, 0, 2)).astype(jnp.float32)            # (B, S, D)
    p = (jnp.transpose(pos, (1, 0, 2)).astype(jnp.float32)
         if pos is not None else jnp.zeros_like(x))

    # Zero-pad the feature axis to 128 lanes -> lane-dense kernel I/O & stores.
    pad = LANES - D
    xp = jnp.pad(x, ((0, 0), (0, 0), (0, pad)))
    pp = jnp.pad(p, ((0, 0), (0, 0), (0, pad)))

    kernel = make_fused_encoder_kernel(num_layers, pe_only_at_begin)
    out = pl.pallas_call(
        kernel,
        out_shape=jax.ShapeDtypeStruct((B, S, LANES), jnp.float32),
        grid=(B,),  # one batch element per step; parallel across TCs on v7x
        in_specs=[
            pl.BlockSpec((1, S, LANES), lambda b: (b, 0, 0)),
            pl.BlockSpec((1, S, LANES), lambda b: (b, 0, 0)),
            pl.BlockSpec((num_layers, W_ROWS, LANES), lambda b: (0, 0, 0)),
            pl.BlockSpec((num_layers, VEC_ROWS, LANES), lambda b: (0, 0, 0)),
        ],
        out_specs=pl.BlockSpec((1, S, LANES), lambda b: (b, 0, 0)),
        compiler_params=pltpu.CompilerParams(
            dimension_semantics=("parallel",),
            vmem_limit_bytes=32 * 1024 * 1024),
    )(xp, pp, w_slab, vec_slab)

    out = out[:, :, :D].astype(src.dtype)                 # drop lane padding
    return jnp.transpose(out, (1, 0, 2))                  # back to (S, B, D)


# ---------------- deterministic parameter init (xavier_uniform on dim>1) -----

def _xavier_uniform(key, shape):
    fan_out, fan_in = shape  # nn.Linear weight layout: (out_features, in_features)
    a = math.sqrt(6.0 / (fan_in + fan_out))
    return jax.random.uniform(key, shape, jnp.float32, -a, a)


def init_layer_params(key):
    ks = jax.random.split(key, 4)
    return {
        "wqkv": _xavier_uniform(ks[0], (3 * D_MODEL, D_MODEL)),  # in_proj_weight
        "bqkv": jnp.zeros((3 * D_MODEL,), jnp.float32),          # in_proj_bias
        "wo":   _xavier_uniform(ks[1], (D_MODEL, D_MODEL)),      # out_proj.weight
        "bo":   jnp.zeros((D_MODEL,), jnp.float32),
        "ln1w": jnp.ones((D_MODEL,), jnp.float32),
        "ln1b": jnp.zeros((D_MODEL,), jnp.float32),
        "w1":   _xavier_uniform(ks[2], (DIM_FF, D_MODEL)),       # linear1.weight
        "b1":   jnp.zeros((DIM_FF,), jnp.float32),
        "w2":   _xavier_uniform(ks[3], (D_MODEL, DIM_FF)),       # linear2.weight
        "b2":   jnp.zeros((D_MODEL,), jnp.float32),
        "ln2w": jnp.ones((D_MODEL,), jnp.float32),
        "ln2b": jnp.zeros((D_MODEL,), jnp.float32),
    }


# ---------------- pure-JAX f32 reference (numerical sanity check) ------------

def _layer_norm_ref(x, w, b):
    mu = jnp.mean(x, axis=-1, keepdims=True)
    var = jnp.mean((x - mu) ** 2, axis=-1, keepdims=True)
    return (x - mu) / jnp.sqrt(var + LN_EPS) * w + b


def transformer_encoder_ref(src, params_list, pos, pe_only_at_begin=False):
    d = D_MODEL
    x = jnp.transpose(src, (1, 0, 2))   # (B, S, D)
    pe = jnp.transpose(pos, (1, 0, 2))
    B, S, _ = x.shape
    for i, p in enumerate(params_list):
        use_pos = (i == 0) or (not pe_only_at_begin)
        qk_in = x + pe if use_pos else x
        wqkv, bqkv = p["wqkv"], p["bqkv"].reshape(-1)
        q = qk_in @ wqkv[0:d].T + bqkv[0:d]
        k = qk_in @ wqkv[d:2 * d].T + bqkv[d:2 * d]
        v = x @ wqkv[2 * d:3 * d].T + bqkv[2 * d:3 * d]
        sp = lambda t: t.reshape(B, S, NHEAD, HEAD_DIM).transpose(0, 2, 1, 3)
        qh, kh, vh = sp(q), sp(k), sp(v)
        s = jnp.einsum("bhqd,bhkd->bhqk", qh, kh) / math.sqrt(HEAD_DIM)
        pm = jax.nn.softmax(s, axis=-1)
        o = jnp.einsum("bhqk,bhkd->bhqd", pm, vh).transpose(0, 2, 1, 3).reshape(B, S, d)
        attn = o @ p["wo"].T + p["bo"].reshape(-1)
        y = _layer_norm_ref(x + attn, p["ln1w"].reshape(-1), p["ln1b"].reshape(-1))
        h1 = jax.nn.relu(y @ p["w1"].T + p["b1"].reshape(-1))
        h2 = h1 @ p["w2"].T + p["b2"].reshape(-1)
        x = _layer_norm_ref(y + h2, p["ln2w"].reshape(-1), p["ln2b"].reshape(-1))
    return jnp.transpose(x, (1, 0, 2))


if __name__ == "__main__":
    key = jax.random.PRNGKey(0)
    k_src, k_pos, k_par = jax.random.split(key, 3)

    S, B, D = 8, 2, D_MODEL
    src = jax.random.normal(k_src, (S, B, D), jnp.float32)   # seq-first like PyTorch
    pos = jax.random.normal(k_pos, (S, B, D), jnp.float32)

    layer_keys = jax.random.split(k_par, NUM_LAYERS)
    params_list = [init_layer_params(k) for k in layer_keys]

    # Pack weights ONCE (hoisted out of the hot path), jit the wrapper.
    w_slab = jax.block_until_ready(pack_weight_slab(params_list))
    vec_slab = jax.block_until_ready(pack_vector_slab(params_list))
    encoder = jax.jit(transformer_encoder, static_argnames=("pe_only_at_begin",))

    out = encoder(src, w_slab, vec_slab, pos=pos, pe_only_at_begin=False)
    out = jax.block_until_ready(out)
    assert out.shape == (S, B, D)

    ref = transformer_encoder_ref(src, params_list, pos, pe_only_at_begin=False)
    ref = jax.block_until_ready(ref)
    max_err = float(jnp.max(jnp.abs(out - ref)))
    # bf16 MXU operands bound accuracy to ~1e-2 relative vs. the f32 reference.
    assert max_err < 1e-1, f"max abs err vs reference: {max_err}"

    print("KERNEL_OK")
</pallas_src>

<mosaic_0001>
module attributes {stable_mosaic.version = 11 : i64} {
  func.func @kernel(%arg0: i32, %arg1: memref<1x8x128xf32, #tpu.memory_space<vmem>>, %arg2: memref<1x8x128xf32, #tpu.memory_space<vmem>>, %arg3: memref<2x544x128xbf16, #tpu.memory_space<vmem>>, %arg4: memref<2x16x128xf32, #tpu.memory_space<vmem>>, %arg5: memref<1x8x128xf32, #tpu.memory_space<vmem>>) attributes {dimension_semantics = [#tpu.dimension_semantics<parallel>], iteration_bounds = array<i64: 2>, scalar_prefetch = 0 : i64, scratch_operands = 0 : i64, tpu.core_type = #tpu.core_type<tc>, window_params = [{transform_indices = @transform_0, window_bounds = array<i64: 1, 8, 128>}, {transform_indices = @transform_1, window_bounds = array<i64: 1, 8, 128>}, {pipeline_mode = #tpu.pipeline_mode<synchronous>, transform_indices = @transform_2, window_bounds = array<i64: 2, 544, 128>}, {pipeline_mode = #tpu.pipeline_mode<synchronous>, transform_indices = @transform_3, window_bounds = array<i64: 2, 16, 128>}, {transform_indices = @transform_4, window_bounds = array<i64: 1, 8, 128>}]} {
    %c0 = arith.constant 0 : index
    %c0_0 = arith.constant 0 : index
    %c0_1 = arith.constant 0 : index
    %0 = vector.load %arg1[%c0, %c0_0, %c0_1] : memref<1x8x128xf32, #tpu.memory_space<vmem>>, vector<1x8x128xf32>
    %1 = vector.shape_cast %0 : vector<1x8x128xf32> to vector<8x128xf32>
    %c0_2 = arith.constant 0 : index
    %c0_3 = arith.constant 0 : index
    %c0_4 = arith.constant 0 : index
    %2 = vector.load %arg2[%c0_2, %c0_3, %c0_4] : memref<1x8x128xf32, #tpu.memory_space<vmem>>, vector<1x8x128xf32>
    %3 = vector.shape_cast %2 : vector<1x8x128xf32> to vector<8x128xf32>
    %c0_5 = arith.constant 0 : index
    %c0_6 = arith.constant 0 : index
    %c0_7 = arith.constant 0 : index
    %4 = vector.load %arg3[%c0_5, %c0_6, %c0_7] : memref<2x544x128xbf16, #tpu.memory_space<vmem>>, vector<1x128x128xbf16>
    %5 = vector.shape_cast %4 : vector<1x128x128xbf16> to vector<128x128xbf16>
    %c0_8 = arith.constant 0 : index
    %c128 = arith.constant 128 : index
    %c0_9 = arith.constant 0 : index
    %6 = vector.load %arg3[%c0_8, %c128, %c0_9] : memref<2x544x128xbf16, #tpu.memory_space<vmem>>, vector<1x128x128xbf16>
    %7 = vector.shape_cast %6 : vector<1x128x128xbf16> to vector<128x128xbf16>
    %c0_10 = arith.constant 0 : index
    %c256 = arith.constant 256 : index
    %c0_11 = arith.constant 0 : index
    %8 = vector.load %arg3[%c0_10, %c256, %c0_11] : memref<2x544x128xbf16, #tpu.memory_space<vmem>>, vector<1x128x128xbf16>
    %9 = vector.shape_cast %8 : vector<1x128x128xbf16> to vector<128x128xbf16>
    %c0_12 = arith.constant 0 : index
    %c384 = arith.constant 384 : index
    %c0_13 = arith.constant 0 : index
    %10 = vector.load %arg3[%c0_12, %c384, %c0_13] : memref<2x544x128xbf16, #tpu.memory_space<vmem>>, vector<1x128x128xbf16>
    %11 = vector.shape_cast %10 : vector<1x128x128xbf16> to vector<128x128xbf16>
    %c0_14 = arith.constant 0 : index
    %c512 = arith.constant 512 : index
    %c0_15 = arith.constant 0 : index
    %12 = vector.load %arg3[%c0_14, %c512, %c0_15] : memref<2x544x128xbf16, #tpu.memory_space<vmem>>, vector<1x32x128xbf16>
    %13 = vector.shape_cast %12 : vector<1x32x128xbf16> to vector<32x128xbf16>
    %c0_16 = arith.constant 0 : index
    %c0_17 = arith.constant 0 : index
    %c0_18 = arith.constant 0 : index
    %14 = vector.load %arg4[%c0_16, %c0_17, %c0_18] : memref<2x16x128xf32, #tpu.memory_space<vmem>>, vector<1x1x128xf32>
    %15 = vector.shape_cast %14 : vector<1x1x128xf32> to vector<1x128xf32>
    %c0_19 = arith.constant 0 : index
    %c1 = arith.constant 1 : index
    %c0_20 = arith.constant 0 : index
    %16 = vector.load %arg4[%c0_19, %c1, %c0_20] : memref<2x16x128xf32, #tpu.memory_space<vmem>>, vector<1x1x128xf32>
    %17 = vector.shape_cast %16 : vector<1x1x128xf32> to vector<1x128xf32>
    %c0_21 = arith.constant 0 : index
    %c2 = arith.constant 2 : index
    %c0_22 = arith.constant 0 : index
    %18 = vector.load %arg4[%c0_21, %c2, %c0_22] : memref<2x16x128xf32, #tpu.memory_space<vmem>>, vector<1x1x128xf32>
    %19 = vector.shape_cast %18 : vector<1x1x128xf32> to vector<1x128xf32>
    %c0_23 = arith.constant 0 : index
    %c3 = arith.constant 3 : index
    %c0_24 = arith.constant 0 : index
    %20 = vector.load %arg4[%c0_23, %c3, %c0_24] : memref<2x16x128xf32, #tpu.memory_space<vmem>>, vector<1x1x128xf32>
    %21 = vector.shape_cast %20 : vector<1x1x128xf32> to vector<1x128xf32>
    %c0_25 = arith.constant 0 : index
    %c4 = arith.constant 4 : index
    %c0_26 = arith.constant 0 : index
    %22 = vector.load %arg4[%c0_25, %c4, %c0_26] : memref<2x16x128xf32, #tpu.memory_space<vmem>>, vector<1x1x128xf32>
    %23 = vector.shape_cast %22 : vector<1x1x128xf32> to vector<1x128xf32>
    %c0_27 = arith.constant 0 : index
    %c5 = arith.constant 5 : index
    %c0_28 = arith.constant 0 : index
    %24 = vector.load %arg4[%c0_27, %c5, %c0_28] : memref<2x16x128xf32, #tpu.memory_space<vmem>>, vector<1x1x128xf32>
    %25 = vector.shape_cast %24 : vector<1x1x128xf32> to vector<1x128xf32>
    %c0_29 = arith.constant 0 : index
    %c6 = arith.constant 6 : index
    %c0_30 = arith.constant 0 : index
    %26 = vector.load %arg4[%c0_29, %c6, %c0_30] : memref<2x16x128xf32, #tpu.memory_space<vmem>>, vector<1x1x128xf32>
    %27 = vector.shape_cast %26 : vector<1x1x128xf32> to vector<1x128xf32>
    %c0_31 = arith.constant 0 : index
    %c7 = arith.constant 7 : index
    %c0_32 = arith.constant 0 : index
    %28 = vector.load %arg4[%c0_31, %c7, %c0_32] : memref<2x16x128xf32, #tpu.memory_space<vmem>>, vector<1x1x128xf32>
    %29 = vector.shape_cast %28 : vector<1x1x128xf32> to vector<1x128xf32>
    %c0_33 = arith.constant 0 : index
    %c8 = arith.constant 8 : index
    %c0_34 = arith.constant 0 : index
    %30 = vector.load %arg4[%c0_33, %c8, %c0_34] : memref<2x16x128xf32, #tpu.memory_space<vmem>>, vector<1x1x128xf32>
    %31 = vector.shape_cast %30 : vector<1x1x128xf32> to vector<1x128xf32>
    %32 = arith.addf %1, %3 : vector<8x128xf32>
    %33 = arith.truncf %32 : vector<8x128xf32> to vector<8x128xbf16>
    %cst = arith.constant dense<0.000000e+00> : vector<8x128xf32>
    %34 = tpu.matmul %33, %5, %cst {dimension_numbers = #tpu.dot_dimension_numbers<[1], [0], [0], [1], [0, 0, 1, 1], [], []>} : vector<8x128xbf16>, vector<128x128xbf16>, vector<8x128xf32> -> vector<8x128xf32>
    %35 = vector.broadcast %15 : vector<1x128xf32> to vector<8x128xf32>
    %36 = arith.addf %34, %35 : vector<8x128xf32>
    %37 = arith.truncf %1 : vector<8x128xf32> to vector<8x128xbf16>
    %cst_35 = arith.constant dense<0.000000e+00> : vector<8x128xf32>
    %38 = tpu.matmul %37, %7, %cst_35 {dimension_numbers = #tpu.dot_dimension_numbers<[1], [0], [0], [1], [0, 0, 1, 1], [], []>} : vector<8x128xbf16>, vector<128x128xbf16>, vector<8x128xf32> -> vector<8x128xf32>
    %39 = vector.broadcast %17 : vector<1x128xf32> to vector<8x128xf32>
    %40 = arith.addf %38, %39 : vector<8x128xf32>
    %41 = vector.extract_strided_slice %36 {offsets = [0, 0], sizes = [8, 8], strides = [1, 1]} : vector<8x128xf32> to vector<8x8xf32>
    %cst_36 = arith.constant 0.353553385 : f32
    %42 = vector.broadcast %cst_36 : f32 to vector<8x8xf32>
    %43 = arith.mulf %41, %42 : vector<8x8xf32>
    %44 = vector.extract_strided_slice %36 {offsets = [0, 32], sizes = [8, 8], strides = [1, 1]} : vector<8x128xf32> to vector<8x8xf32>
    %45 = vector.extract_strided_slice %40 {offsets = [0, 0], sizes = [8, 8], strides = [1, 1]} : vector<8x128xf32> to vector<8x8xf32>
    %cst_37 = arith.constant dense<0.000000e+00> : vector<8x8xf32>
    %46 = tpu.matmul %43, %44, %cst_37 {dimension_numbers = #tpu.dot_dimension_numbers<[1], [1], [0], [0], [0, 0, 1, 0], [], []>} : vector<8x8xf32>, vector<8x8xf32>, vector<8x8xf32> -> vector<8x8xf32>
    %cst_38 = arith.constant dense<0xFF800000> : vector<8xf32>
    %47 = vector.multi_reduction <maximumf>, %46, %cst_38 [1] : vector<8x8xf32> to vector<8xf32>
    %48 = vector.shape_cast %47 : vector<8xf32> to vector<8x1xf32>
    %49 = vector.broadcast %48 : vector<8x1xf32> to vector<8x8xf32>
    %50 = arith.subf %46, %49 : vector<8x8xf32>
    %51 = math.exp %50 : vector<8x8xf32>
    %cst_39 = arith.constant dense<0.000000e+00> : vector<8xf32>
    %52 = vector.multi_reduction <add>, %51, %cst_39 [1] : vector<8x8xf32> to vector<8xf32>
    %53 = vector.shape_cast %52 : vector<8xf32> to vector<8x1xf32>
    %54 = vector.broadcast %53 : vector<8x1xf32> to vector<8x8xf32>
    %55 = arith.divf %51, %54 : vector<8x8xf32>
    %cst_40 = arith.constant dense<0.000000e+00> : vector<8x8xf32>
    %56 = tpu.matmul %55, %45, %cst_40 {dimension_numbers = #tpu.dot_dimension_numbers<[1], [0], [0], [1], [0, 0, 1, 1], [], []>} : vector<8x8xf32>, vector<8x8xf32>, vector<8x8xf32> -> vector<8x8xf32>
    %57 = vector.extract_strided_slice %36 {offsets = [0, 8], sizes = [8, 8], strides = [1, 1]} : vector<8x128xf32> to vector<8x8xf32>
    %cst_41 = arith.constant 0.353553385 : f32
    %58 = vector.broadcast %cst_41 : f32 to vector<8x8xf32>
    %59 = arith.mulf %57, %58 : vector<8x8xf32>
    %60 = vector.extract_strided_slice %36 {offsets = [0, 40], sizes = [8, 8], strides = [1, 1]} : vector<8x128xf32> to vector<8x8xf32>
    %61 = vector.extract_strided_slice %40 {offsets = [0, 8], sizes = [8, 8], strides = [1, 1]} : vector<8x128xf32> to vector<8x8xf32>
    %cst_42 = arith.constant dense<0.000000e+00> : vector<8x8xf32>
    %62 = tpu.matmul %59, %60, %cst_42 {dimension_numbers = #tpu.dot_dimension_numbers<[1], [1], [0], [0], [0, 0, 1, 0], [], []>} : vector<8x8xf32>, vector<8x8xf32>, vector<8x8xf32> -> vector<8x8xf32>
    %cst_43 = arith.constant dense<0xFF800000> : vector<8xf32>
    %63 = vector.multi_reduction <maximumf>, %62, %cst_43 [1] : vector<8x8xf32> to vector<8xf32>
    %64 = vector.shape_cast %63 : vector<8xf32> to vector<8x1xf32>
    %65 = vector.broadcast %64 : vector<8x1xf32> to vector<8x8xf32>
    %66 = arith.subf %62, %65 : vector<8x8xf32>
    %67 = math.exp %66 : vector<8x8xf32>
    %cst_44 = arith.constant dense<0.000000e+00> : vector<8xf32>
    %68 = vector.multi_reduction <add>, %67, %cst_44 [1] : vector<8x8xf32> to vector<8xf32>
    %69 = vector.shape_cast %68 : vector<8xf32> to vector<8x1xf32>
    %70 = vector.broadcast %69 : vector<8x1xf32> to vector<8x8xf32>
    %71 = arith.divf %67, %70 : vector<8x8xf32>
    %cst_45 = arith.constant dense<0.000000e+00> : vector<8x8xf32>
    %72 = tpu.matmul %71, %61, %cst_45 {dimension_numbers = #tpu.dot_dimension_numbers<[1], [0], [0], [1], [0, 0, 1, 1], [], []>} : vector<8x8xf32>, vector<8x8xf32>, vector<8x8xf32> -> vector<8x8xf32>
    %73 = vector.extract_strided_slice %36 {offsets = [0, 16], sizes = [8, 8], strides = [1, 1]} : vector<8x128xf32> to vector<8x8xf32>
    %cst_46 = arith.constant 0.353553385 : f32
    %74 = vector.broadcast %cst_46 : f32 to vector<8x8xf32>
    %75 = arith.mulf %73, %74 : vector<8x8xf32>
    %76 = vector.extract_strided_slice %36 {offsets = [0, 48], sizes = [8, 8], strides = [1, 1]} : vector<8x128xf32> to vector<8x8xf32>
    %77 = vector.extract_strided_slice %40 {offsets = [0, 16], sizes = [8, 8], strides = [1, 1]} : vector<8x128xf32> to vector<8x8xf32>
    %cst_47 = arith.constant dense<0.000000e+00> : vector<8x8xf32>
    %78 = tpu.matmul %75, %76, %cst_47 {dimension_numbers = #tpu.dot_dimension_numbers<[1], [1], [0], [0], [0, 0, 1, 0], [], []>} : vector<8x8xf32>, vector<8x8xf32>, vector<8x8xf32> -> vector<8x8xf32>
    %cst_48 = arith.constant dense<0xFF800000> : vector<8xf32>
    %79 = vector.multi_reduction <maximumf>, %78, %cst_48 [1] : vector<8x8xf32> to vector<8xf32>
    %80 = vector.shape_cast %79 : vector<8xf32> to vector<8x1xf32>
    %81 = vector.broadcast %80 : vector<8x1xf32> to vector<8x8xf32>
    %82 = arith.subf %78, %81 : vector<8x8xf32>
    %83 = math.exp %82 : vector<8x8xf32>
    %cst_49 = arith.constant dense<0.000000e+00> : vector<8xf32>
    %84 = vector.multi_reduction <add>, %83, %cst_49 [1] : vector<8x8xf32> to vector<8xf32>
    %85 = vector.shape_cast %84 : vector<8xf32> to vector<8x1xf32>
    %86 = vector.broadcast %85 : vector<8x1xf32> to vector<8x8xf32>
    %87 = arith.divf %83, %86 : vector<8x8xf32>
    %cst_50 = arith.constant dense<0.000000e+00> : vector<8x8xf32>
    %88 = tpu.matmul %87, %77, %cst_50 {dimension_numbers = #tpu.dot_dimension_numbers<[1], [0], [0], [1], [0, 0, 1, 1], [], []>} : vector<8x8xf32>, vector<8x8xf32>, vector<8x8xf32> -> vector<8x8xf32>
    %89 = vector.extract_strided_slice %36 {offsets = [0, 24], sizes = [8, 8], strides = [1, 1]} : vector<8x128xf32> to vector<8x8xf32>
    %cst_51 = arith.constant 0.353553385 : f32
    %90 = vector.broadcast %cst_51 : f32 to vector<8x8xf32>
    %91 = arith.mulf %89, %90 : vector<8x8xf32>
    %92 = vector.extract_strided_slice %36 {offsets = [0, 56], sizes = [8, 8], strides = [1, 1]} : vector<8x128xf32> to vector<8x8xf32>
    %93 = vector.extract_strided_slice %40 {offsets = [0, 24], sizes = [8, 8], strides = [1, 1]} : vector<8x128xf32> to vector<8x8xf32>
    %cst_52 = arith.constant dense<0.000000e+00> : vector<8x8xf32>
    %94 = tpu.matmul %91, %92, %cst_52 {dimension_numbers = #tpu.dot_dimension_numbers<[1], [1], [0], [0], [0, 0, 1, 0], [], []>} : vector<8x8xf32>, vector<8x8xf32>, vector<8x8xf32> -> vector<8x8xf32>
    %cst_53 = arith.constant dense<0xFF800000> : vector<8xf32>
    %95 = vector.multi_reduction <maximumf>, %94, %cst_53 [1] : vector<8x8xf32> to vector<8xf32>
    %96 = vector.shape_cast %95 : vector<8xf32> to vector<8x1xf32>
    %97 = vector.broadcast %96 : vector<8x1xf32> to vector<8x8xf32>
    %98 = arith.subf %94, %97 : vector<8x8xf32>
    %99 = math.exp %98 : vector<8x8xf32>
    %cst_54 = arith.constant dense<0.000000e+00> : vector<8xf32>
    %100 = vector.multi_reduction <add>, %99, %cst_54 [1] : vector<8x8xf32> to vector<8xf32>
    %101 = vector.shape_cast %100 : vector<8xf32> to vector<8x1xf32>
    %102 = vector.broadcast %101 : vector<8x1xf32> to vector<8x8xf32>
    %103 = arith.divf %99, %102 : vector<8x8xf32>
    %cst_55 = arith.constant dense<0.000000e+00> : vector<8x8xf32>
    %104 = tpu.matmul %103, %93, %cst_55 {dimension_numbers = #tpu.dot_dimension_numbers<[1], [0], [0], [1], [0, 0, 1, 1], [], []>} : vector<8x8xf32>, vector<8x8xf32>, vector<8x8xf32> -> vector<8x8xf32>
    %105 = tpu.concatenate %56, %72, %88, %104 in 1 : vector<8x8xf32>, vector<8x8xf32>, vector<8x8xf32>, vector<8x8xf32> -> vector<8x32xf32>
    %106 = arith.truncf %105 : vector<8x32xf32> to vector<8x32xbf16>
    %cst_56 = arith.constant dense<0.000000e+00> : vector<8x128xf32>
    %107 = tpu.matmul %106, %13, %cst_56 {dimension_numbers = #tpu.dot_dimension_numbers<[1], [0], [0], [1], [0, 0, 1, 1], [], []>} : vector<8x32xbf16>, vector<32x128xbf16>, vector<8x128xf32> -> vector<8x128xf32>
    %108 = vector.broadcast %19 : vector<1x128xf32> to vector<8x128xf32>
    %109 = arith.addf %107, %108 : vector<8x128xf32>
    %110 = arith.addf %1, %109 : vector<8x128xf32>
    %cst_57 = arith.constant dense<0.000000e+00> : vector<8xf32>
    %111 = vector.multi_reduction <add>, %110, %cst_57 [1] : vector<8x128xf32> to vector<8xf32>
    %112 = vector.shape_cast %111 : vector<8xf32> to vector<8x1xf32>
    %cst_58 = arith.constant 3.125000e-02 : f32
    %113 = vector.broadcast %cst_58 : f32 to vector<8x1xf32>
    %114 = arith.mulf %112, %113 : vector<8x1xf32>
    %115 = arith.mulf %110, %110 : vector<8x128xf32>
    %cst_59 = arith.constant dense<0.000000e+00> : vector<8xf32>
    %116 = vector.multi_reduction <add>, %115, %cst_59 [1] : vector<8x128xf32> to vector<8xf32>
    %117 = vector.shape_cast %116 : vector<8xf32> to vector<8x1xf32>
    %cst_60 = arith.constant 3.125000e-02 : f32
    %118 = vector.broadcast %cst_60 : f32 to vector<8x1xf32>
    %119 = arith.mulf %117, %118 : vector<8x1xf32>
    %120 = arith.mulf %114, %114 : vector<8x1xf32>
    %121 = arith.subf %119, %120 : vector<8x1xf32>
    %122 = vector.broadcast %114 : vector<8x1xf32> to vector<8x128xf32>
    %123 = arith.subf %110, %122 : vector<8x128xf32>
    %cst_61 = arith.constant 9.99999974E-6 : f32
    %124 = vector.broadcast %cst_61 : f32 to vector<8x1xf32>
    %125 = arith.addf %121, %124 : vector<8x1xf32>
    %126 = math.rsqrt %125 : vector<8x1xf32>
    %127 = vector.broadcast %126 : vector<8x1xf32> to vector<8x128xf32>
    %128 = arith.mulf %123, %127 : vector<8x128xf32>
    %129 = vector.broadcast %25 : vector<1x128xf32> to vector<8x128xf32>
    %130 = arith.mulf %128, %129 : vector<8x128xf32>
    %131 = vector.broadcast %27 : vector<1x128xf32> to vector<8x128xf32>
    %132 = arith.addf %130, %131 : vector<8x128xf32>
    %133 = arith.truncf %132 : vector<8x128xf32> to vector<8x128xbf16>
    %cst_62 = arith.constant dense<0.000000e+00> : vector<8x128xf32>
    %134 = tpu.matmul %133, %9, %cst_62 {dimension_numbers = #tpu.dot_dimension_numbers<[1], [0], [0], [1], [0, 0, 1, 1], [], []>} : vector<8x128xbf16>, vector<128x128xbf16>, vector<8x128xf32> -> vector<8x128xf32>
    %135 = vector.broadcast %21 : vector<1x128xf32> to vector<8x128xf32>
    %136 = arith.addf %134, %135 : vector<8x128xf32>
    %cst_63 = arith.constant 0.000000e+00 : f32
    %137 = vector.broadcast %cst_63 : f32 to vector<8x128xf32>
    %138 = arith.maximumf %136, %137 : vector<8x128xf32>
    %139 = arith.truncf %138 : vector<8x128xf32> to vector<8x128xbf16>
    %cst_64 = arith.constant dense<0.000000e+00> : vector<8x128xf32>
    %140 = tpu.matmul %139, %11, %cst_64 {dimension_numbers = #tpu.dot_dimension_numbers<[1], [0], [0], [1], [0, 0, 1, 1], [], []>} : vector<8x128xbf16>, vector<128x128xbf16>, vector<8x128xf32> -> vector<8x128xf32>
    %141 = vector.broadcast %23 : vector<1x128xf32> to vector<8x128xf32>
    %142 = arith.addf %140, %141 : vector<8x128xf32>
    %143 = arith.addf %132, %142 : vector<8x128xf32>
    %cst_65 = arith.constant dense<0.000000e+00> : vector<8xf32>
    %144 = vector.multi_reduction <add>, %143, %cst_65 [1] : vector<8x128xf32> to vector<8xf32>
    %145 = vector.shape_cast %144 : vector<8xf32> to vector<8x1xf32>
    %cst_66 = arith.constant 3.125000e-02 : f32
    %146 = vector.broadcast %cst_66 : f32 to vector<8x1xf32>
    %147 = arith.mulf %145, %146 : vector<8x1xf32>
    %148 = arith.mulf %143, %143 : vector<8x128xf32>
    %cst_67 = arith.constant dense<0.000000e+00> : vector<8xf32>
    %149 = vector.multi_reduction <add>, %148, %cst_67 [1] : vector<8x128xf32> to vector<8xf32>
    %150 = vector.shape_cast %149 : vector<8xf32> to vector<8x1xf32>
    %cst_68 = arith.constant 3.125000e-02 : f32
    %151 = vector.broadcast %cst_68 : f32 to vector<8x1xf32>
    %152 = arith.mulf %150, %151 : vector<8x1xf32>
    %153 = arith.mulf %147, %147 : vector<8x1xf32>
    %154 = arith.subf %152, %153 : vector<8x1xf32>
    %155 = vector.broadcast %147 : vector<8x1xf32> to vector<8x128xf32>
    %156 = arith.subf %143, %155 : vector<8x128xf32>
    %cst_69 = arith.constant 9.99999974E-6 : f32
    %157 = vector.broadcast %cst_69 : f32 to vector<8x1xf32>
    %158 = arith.addf %154, %157 : vector<8x1xf32>
    %159 = math.rsqrt %158 : vector<8x1xf32>
    %160 = vector.broadcast %159 : vector<8x1xf32> to vector<8x128xf32>
    %161 = arith.mulf %156, %160 : vector<8x128xf32>
    %162 = vector.broadcast %29 : vector<1x128xf32> to vector<8x128xf32>
    %163 = arith.mulf %161, %162 : vector<8x128xf32>
    %164 = vector.broadcast %31 : vector<1x128xf32> to vector<8x128xf32>
    %165 = arith.addf %163, %164 : vector<8x128xf32>
    %c1_70 = arith.constant 1 : index
    %c0_71 = arith.constant 0 : index
    %c0_72 = arith.constant 0 : index
    %166 = vector.load %arg3[%c1_70, %c0_71, %c0_72] : memref<2x544x128xbf16, #tpu.memory_space<vmem>>, vector<1x128x128xbf16>
    %167 = vector.shape_cast %166 : vector<1x128x128xbf16> to vector<128x128xbf16>
    %c1_73 = arith.constant 1 : index
    %c128_74 = arith.constant 128 : index
    %c0_75 = arith.constant 0 : index
    %168 = vector.load %arg3[%c1_73, %c128_74, %c0_75] : memref<2x544x128xbf16, #tpu.memory_space<vmem>>, vector<1x128x128xbf16>
    %169 = vector.shape_cast %168 : vector<1x128x128xbf16> to vector<128x128xbf16>
    %c1_76 = arith.constant 1 : index
    %c256_77 = arith.constant 256 : index
    %c0_78 = arith.constant 0 : index
    %170 = vector.load %arg3[%c1_76, %c256_77, %c0_78] : memref<2x544x128xbf16, #tpu.memory_space<vmem>>, vector<1x128x128xbf16>
    %171 = vector.shape_cast %170 : vector<1x128x128xbf16> to vector<128x128xbf16>
    %c1_79 = arith.constant 1 : index
    %c384_80 = arith.constant 384 : index
    %c0_81 = arith.constant 0 : index
    %172 = vector.load %arg3[%c1_79, %c384_80, %c0_81] : memref<2x544x128xbf16, #tpu.memory_space<vmem>>, vector<1x128x128xbf16>
    %173 = vector.shape_cast %172 : vector<1x128x128xbf16> to vector<128x128xbf16>
    %c1_82 = arith.constant 1 : index
    %c512_83 = arith.constant 512 : index
    %c0_84 = arith.constant 0 : index
    %174 = vector.load %arg3[%c1_82, %c512_83, %c0_84] : memref<2x544x128xbf16, #tpu.memory_space<vmem>>, vector<1x32x128xbf16>
    %175 = vector.shape_cast %174 : vector<1x32x128xbf16> to vector<32x128xbf16>
    %c1_85 = arith.constant 1 : index
    %c0_86 = arith.constant 0 : index
    %c0_87 = arith.constant 0 : index
    %176 = vector.load %arg4[%c1_85, %c0_86, %c0_87] : memref<2x16x128xf32, #tpu.memory_space<vmem>>, vector<1x1x128xf32>
    %177 = vector.shape_cast %176 : vector<1x1x128xf32> to vector<1x128xf32>
    %c1_88 = arith.constant 1 : index
    %c1_89 = arith.constant 1 : index
    %c0_90 = arith.constant 0 : index
    %178 = vector.load %arg4[%c1_88, %c1_89, %c0_90] : memref<2x16x128xf32, #tpu.memory_space<vmem>>, vector<1x1x128xf32>
    %179 = vector.shape_cast %178 : vector<1x1x128xf32> to vector<1x128xf32>
    %c1_91 = arith.constant 1 : index
    %c2_92 = arith.constant 2 : index
    %c0_93 = arith.constant 0 : index
    %180 = vector.load %arg4[%c1_91, %c2_92, %c0_93] : memref<2x16x128xf32, #tpu.memory_space<vmem>>, vector<1x1x128xf32>
    %181 = vector.shape_cast %180 : vector<1x1x128xf32> to vector<1x128xf32>
    %c1_94 = arith.constant 1 : index
    %c3_95 = arith.constant 3 : index
    %c0_96 = arith.constant 0 : index
    %182 = vector.load %arg4[%c1_94, %c3_95, %c0_96] : memref<2x16x128xf32, #tpu.memory_space<vmem>>, vector<1x1x128xf32>
    %183 = vector.shape_cast %182 : vector<1x1x128xf32> to vector<1x128xf32>
    %c1_97 = arith.constant 1 : index
    %c4_98 = arith.constant 4 : index
    %c0_99 = arith.constant 0 : index
    %184 = vector.load %arg4[%c1_97, %c4_98, %c0_99] : memref<2x16x128xf32, #tpu.memory_space<vmem>>, vector<1x1x128xf32>
    %185 = vector.shape_cast %184 : vector<1x1x128xf32> to vector<1x128xf32>
    %c1_100 = arith.constant 1 : index
    %c5_101 = arith.constant 5 : index
    %c0_102 = arith.constant 0 : index
    %186 = vector.load %arg4[%c1_100, %c5_101, %c0_102] : memref<2x16x128xf32, #tpu.memory_space<vmem>>, vector<1x1x128xf32>
    %187 = vector.shape_cast %186 : vector<1x1x128xf32> to vector<1x128xf32>
    %c1_103 = arith.constant 1 : index
    %c6_104 = arith.constant 6 : index
    %c0_105 = arith.constant 0 : index
    %188 = vector.load %arg4[%c1_103, %c6_104, %c0_105] : memref<2x16x128xf32, #tpu.memory_space<vmem>>, vector<1x1x128xf32>
    %189 = vector.shape_cast %188 : vector<1x1x128xf32> to vector<1x128xf32>
    %c1_106 = arith.constant 1 : index
    %c7_107 = arith.constant 7 : index
    %c0_108 = arith.constant 0 : index
    %190 = vector.load %arg4[%c1_106, %c7_107, %c0_108] : memref<2x16x128xf32, #tpu.memory_space<vmem>>, vector<1x1x128xf32>
    %191 = vector.shape_cast %190 : vector<1x1x128xf32> to vector<1x128xf32>
    %c1_109 = arith.constant 1 : index
    %c8_110 = arith.constant 8 : index
    %c0_111 = arith.constant 0 : index
    %192 = vector.load %arg4[%c1_109, %c8_110, %c0_111] : memref<2x16x128xf32, #tpu.memory_space<vmem>>, vector<1x1x128xf32>
    %193 = vector.shape_cast %192 : vector<1x1x128xf32> to vector<1x128xf32>
    %194 = arith.addf %165, %3 : vector<8x128xf32>
    %195 = arith.truncf %194 : vector<8x128xf32> to vector<8x128xbf16>
    %cst_112 = arith.constant dense<0.000000e+00> : vector<8x128xf32>
    %196 = tpu.matmul %195, %167, %cst_112 {dimension_numbers = #tpu.dot_dimension_numbers<[1], [0], [0], [1], [0, 0, 1, 1], [], []>} : vector<8x128xbf16>, vector<128x128xbf16>, vector<8x128xf32> -> vector<8x128xf32>
    %197 = vector.broadcast %177 : vector<1x128xf32> to vector<8x128xf32>
    %198 = arith.addf %196, %197 : vector<8x128xf32>
    %199 = arith.truncf %165 : vector<8x128xf32> to vector<8x128xbf16>
    %cst_113 = arith.constant dense<0.000000e+00> : vector<8x128xf32>
    %200 = tpu.matmul %199, %169, %cst_113 {dimension_numbers = #tpu.dot_dimension_numbers<[1], [0], [0], [1], [0, 0, 1, 1], [], []>} : vector<8x128xbf16>, vector<128x128xbf16>, vector<8x128xf32> -> vector<8x128xf32>
    %201 = vector.broadcast %179 : vector<1x128xf32> to vector<8x128xf32>
    %202 = arith.addf %200, %201 : vector<8x128xf32>
    %203 = vector.extract_strided_slice %198 {offsets = [0, 0], sizes = [8, 8], strides = [1, 1]} : vector<8x128xf32> to vector<8x8xf32>
    %cst_114 = arith.constant 0.353553385 : f32
    %204 = vector.broadcast %cst_114 : f32 to vector<8x8xf32>
    %205 = arith.mulf %203, %204 : vector<8x8xf32>
    %206 = vector.extract_strided_slice %198 {offsets = [0, 32], sizes = [8, 8], strides = [1, 1]} : vector<8x128xf32> to vector<8x8xf32>
    %207 = vector.extract_strided_slice %202 {offsets = [0, 0], sizes = [8, 8], strides = [1, 1]} : vector<8x128xf32> to vector<8x8xf32>
    %cst_115 = arith.constant dense<0.000000e+00> : vector<8x8xf32>
    %208 = tpu.matmul %205, %206, %cst_115 {dimension_numbers = #tpu.dot_dimension_numbers<[1], [1], [0], [0], [0, 0, 1, 0], [], []>} : vector<8x8xf32>, vector<8x8xf32>, vector<8x8xf32> -> vector<8x8xf32>
    %cst_116 = arith.constant dense<0xFF800000> : vector<8xf32>
    %209 = vector.multi_reduction <maximumf>, %208, %cst_116 [1] : vector<8x8xf32> to vector<8xf32>
    %210 = vector.shape_cast %209 : vector<8xf32> to vector<8x1xf32>
    %211 = vector.broadcast %210 : vector<8x1xf32> to vector<8x8xf32>
    %212 = arith.subf %208, %211 : vector<8x8xf32>
    %213 = math.exp %212 : vector<8x8xf32>
    %cst_117 = arith.constant dense<0.000000e+00> : vector<8xf32>
    %214 = vector.multi_reduction <add>, %213, %cst_117 [1] : vector<8x8xf32> to vector<8xf32>
    %215 = vector.shape_cast %214 : vector<8xf32> to vector<8x1xf32>
    %216 = vector.broadcast %215 : vector<8x1xf32> to vector<8x8xf32>
    %217 = arith.divf %213, %216 : vector<8x8xf32>
    %cst_118 = arith.constant dense<0.000000e+00> : vector<8x8xf32>
    %218 = tpu.matmul %217, %207, %cst_118 {dimension_numbers = #tpu.dot_dimension_numbers<[1], [0], [0], [1], [0, 0, 1, 1], [], []>} : vector<8x8xf32>, vector<8x8xf32>, vector<8x8xf32> -> vector<8x8xf32>
    %219 = vector.extract_strided_slice %198 {offsets = [0, 8], sizes = [8, 8], strides = [1, 1]} : vector<8x128xf32> to vector<8x8xf32>
    %cst_119 = arith.constant 0.353553385 : f32
    %220 = vector.broadcast %cst_119 : f32 to vector<8x8xf32>
    %221 = arith.mulf %219, %220 : vector<8x8xf32>
    %222 = vector.extract_strided_slice %198 {offsets = [0, 40], sizes = [8, 8], strides = [1, 1]} : vector<8x128xf32> to vector<8x8xf32>
    %223 = vector.extract_strided_slice %202 {offsets = [0, 8], sizes = [8, 8], strides = [1, 1]} : vector<8x128xf32> to vector<8x8xf32>
    %cst_120 = arith.constant dense<0.000000e+00> : vector<8x8xf32>
    %224 = tpu.matmul %221, %222, %cst_120 {dimension_numbers = #tpu.dot_dimension_numbers<[1], [1], [0], [0], [0, 0, 1, 0], [], []>} : vector<8x8xf32>, vector<8x8xf32>, vector<8x8xf32> -> vector<8x8xf32>
    %cst_121 = arith.constant dense<0xFF800000> : vector<8xf32>
    %225 = vector.multi_reduction <maximumf>, %224, %cst_121 [1] : vector<8x8xf32> to vector<8xf32>
    %226 = vector.shape_cast %225 : vector<8xf32> to vector<8x1xf32>
    %227 = vector.broadcast %226 : vector<8x1xf32> to vector<8x8xf32>
    %228 = arith.subf %224, %227 : vector<8x8xf32>
    %229 = math.exp %228 : vector<8x8xf32>
    %cst_122 = arith.constant dense<0.000000e+00> : vector<8xf32>
    %230 = vector.multi_reduction <add>, %229, %cst_122 [1] : vector<8x8xf32> to vector<8xf32>
    %231 = vector.shape_cast %230 : vector<8xf32> to vector<8x1xf32>
    %232 = vector.broadcast %231 : vector<8x1xf32> to vector<8x8xf32>
    %233 = arith.divf %229, %232 : vector<8x8xf32>
    %cst_123 = arith.constant dense<0.000000e+00> : vector<8x8xf32>
    %234 = tpu.matmul %233, %223, %cst_123 {dimension_numbers = #tpu.dot_dimension_numbers<[1], [0], [0], [1], [0, 0, 1, 1], [], []>} : vector<8x8xf32>, vector<8x8xf32>, vector<8x8xf32> -> vector<8x8xf32>
    %235 = vector.extract_strided_slice %198 {offsets = [0, 16], sizes = [8, 8], strides = [1, 1]} : vector<8x128xf32> to vector<8x8xf32>
    %cst_124 = arith.constant 0.353553385 : f32
    %236 = vector.broadcast %cst_124 : f32 to vector<8x8xf32>
    %237 = arith.mulf %235, %236 : vector<8x8xf32>
    %238 = vector.extract_strided_slice %198 {offsets = [0, 48], sizes = [8, 8], strides = [1, 1]} : vector<8x128xf32> to vector<8x8xf32>
    %239 = vector.extract_strided_slice %202 {offsets = [0, 16], sizes = [8, 8], strides = [1, 1]} : vector<8x128xf32> to vector<8x8xf32>
    %cst_125 = arith.constant dense<0.000000e+00> : vector<8x8xf32>
    %240 = tpu.matmul %237, %238, %cst_125 {dimension_numbers = #tpu.dot_dimension_numbers<[1], [1], [0], [0], [0, 0, 1, 0], [], []>} : vector<8x8xf32>, vector<8x8xf32>, vector<8x8xf32> -> vector<8x8xf32>
    %cst_126 = arith.constant dense<0xFF800000> : vector<8xf32>
    %241 = vector.multi_reduction <maximumf>, %240, %cst_126 [1] : vector<8x8xf32> to vector<8xf32>
    %242 = vector.shape_cast %241 : vector<8xf32> to vector<8x1xf32>
    %243 = vector.broadcast %242 : vector<8x1xf32> to vector<8x8xf32>
    %244 = arith.subf %240, %243 : vector<8x8xf32>
    %245 = math.exp %244 : vector<8x8xf32>
    %cst_127 = arith.constant dense<0.000000e+00> : vector<8xf32>
    %246 = vector.multi_reduction <add>, %245, %cst_127 [1] : vector<8x8xf32> to vector<8xf32>
    %247 = vector.shape_cast %246 : vector<8xf32> to vector<8x1xf32>
    %248 = vector.broadcast %247 : vector<8x1xf32> to vector<8x8xf32>
    %249 = arith.divf %245, %248 : vector<8x8xf32>
    %cst_128 = arith.constant dense<0.000000e+00> : vector<8x8xf32>
    %250 = tpu.matmul %249, %239, %cst_128 {dimension_numbers = #tpu.dot_dimension_numbers<[1], [0], [0], [1], [0, 0, 1, 1], [], []>} : vector<8x8xf32>, vector<8x8xf32>, vector<8x8xf32> -> vector<8x8xf32>
    %251 = vector.extract_strided_slice %198 {offsets = [0, 24], sizes = [8, 8], strides = [1, 1]} : vector<8x128xf32> to vector<8x8xf32>
    %cst_129 = arith.constant 0.353553385 : f32
    %252 = vector.broadcast %cst_129 : f32 to vector<8x8xf32>
    %253 = arith.mulf %251, %252 : vector<8x8xf32>
    %254 = vector.extract_strided_slice %198 {offsets = [0, 56], sizes = [8, 8], strides = [1, 1]} : vector<8x128xf32> to vector<8x8xf32>
    %255 = vector.extract_strided_slice %202 {offsets = [0, 24], sizes = [8, 8], strides = [1, 1]} : vector<8x128xf32> to vector<8x8xf32>
    %cst_130 = arith.constant dense<0.000000e+00> : vector<8x8xf32>
    %256 = tpu.matmul %253, %254, %cst_130 {dimension_numbers = #tpu.dot_dimension_numbers<[1], [1], [0], [0], [0, 0, 1, 0], [], []>} : vector<8x8xf32>, vector<8x8xf32>, vector<8x8xf32> -> vector<8x8xf32>
    %cst_131 = arith.constant dense<0xFF800000> : vector<8xf32>
    %257 = vector.multi_reduction <maximumf>, %256, %cst_131 [1] : vector<8x8xf32> to vector<8xf32>
    %258 = vector.shape_cast %257 : vector<8xf32> to vector<8x1xf32>
    %259 = vector.broadcast %258 : vector<8x1xf32> to vector<8x8xf32>
    %260 = arith.subf %256, %259 : vector<8x8xf32>
    %261 = math.exp %260 : vector<8x8xf32>
    %cst_132 = arith.constant dense<0.000000e+00> : vector<8xf32>
    %262 = vector.multi_reduction <add>, %261, %cst_132 [1] : vector<8x8xf32> to vector<8xf32>
    %263 = vector.shape_cast %262 : vector<8xf32> to vector<8x1xf32>
    %264 = vector.broadcast %263 : vector<8x1xf32> to vector<8x8xf32>
    %265 = arith.divf %261, %264 : vector<8x8xf32>
    %cst_133 = arith.constant dense<0.000000e+00> : vector<8x8xf32>
    %266 = tpu.matmul %265, %255, %cst_133 {dimension_numbers = #tpu.dot_dimension_numbers<[1], [0], [0], [1], [0, 0, 1, 1], [], []>} : vector<8x8xf32>, vector<8x8xf32>, vector<8x8xf32> -> vector<8x8xf32>
    %267 = tpu.concatenate %218, %234, %250, %266 in 1 : vector<8x8xf32>, vector<8x8xf32>, vector<8x8xf32>, vector<8x8xf32> -> vector<8x32xf32>
    %268 = arith.truncf %267 : vector<8x32xf32> to vector<8x32xbf16>
    %cst_134 = arith.constant dense<0.000000e+00> : vector<8x128xf32>
    %269 = tpu.matmul %268, %175, %cst_134 {dimension_numbers = #tpu.dot_dimension_numbers<[1], [0], [0], [1], [0, 0, 1, 1], [], []>} : vector<8x32xbf16>, vector<32x128xbf16>, vector<8x128xf32> -> vector<8x128xf32>
    %270 = vector.broadcast %181 : vector<1x128xf32> to vector<8x128xf32>
    %271 = arith.addf %269, %270 : vector<8x128xf32>
    %272 = arith.addf %165, %271 : vector<8x128xf32>
    %cst_135 = arith.constant dense<0.000000e+00> : vector<8xf32>
    %273 = vector.multi_reduction <add>, %272, %cst_135 [1] : vector<8x128xf32> to vector<8xf32>
    %274 = vector.shape_cast %273 : vector<8xf32> to vector<8x1xf32>
    %cst_136 = arith.constant 3.125000e-02 : f32
    %275 = vector.broadcast %cst_136 : f32 to vector<8x1xf32>
    %276 = arith.mulf %274, %275 : vector<8x1xf32>
    %277 = arith.mulf %272, %272 : vector<8x128xf32>
    %cst_137 = arith.constant dense<0.000000e+00> : vector<8xf32>
    %278 = vector.multi_reduction <add>, %277, %cst_137 [1] : vector<8x128xf32> to vector<8xf32>
    %279 = vector.shape_cast %278 : vector<8xf32> to vector<8x1xf32>
    %cst_138 = arith.constant 3.125000e-02 : f32
    %280 = vector.broadcast %cst_138 : f32 to vector<8x1xf32>
    %281 = arith.mulf %279, %280 : vector<8x1xf32>
    %282 = arith.mulf %276, %276 : vector<8x1xf32>
    %283 = arith.subf %281, %282 : vector<8x1xf32>
    %284 = vector.broadcast %276 : vector<8x1xf32> to vector<8x128xf32>
    %285 = arith.subf %272, %284 : vector<8x128xf32>
    %cst_139 = arith.constant 9.99999974E-6 : f32
    %286 = vector.broadcast %cst_139 : f32 to vector<8x1xf32>
    %287 = arith.addf %283, %286 : vector<8x1xf32>
    %288 = math.rsqrt %287 : vector<8x1xf32>
    %289 = vector.broadcast %288 : vector<8x1xf32> to vector<8x128xf32>
    %290 = arith.mulf %285, %289 : vector<8x128xf32>
    %291 = vector.broadcast %187 : vector<1x128xf32> to vector<8x128xf32>
    %292 = arith.mulf %290, %291 : vector<8x128xf32>
    %293 = vector.broadcast %189 : vector<1x128xf32> to vector<8x128xf32>
    %294 = arith.addf %292, %293 : vector<8x128xf32>
    %295 = arith.truncf %294 : vector<8x128xf32> to vector<8x128xbf16>
    %cst_140 = arith.constant dense<0.000000e+00> : vector<8x128xf32>
    %296 = tpu.matmul %295, %171, %cst_140 {dimension_numbers = #tpu.dot_dimension_numbers<[1], [0], [0], [1], [0, 0, 1, 1], [], []>} : vector<8x128xbf16>, vector<128x128xbf16>, vector<8x128xf32> -> vector<8x128xf32>
    %297 = vector.broadcast %183 : vector<1x128xf32> to vector<8x128xf32>
    %298 = arith.addf %296, %297 : vector<8x128xf32>
    %cst_141 = arith.constant 0.000000e+00 : f32
    %299 = vector.broadcast %cst_141 : f32 to vector<8x128xf32>
    %300 = arith.maximumf %298, %299 : vector<8x128xf32>
    %301 = arith.truncf %300 : vector<8x128xf32> to vector<8x128xbf16>
    %cst_142 = arith.constant dense<0.000000e+00> : vector<8x128xf32>
    %302 = tpu.matmul %301, %173, %cst_142 {dimension_numbers = #tpu.dot_dimension_numbers<[1], [0], [0], [1], [0, 0, 1, 1], [], []>} : vector<8x128xbf16>, vector<128x128xbf16>, vector<8x128xf32> -> vector<8x128xf32>
    %303 = vector.broadcast %185 : vector<1x128xf32> to vector<8x128xf32>
    %304 = arith.addf %302, %303 : vector<8x128xf32>
    %305 = arith.addf %294, %304 : vector<8x128xf32>
    %cst_143 = arith.constant dense<0.000000e+00> : vector<8xf32>
    %306 = vector.multi_reduction <add>, %305, %cst_143 [1] : vector<8x128xf32> to vector<8xf32>
    %307 = vector.shape_cast %306 : vector<8xf32> to vector<8x1xf32>
    %cst_144 = arith.constant 3.125000e-02 : f32
    %308 = vector.broadcast %cst_144 : f32 to vector<8x1xf32>
    %309 = arith.mulf %307, %308 : vector<8x1xf32>
    %310 = arith.mulf %305, %305 : vector<8x128xf32>
    %cst_145 = arith.constant dense<0.000000e+00> : vector<8xf32>
    %311 = vector.multi_reduction <add>, %310, %cst_145 [1] : vector<8x128xf32> to vector<8xf32>
    %312 = vector.shape_cast %311 : vector<8xf32> to vector<8x1xf32>
    %cst_146 = arith.constant 3.125000e-02 : f32
    %313 = vector.broadcast %cst_146 : f32 to vector<8x1xf32>
    %314 = arith.mulf %312, %313 : vector<8x1xf32>
    %315 = arith.mulf %309, %309 : vector<8x1xf32>
    %316 = arith.subf %314, %315 : vector<8x1xf32>
    %317 = vector.broadcast %309 : vector<8x1xf32> to vector<8x128xf32>
    %318 = arith.subf %305, %317 : vector<8x128xf32>
    %cst_147 = arith.constant 9.99999974E-6 : f32
    %319 = vector.broadcast %cst_147 : f32 to vector<8x1xf32>
    %320 = arith.addf %316, %319 : vector<8x1xf32>
    %321 = math.rsqrt %320 : vector<8x1xf32>
    %322 = vector.broadcast %321 : vector<8x1xf32> to vector<8x128xf32>
    %323 = arith.mulf %318, %322 : vector<8x128xf32>
    %324 = vector.broadcast %191 : vector<1x128xf32> to vector<8x128xf32>
    %325 = arith.mulf %323, %324 : vector<8x128xf32>
    %326 = vector.broadcast %193 : vector<1x128xf32> to vector<8x128xf32>
    %327 = arith.addf %325, %326 : vector<8x128xf32>
    %c0_148 = arith.constant 0 : index
    %c0_149 = arith.constant 0 : index
    %c0_150 = arith.constant 0 : index
    %328 = vector.load %arg5[%c0_148, %c0_149, %c0_150] : memref<1x8x128xf32, #tpu.memory_space<vmem>>, vector<1x8x128xf32>
    %329 = vector.shape_cast %328 : vector<1x8x128xf32> to vector<8x128xf32>
    %330 = vector.shape_cast %327 : vector<8x128xf32> to vector<1x8x128xf32>
    tpu.vector_store %arg5[%c0_148, %c0_149, %c0_150], %330 {strides = array<i32>} : memref<1x8x128xf32, #tpu.memory_space<vmem>>, vector<1x8x128xf32>,
    return
  }
  func.func @transform_0(%arg0: i32) -> (i32, i32, i32) {
    %c0_i32 = arith.constant 0 : i32
    %c0_i32_0 = arith.constant 0 : i32
    %c0_i32_1 = arith.constant 0 : i32
    return %arg0, %c0_i32, %c0_i32_0 : i32, i32, i32
  }
  func.func @transform_1(%arg0: i32) -> (i32, i32, i32) {
    %c0_i32 = arith.constant 0 : i32
    %c0_i32_0 = arith.constant 0 : i32
    %c0_i32_1 = arith.constant 0 : i32
    return %arg0, %c0_i32, %c0_i32_0 : i32, i32, i32
  }
  func.func @transform_2(%arg0: i32) -> (i32, i32, i32) {
    %c0_i32 = arith.constant 0 : i32
    %c0_i32_0 = arith.constant 0 : i32
    %c0_i32_1 = arith.constant 0 : i32
    %c0_i32_2 = arith.constant 0 : i32
    return %c0_i32, %c0_i32_0, %c0_i32_1 : i32, i32, i32
  }
  func.func @transform_3(%arg0: i32) -> (i32, i32, i32) {
    %c0_i32 = arith.constant 0 : i32
    %c0_i32_0 = arith.constant 0 : i32
    %c0_i32_1 = arith.constant 0 : i32
    %c0_i32_2 = arith.constant 0 : i32
    return %c0_i32, %c0_i32_0, %c0_i32_1 : i32, i32, i32
  }
  func.func @transform_4(%arg0: i32) -> (i32, i32, i32) {
    %c0_i32 = arith.constant 0 : i32
    %c0_i32_0 = arith.constant 0 : i32
    %c0_i32_1 = arith.constant 0 : i32
    return %arg0, %c0_i32, %c0_i32_0 : i32, i32, i32
  }
}

</mosaic_0001>

<llo_original>
// kernel: transformer_encoder.1
$region0: #{transformer_encoder.1}
  #allocation0 [shape = 'u32[]', space=smem, size = 0x4, offset = 0x4, fixed_abs, tag = 'smem constant byte address 0x4 - core index']
  #allocation1 [shape = 'u32[144,128]{1,0:T(1,128)}', space=vmem, size = 0x12000, scoped, tag = 'internal scratch']
  %s0 = inlined_call_operand.vmem [shape: f32[2,8,128], index: 0, kind: input, shape index: {}]
  %s1 = inlined_call_operand.vmem [shape: f32[2,8,128], index: 1, kind: input, shape index: {}]
  %s2 = inlined_call_operand.hbm [shape: bf16[2,544,128], index: 2, kind: input, shape index: {}]
  %s3 = inlined_call_operand.vmem [shape: f32[2,16,128], index: 3, kind: input, shape index: {}]
  %s4 = inlined_call_operand.vmem [shape: f32[2,8,128], index: 4, kind: output, shape index: {}]
  %s5 = sld [smem:[#allocation0]]
  $region53: #{transformer_encoder.1} parent=0
    _
  %s7 = ssub.s32 1, %s5
  %s8 = scalar_select 0, %s7, %s5
  $region1: #{transformer_encoder.1} parent=0
    #allocation2 [shape = 'u8[278528]{0}', space=vmem, size = 0x44000, scoped, tag = 'input window, operand 2, single buffered']
    #allocation3 [shape = 's32[2]{0}', space=sflag, size = 0x8, scoped, tag = 'scoped memory for transformer_encoder.1']
    %9 = vsyncpa [#allocation3], 0
    loop: start=0, step=1, limit=4
    $region2: #{transformer_encoder.1} parent=1 // loop_pre_header
      _
    $region3: #{transformer_encoder.1} parent=1 // loop_header
      %s11 = sphi 0, %s15
      %p12 = scmp.ge.s32.totalorder %s11, 4
      %s21 = sphi 0, %s23
      %s24 = sphi 0, %s21
      %s25 = sphi 0, %s24
      %s41 = sphi 0, %s25
      %s47 = sphi 0, %s49
      %s50 = sphi 0, %s47
      %s51 = sphi 0, %s50
      %s67 = sphi 0, %s51
      %s71 = sphi 0, %s71
      %s73 = sphi 0, %s71
      %s74 = sphi 0, %s73
      %s88 = sphi 0, %s74
      %s92 = sphi 0, %s92
      %s94 = sphi 0, %s92
      %s95 = sphi 0, %s94
      %s109 = sphi 0, %s95
      %s115 = sphi 0, %s117
      %s118 = sphi 0, %s115
      %s119 = sphi 0, %s118
      %s135 = sphi 0, %s119
    $region4: #{transformer_encoder.1} parent=1 // loop_header_branch
      %14 = sbr.rel (%p12) target = $region8
    $region5: #{transformer_encoder.1} parent=1 // loop_body
      %s16 = ssub.s32 %s11, 1
      %s17 = ssub.s32 %s11, 2
      %s18 = sadd.s32 %s11, 1
      %s19 = ssub.s32 %s11, %s18
      %p20 = scmp.eq.s32.totalorder %s19, 0
      %s22 = sadd.s32 %s21, 1
      %s23 = scalar_select %p20, %s21, %s22
      %p26 = pneg %p20
      %p27 = scmp.eq.s32.totalorder %s11, 1
      %p28 = por %p26, %p27
      %p29 = scmp.ne.s32.totalorder %s21, %s24
      %p30 = scmp.eq.s32.totalorder %s11, 0
      %p31 = por %p29, %p30
      %p32 = scmp.ne.s32.totalorder %s21, %s24
      %p33 = scmp.eq.s32.totalorder %s16, 1
      %p34 = por %p32, %p33
      %p35 = scmp.ne.s32.totalorder %s24, %s25
      %p36 = scmp.eq.s32.totalorder %s16, 0
      %p37 = por %p35, %p36
      %p38 = scmp.ne.s32.totalorder %s24, %s25
      %p39 = scmp.eq.s32.totalorder %s17, 1
      %p40 = por %p38, %p39
      %p42 = scmp.ne.s32.totalorder %s25, %s41
      %p43 = scmp.eq.s32.totalorder %s17, 0
      %p44 = por %p42, %p43
      %s45 = ssub.s32 %s11, %s18
      %p46 = scmp.eq.s32.totalorder %s45, 0
      %s48 = sadd.s32 %s47, 1
      %s49 = scalar_select %p46, %s47, %s48
      %p52 = pneg %p46
      %p53 = scmp.eq.s32.totalorder %s11, 1
      %p54 = por %p52, %p53
      %p55 = scmp.ne.s32.totalorder %s47, %s50
      %p56 = scmp.eq.s32.totalorder %s11, 0
      %p57 = por %p55, %p56
      %p58 = scmp.ne.s32.totalorder %s47, %s50
      %p59 = scmp.eq.s32.totalorder %s16, 1
      %p60 = por %p58, %p59
      %p61 = scmp.ne.s32.totalorder %s50, %s51
      %p62 = scmp.eq.s32.totalorder %s16, 0
      %p63 = por %p61, %p62
      %p64 = scmp.ne.s32.totalorder %s50, %s51
      %p65 = scmp.eq.s32.totalorder %s17, 1
      %p66 = por %p64, %p65
      %p68 = scmp.ne.s32.totalorder %s51, %s67
      %p69 = scmp.eq.s32.totalorder %s17, 0
      %p70 = por %p68, %p69
      %s72 = sadd.s32 %s71, 1
      %p75 = scmp.eq.s32.totalorder %s11, 1
      %p76 = scmp.ne.s32.totalorder %s71, %s73
      %p77 = scmp.eq.s32.totalorder %s11, 0
      %p78 = por %p76, %p77
      %p79 = scmp.ne.s32.totalorder %s71, %s73
      %p80 = scmp.eq.s32.totalorder %s16, 1
      %p81 = por %p79, %p80
      %p82 = scmp.ne.s32.totalorder %s73, %s74
      %p83 = scmp.eq.s32.totalorder %s16, 0
      %p84 = por %p82, %p83
      %p85 = scmp.ne.s32.totalorder %s73, %s74
      %p86 = scmp.eq.s32.totalorder %s17, 1
      %p87 = por %p85, %p86
      %p89 = scmp.ne.s32.totalorder %s74, %s88
      %p90 = scmp.eq.s32.totalorder %s17, 0
      %p91 = por %p89, %p90
      %s93 = sadd.s32 %s92, 1
      %p96 = scmp.eq.s32.totalorder %s11, 1
      %p97 = scmp.ne.s32.totalorder %s92, %s94
      %p98 = scmp.eq.s32.totalorder %s11, 0
      %p99 = por %p97, %p98
      %p100 = scmp.ne.s32.totalorder %s92, %s94
      %p101 = scmp.eq.s32.totalorder %s16, 1
      %p102 = por %p100, %p101
      %p103 = scmp.ne.s32.totalorder %s94, %s95
      %p104 = scmp.eq.s32.totalorder %s16, 0
      %p105 = por %p103, %p104
      %p106 = scmp.ne.s32.totalorder %s94, %s95
      %p107 = scmp.eq.s32.totalorder %s17, 1
      %p108 = por %p106, %p107
      %p110 = scmp.ne.s32.totalorder %s95, %s109
      %p111 = scmp.eq.s32.totalorder %s17, 0
      %p112 = por %p110, %p111
      %s113 = ssub.s32 %s11, %s18
      %p114 = scmp.eq.s32.totalorder %s113, 0
      %s116 = sadd.s32 %s115, 1
      %s117 = scalar_select %p114, %s115, %s116
      %p120 = pneg %p114
      %p121 = scmp.eq.s32.totalorder %s11, 1
      %p122 = por %p120, %p121
      %p123 = scmp.ne.s32.totalorder %s115, %s118
      %p124 = scmp.eq.s32.totalorder %s11, 0
      %p125 = por %p123, %p124
      %p126 = scmp.ne.s32.totalorder %s115, %s118
      %p127 = scmp.eq.s32.totalorder %s16, 1
      %p128 = por %p126, %p127
      %p129 = scmp.ne.s32.totalorder %s118, %s119
      %p130 = scmp.eq.s32.totalorder %s16, 0
      %p131 = por %p129, %p130
      %p132 = scmp.ne.s32.totalorder %s118, %s119
      %p133 = scmp.eq.s32.totalorder %s17, 1
      %p134 = por %p132, %p133
      %p136 = scmp.ne.s32.totalorder %s119, %s135
      %p137 = scmp.eq.s32.totalorder %s17, 0
      %p138 = por %p136, %p137
      %p139 = scmp.le.s32.totalorder 1, %s11
      %p140 = scmp.lt.s32.totalorder %s11, 3
      %p141 = pnand %p139, %p140
      %p142 = pneg %p141
      // Predicated region
      $region9: #{transformer_encoder.1} parent=5 // pred_check
        _
      $region10: #{transformer_encoder.1} parent=5 // pred_check_branch
        %144 = sbr.rel (%p141) target = $region12
      $region11: #{transformer_encoder.1} parent=5 // pred_region
        %s145 = ssub.s32 %s11, 1
        // Predicated region
        $region13: #{transformer_encoder.1} parent=11 // pred_check
          %p146 = pneg %p84
        $region14: #{transformer_encoder.1} parent=11 // pred_check_branch
          %148 = sbr.rel (%p146) target = $region16
        $region15: #{transformer_encoder.1} parent=11 // pred_region
          %s150 = ssub.s32 8704, 8704
          %151 = vsyncadd [#allocation3], %s150
          %s152 = sshll.u32 [#allocation2], 4
          %s153 = int_to_ptr.vmem [resolvable:$true] %s152
          %158 = dma.hbm_to_vmem [thread:$0]  %s2, 8704, %s153, [#allocation3], 64, 64, 4
        $region16: #{transformer_encoder.1} parent=11 // pred_fallthru
          _
        // Predicated region
        $region17: #{transformer_encoder.1} parent=11 // pred_check
          %p159 = pneg %p105
        $region18: #{transformer_encoder.1} parent=11 // pred_check_branch
          %161 = sbr.rel (%p159) target = $region20
        $region19: #{transformer_encoder.1} parent=11 // pred_region
          _
        $region20: #{transformer_encoder.1} parent=11 // pred_fallthru
          _
      $region12: #{transformer_encoder.1} parent=5 // pred_fallthru
        _
      %p162 = scmp.lt.s32.totalorder %s11, 2
      // Predicated region
      $region21: #{transformer_encoder.1} parent=5 // pred_check
        %p163 = pneg %p162
      $region22: #{transformer_encoder.1} parent=5 // pred_check_branch
        %165 = sbr.rel (%p163) target = $region24
      $region23: #{transformer_encoder.1} parent=5 // pred_region
        // Predicated region
        $region25: #{transformer_encoder.1} parent=23 // pred_check
          %p166 = pneg %p31
        $region26: #{transformer_encoder.1} parent=23 // pred_check_branch
          %168 = sbr.rel (%p166) target = $region28
        $region27: #{transformer_encoder.1} parent=23 // pred_region
          %p169 = scmp.lt.s32.totalorder %s11, 1
          %s170 = scalar_select %p169, %s11, 1
          %s171 = smul.addr %s170, 8
          %s172 = scalar_lea.vmem %s0, %s171
        $region28: #{transformer_encoder.1} parent=23 // pred_fallthru
          _
        // Predicated region
        $region29: #{transformer_encoder.1} parent=23 // pred_check
          %p173 = pneg %p57
        $region30: #{transformer_encoder.1} parent=23 // pred_check_branch
          %175 = sbr.rel (%p173) target = $region32
        $region31: #{transformer_encoder.1} parent=23 // pred_region
          %p176 = scmp.lt.s32.totalorder %s11, 1
          %s177 = scalar_select %p176, %s11, 1
          %s178 = smul.addr %s177, 8
          %s179 = scalar_lea.vmem %s1, %s178
        $region32: #{transformer_encoder.1} parent=23 // pred_fallthru
          _
      $region24: #{transformer_encoder.1} parent=5 // pred_fallthru
        _
      %p180 = scmp.le.s32.totalorder 1, %s11
      %p181 = scmp.lt.s32.totalorder %s11, 3
      %p182 = pnand %p180, %p181
      %p183 = pneg %p182
      // Predicated region
      $region33: #{transformer_encoder.1} parent=5 // pred_check
        _
      $region34: #{transformer_encoder.1} parent=5 // pred_check_branch
        %185 = sbr.rel (%p182) target = $region36
      $region35: #{transformer_encoder.1} parent=5 // pred_region
        %s186 = ssub.s32 %s11, 1
        // Predicated region
        $region37: #{transformer_encoder.1} parent=35 // pred_check
          %p187 = pneg %p84
        $region38: #{transformer_encoder.1} parent=35 // pred_check_branch
          %189 = sbr.rel (%p187) target = $region40
        $region39: #{transformer_encoder.1} parent=35 // pred_region
          %190 = dma.done [#allocation3], 8704
        $region40: #{transformer_encoder.1} parent=35 // pred_fallthru
          _
        %p191 = scmp.lt.s32.totalorder %s16, 1
        %s192 = scalar_select %p191, %s16, 1
        %s193 = smul.addr %s192, 8
        %s194 = scalar_lea.vmem %s0, %s193
        %p195 = pneg %p37
        %p196 = pneg %p34
        %p197 = scmp.lt.s32.totalorder %s16, 1
        %s198 = scalar_select %p197, %s16, 1
        %s199 = smul.addr %s198, 8
        %s200 = scalar_lea.vmem %s1, %s199
        %p201 = pneg %p63
        %p202 = pneg %p60
        %p203 = pneg %p84
        %p204 = pneg %p81
        %p205 = pneg %p105
        %p206 = pneg %p102
        %p207 = pneg %p131
        %p208 = pneg %p128
        %p209 = scmp.lt.s32.totalorder %s16, 1
        %s210 = scalar_select %p209, %s16, 1
        %s211 = smul.addr %s210, 8
        %s212 = scalar_lea.vmem %s4, %s211
        %p213 = scmp.lt.s32.totalorder %s16, 1
        %s214 = scalar_select %p213, %s16, 1
        %s215 = smul.addr %s214, 8
        %s216 = scalar_lea.vmem %s0, %s215
        %p217 = scmp.lt.s32.totalorder %s16, 1
        %s218 = scalar_select %p217, %s16, 1
        %s219 = smul.addr %s218, 8
        %s220 = scalar_lea.vmem %s1, %s219
        %p221 = scmp.lt.s32.totalorder %s16, 1
        %s222 = scalar_select %p221, %s16, 1
        %s223 = smul.addr %s222, 8
        %s224 = scalar_lea.vmem %s4, %s223
        %v226 = vld [vmem:[%s216] sm:$0xff]
        %v227 = vld [vmem:[%s220] sm:$0xff]
        %v228 = vld [vmem:[#allocation2] sm:$0xf]
        %v229 = vld [vmem:[#allocation2 + $0x4] sm:$0xf]
        %v230 = vld [vmem:[#allocation2 + $0x8] sm:$0xf]
        %v231 = vld [vmem:[#allocation2 + $0xc] sm:$0xf]
        %v232 = vld [vmem:[#allocation2 + $0x10] sm:$0xf]
        %v233 = vld [vmem:[#allocation2 + $0x14] sm:$0xf]
        %v234 = vld [vmem:[#allocation2 + $0x18] sm:$0xf]
        %v235 = vld [vmem:[#allocation2 + $0x1c] sm:$0xf]
        %v236 = vld [vmem:[#allocation2 + $0x20] sm:$0xf]
        %v237 = vld [vmem:[#allocation2 + $0x24] sm:$0xf]
        %v238 = vld [vmem:[#allocation2 + $0x28] sm:$0xf]
        %v239 = vld [vmem:[#allocation2 + $0x2c] sm:$0xf]
        %v240 = vld [vmem:[#allocation2 + $0x30] sm:$0xf]
        %v241 = vld [vmem:[#allocation2 + $0x34] sm:$0xf]
        %v242 = vld [vmem:[#allocation2 + $0x38] sm:$0xf]
        %v243 = vld [vmem:[#allocation2 + $0x3c] sm:$0xf]
        %v244 = vld [vmem:[#allocation2 + $0x40] sm:$0xf]
        %v245 = vld [vmem:[#allocation2 + $0x44] sm:$0xf]
        %v246 = vld [vmem:[#allocation2 + $0x48] sm:$0xf]
        %v247 = vld [vmem:[#allocation2 + $0x4c] sm:$0xf]
        %v248 = vld [vmem:[#allocation2 + $0x50] sm:$0xf]
        %v249 = vld [vmem:[#allocation2 + $0x54] sm:$0xf]
        %v250 = vld [vmem:[#allocation2 + $0x58] sm:$0xf]
        %v251 = vld [vmem:[#allocation2 + $0x5c] sm:$0xf]
        %v252 = vld [vmem:[#allocation2 + $0x60] sm:$0xf]
        %v253 = vld [vmem:[#allocation2 + $0x64] sm:$0xf]
        %v254 = vld [vmem:[#allocation2 + $0x68] sm:$0xf]
        %v255 = vld [vmem:[#allocation2 + $0x6c] sm:$0xf]
        %v256 = vld [vmem:[#allocation2 + $0x70] sm:$0xf]
        %v257 = vld [vmem:[#allocation2 + $0x74] sm:$0xf]
        %v258 = vld [vmem:[#allocation2 + $0x78] sm:$0xf]
        %v259 = vld [vmem:[#allocation2 + $0x7c] sm:$0xf]
        %v260 = vld [vmem:[#allocation2 + $0x80] sm:$0xf]
        %v261 = vld [vmem:[#allocation2 + $0x84] sm:$0xf]
        %v262 = vld [vmem:[#allocation2 + $0x88] sm:$0xf]
        %v263 = vld [vmem:[#allocation2 + $0x8c] sm:$0xf]
        %v264 = vld [vmem:[#allocation2 + $0x90] sm:$0xf]
        %v265 = vld [vmem:[#allocation2 + $0x94] sm:$0xf]
        %v266 = vld [vmem:[#allocation2 + $0x98] sm:$0xf]
        %v267 = vld [vmem:[#allocation2 + $0x9c] sm:$0xf]
        %v268 = vld [vmem:[#allocation2 + $0xa0] sm:$0xf]
        %v269 = vld [vmem:[#allocation2 + $0xa4] sm:$0xf]
        %v270 = vld [vmem:[#allocation2 + $0xa8] sm:$0xf]
        %v271 = vld [vmem:[#allocation2 + $0xac] sm:$0xf]
        %v272 = vld [vmem:[#allocation2 + $0xb0] sm:$0xf]
        %v273 = vld [vmem:[#allocation2 + $0xb4] sm:$0xf]
        %v274 = vld [vmem:[#allocation2 + $0xb8] sm:$0xf]
        %v275 = vld [vmem:[#allocation2 + $0xbc] sm:$0xf]
        %v276 = vld [vmem:[#allocation2 + $0xc0] sm:$0xf]
        %v277 = vld [vmem:[#allocation2 + $0xc4] sm:$0xf]
        %v278 = vld [vmem:[#allocation2 + $0xc8] sm:$0xf]
        %v279 = vld [vmem:[#allocation2 + $0xcc] sm:$0xf]
        %v280 = vld [vmem:[#allocation2 + $0xd0] sm:$0xf]
        %v281 = vld [vmem:[#allocation2 + $0xd4] sm:$0xf]
        %v282 = vld [vmem:[#allocation2 + $0xd8] sm:$0xf]
        %v283 = vld [vmem:[#allocation2 + $0xdc] sm:$0xf]
        %v284 = vld [vmem:[#allocation2 + $0xe0] sm:$0xf]
        %v285 = vld [vmem:[#allocation2 + $0xe4] sm:$0xf]
        %v286 = vld [vmem:[#allocation2 + $0xe8] sm:$0xf]
        %v287 = vld [vmem:[#allocation2 + $0xec] sm:$0xf]
        %v288 = vld [vmem:[#allocation2 + $0xf0] sm:$0xf]
        %v289 = vld [vmem:[#allocation2 + $0xf4] sm:$0xf]
        %v290 = vld [vmem:[#allocation2 + $0xf8] sm:$0xf]
        %v291 = vld [vmem:[#allocation2 + $0xfc] sm:$0xf]
        %v292 = vld [vmem:[#allocation2 + $0x100] sm:$0xf]
        %v293 = vld [vmem:[#allocation2 + $0x104] sm:$0xf]
        %v294 = vld [vmem:[#allocation2 + $0x108] sm:$0xf]
        %v295 = vld [vmem:[#allocation2 + $0x10c] sm:$0xf]
        %v296 = vld [vmem:[%s3] sm:$0x1]
        %v297 = vld [vmem:[%s3 + $0x1] sm:$0x1]
        %v298 = vld [vmem:[%s3 + $0x2] sm:$0x1]
        %v299 = vld [vmem:[%s3 + $0x3] sm:$0x1]
        %v300 = vld [vmem:[%s3 + $0x4] sm:$0x1]
        %v301 = vld [vmem:[%s3 + $0x5] sm:$0x1]
        %v302 = vld [vmem:[%s3 + $0x6] sm:$0x1]
        %v303 = vld [vmem:[%s3 + $0x7] sm:$0x1]
        %v304 = vld [vmem:[%s3 + $0x8] sm:$0x1]
        %v305 = vadd.f32 %v226, %v227
        %v306 = vpack.c.bf16 %v305, %v305
        %v307 = vlaneseq
        %v308 = vshrl.u32 %v307, 7
        %v309 = vsub.s32 0, %v308
        %v310 = vrot.slane %v296, %v309
        %v327 = vunpack.c.l.b16 %v228
        %v328 = vunpack.c.l.b16 %v229
        %v329 = vunpack.c.l.b16 %v230
        %v330 = vunpack.c.l.b16 %v231
        %v331 = vunpack.c.l.b16 %v232
        %v332 = vunpack.c.l.b16 %v233
        %v333 = vunpack.c.l.b16 %v234
        %v334 = vunpack.c.l.b16 %v235
        %v335 = vunpack.c.l.b16 %v236
        %v336 = vunpack.c.l.b16 %v237
        %v337 = vunpack.c.l.b16 %v238
        %v338 = vunpack.c.l.b16 %v239
        %v339 = vunpack.c.l.b16 %v240
        %v340 = vunpack.c.l.b16 %v241
        %v341 = vunpack.c.l.b16 %v242
        %v342 = vunpack.c.l.b16 %v243
        %v343 = vpack.c.b16 %v328, %v327
        %v344 = vpack.c.b16 %v330, %v329
        %v345 = vpack.c.b16 %v332, %v331
        %v346 = vpack.c.b16 %v334, %v333
        %v347 = vpack.c.b16 %v336, %v335
        %v348 = vpack.c.b16 %v338, %v337
        %v349 = vpack.c.b16 %v340, %v339
        %v350 = vpack.c.b16 %v342, %v341
        %359 = vmatprep.subr.bf16.mxu0 0
        %360 = vmatpush1.bf16.msra.mxu0 %v350
        %361 = vmatprep.subr.bf16.mxu0 0
        %362 = vmatpush1.bf16.msra.mxu0 %v349
        %363 = vmatprep.subr.bf16.mxu0 0
        %364 = vmatpush1.bf16.msra.mxu0 %v348
        %365 = vmatprep.subr.bf16.mxu0 0
        %366 = vmatpush1.bf16.msra.mxu0 %v347
        %367 = vmatprep.subr.bf16.mxu0 0
        %368 = vmatpush1.bf16.msra.mxu0 %v346
        %369 = vmatprep.subr.bf16.mxu0 0
        %370 = vmatpush1.bf16.msra.mxu0 %v345
        %371 = vmatprep.subr.bf16.mxu0 0
        %372 = vmatpush1.bf16.msra.mxu0 %v344
        %373 = vmatprep.subr.bf16.mxu0 0
        %374 = vmatpush1.bf16.msra.mxu0 %v343
        %375 = vmatprep.subr.bf16.mxu0 0
        %376 = vmatpush2.bf16.msra.mxu0 0
        %377 = vmatprep.subr.bf16.mxu0 0
        %378 = vmatpush2.bf16.msra.mxu0 0
        %379 = vmatprep.subr.bf16.mxu0 0
        %380 = vmatpush2.bf16.msra.mxu0 0
        %381 = vmatprep.subr.bf16.mxu0 0
        %382 = vmatpush2.bf16.msra.mxu0 0
        %383 = vmatprep.subr.bf16.mxu0 0
        %384 = vmatpush2.bf16.msra.mxu0 0
        %385 = vmatprep.subr.bf16.mxu0 0
        %386 = vmatpush2.bf16.msra.mxu0 0
        %387 = vmatprep.subr.bf16.mxu0 0
        %388 = vmatpush2.bf16.msra.mxu0 0
        %389 = vmatprep.subr.bf16.mxu0 0
        %390 = vmatpush2.bf16.msra.mxu0 0
        %391 = vmatprep.mubr.bf16.mxu0 0
        %392 = vmatmul.mubr.bf16.gmra.mxu0 %v306
        %v393 = vpop.f32.mrf.mxu0
        %v394 = vadd.f32 %v310, %v393
        %v395 = vpop.f32.mrf.mxu0
        %v396 = vpop.f32.mrf.mxu0
        %v397 = vpop.f32.mrf.mxu0
        %398 = vdwg.mxu0
        %v399 = vpack.c.bf16 %v226, %v226
        %v400 = vlaneseq
        %v401 = vshrl.u32 %v400, 7
        %v402 = vsub.s32 0, %v401
        %v403 = vrot.slane %v297, %v402
        %v420 = vunpack.c.l.b16 %v244
        %v421 = vunpack.c.l.b16 %v245
        %v422 = vunpack.c.l.b16 %v246
        %v423 = vunpack.c.l.b16 %v247
        %v424 = vunpack.c.l.b16 %v248
        %v425 = vunpack.c.l.b16 %v249
        %v426 = vunpack.c.l.b16 %v250
        %v427 = vunpack.c.l.b16 %v251
        %v428 = vunpack.c.l.b16 %v252
        %v429 = vunpack.c.l.b16 %v253
        %v430 = vunpack.c.l.b16 %v254
        %v431 = vunpack.c.l.b16 %v255
        %v432 = vunpack.c.l.b16 %v256
        %v433 = vunpack.c.l.b16 %v257
        %v434 = vunpack.c.l.b16 %v258
        %v435 = vunpack.c.l.b16 %v259
        %v436 = vpack.c.b16 %v421, %v420
        %v437 = vpack.c.b16 %v423, %v422
        %v438 = vpack.c.b16 %v425, %v424
        %v439 = vpack.c.b16 %v427, %v426
        %v440 = vpack.c.b16 %v429, %v428
        %v441 = vpack.c.b16 %v431, %v430
        %v442 = vpack.c.b16 %v433, %v432
        %v443 = vpack.c.b16 %v435, %v434
        %452 = vmatprep.subr.bf16.mxu0 0
        %453 = vmatpush1.bf16.msra.mxu0 %v443
        %454 = vmatprep.subr.bf16.mxu0 0
        %455 = vmatpush1.bf16.msra.mxu0 %v442
        %456 = vmatprep.subr.bf16.mxu0 0
        %457 = vmatpush1.bf16.msra.mxu0 %v441
        %458 = vmatprep.subr.bf16.mxu0 0
        %459 = vmatpush1.bf16.msra.mxu0 %v440
        %460 = vmatprep.subr.bf16.mxu0 0
        %461 = vmatpush1.bf16.msra.mxu0 %v439
        %462 = vmatprep.subr.bf16.mxu0 0
        %463 = vmatpush1.bf16.msra.mxu0 %v438
        %464 = vmatprep.subr.bf16.mxu0 0
        %465 = vmatpush1.bf16.msra.mxu0 %v437
        %466 = vmatprep.subr.bf16.mxu0 0
        %467 = vmatpush1.bf16.msra.mxu0 %v436
        %468 = vmatprep.subr.bf16.mxu0 0
        %469 = vmatpush2.bf16.msra.mxu0 0
        %470 = vmatprep.subr.bf16.mxu0 0
        %471 = vmatpush2.bf16.msra.mxu0 0
        %472 = vmatprep.subr.bf16.mxu0 0
        %473 = vmatpush2.bf16.msra.mxu0 0
        %474 = vmatprep.subr.bf16.mxu0 0
        %475 = vmatpush2.bf16.msra.mxu0 0
        %476 = vmatprep.subr.bf16.mxu0 0
        %477 = vmatpush2.bf16.msra.mxu0 0
        %478 = vmatprep.subr.bf16.mxu0 0
        %479 = vmatpush2.bf16.msra.mxu0 0
        %480 = vmatprep.subr.bf16.mxu0 0
        %481 = vmatpush2.bf16.msra.mxu0 0
        %482 = vmatprep.subr.bf16.mxu0 0
        %483 = vmatpush2.bf16.msra.mxu0 0
        %484 = vmatprep.mubr.bf16.mxu0 0
        %485 = vmatmul.mubr.bf16.gmra.mxu0 %v399
        %v486 = vpop.f32.mrf.mxu0
        %v487 = vadd.f32 %v403, %v486
        %v488 = vpop.f32.mrf.mxu0
        %v489 = vpop.f32.mrf.mxu0
        %v490 = vpop.f32.mrf.mxu0
        %491 = vdwg.mxu0
        %v492 = vmul.f32 %v394, 0.35355338
        %494 = vrot.lane.b32.xlu0 %v394, 96
        %v495 = vpop.permute.xlu0 %494
        %vm496 = vcmask 64512
        %v498 = vsel %vm496, %v492, 0
        %v500 = vsel %vm496, %v495, 0
        %502 = vmatprep.subr.mxu0 0.0
        %503 = vmatpush1.xpose.msra.mxu0 0.0
        %504 = vmatprep.subr.mxu0 0.0
        %505 = vmatpush1.xpose.msra.mxu0 0.0
        %506 = vmatprep.subr.mxu0 0.0
        %507 = vmatpush1.xpose.msra.mxu0 0.0
        %508 = vmatprep.subr.mxu0 0.0
        %509 = vmatpush1.xpose.msra.mxu0 0.0
        %510 = vmatprep.subr.mxu0 0.0
        %511 = vmatpush1.xpose.msra.mxu0 0.0
        %512 = vmatprep.subr.mxu0 0.0
        %513 = vmatpush1.xpose.msra.mxu0 0.0
        %514 = vmatprep.subr.mxu0 0.0
        %515 = vmatpush1.xpose.msra.mxu0 0.0
        %516 = vmatprep.subr.mxu0 0.0
        %517 = vmatpush1.xpose.msra.mxu0 0.0
        %518 = vmatprep.subr.mxu0 0.0
        %519 = vmatpush1.xpose.msra.mxu0 0.0
        %520 = vmatprep.subr.mxu0 0.0
        %521 = vmatpush1.xpose.msra.mxu0 0.0
        %522 = vmatprep.subr.mxu0 0.0
        %523 = vmatpush1.xpose.msra.mxu0 0.0
        %524 = vmatprep.subr.mxu0 0.0
        %525 = vmatpush1.xpose.msra.mxu0 0.0
        %526 = vmatprep.subr.mxu0 0.0
        %527 = vmatpush1.xpose.msra.mxu0 0.0
        %528 = vmatprep.subr.mxu0 0.0
        %529 = vmatpush1.xpose.msra.mxu0 0.0
        %530 = vmatprep.subr.mxu0 0.0
        %531 = vmatpush1.xpose.msra.mxu0 0.0
        %532 = vmatprep.subr.mxu0 0.0
        %533 = vmatpush1.xpose.msra.mxu0 %v500
        %534 = vmatprep.subr.mxu0 0.0
        %535 = vmatpush2.xpose.msra.mxu0 0.0
        %536 = vmatprep.subr.mxu0 0.0
        %537 = vmatpush2.xpose.msra.mxu0 0.0
        %538 = vmatprep.subr.mxu0 0.0
        %539 = vmatpush2.xpose.msra.mxu0 0.0
        %540 = vmatprep.subr.mxu0 0.0
        %541 = vmatpush2.xpose.msra.mxu0 0.0
        %542 = vmatprep.subr.mxu0 0.0
        %543 = vmatpush2.xpose.msra.mxu0 0.0
        %544 = vmatprep.subr.mxu0 0.0
        %545 = vmatpush2.xpose.msra.mxu0 0.0
        %546 = vmatprep.subr.mxu0 0.0
        %547 = vmatpush2.xpose.msra.mxu0 0.0
        %548 = vmatprep.subr.mxu0 0.0
        %549 = vmatpush2.xpose.msra.mxu0 0.0
        %550 = vmatprep.subr.mxu0 0.0
        %551 = vmatpush2.xpose.msra.mxu0 0.0
        %552 = vmatprep.subr.mxu0 0.0
        %553 = vmatpush2.xpose.msra.mxu0 0.0
        %554 = vmatprep.subr.mxu0 0.0
        %555 = vmatpush2.xpose.msra.mxu0 0.0
        %556 = vmatprep.subr.mxu0 0.0
        %557 = vmatpush2.xpose.msra.mxu0 0.0
        %558 = vmatprep.subr.mxu0 0.0
        %559 = vmatpush2.xpose.msra.mxu0 0.0
        %560 = vmatprep.subr.mxu0 0.0
        %561 = vmatpush2.xpose.msra.mxu0 0.0
        %562 = vmatprep.subr.mxu0 0.0
        %563 = vmatpush2.xpose.msra.mxu0 0.0
        %564 = vmatprep.subr.mxu0 0.0
        %565 = vmatpush2.xpose.msra.mxu0 0.0
        %566 = vmatprep.mubr.f32.mxu0 0.0
        %567 = vmatmul.mubr.f32.gmra.mxu0 %v498
        %v568 = vpop.f32.mrf.mxu0
        %v569 = vadd.f32 0.0, %v568
        %v570 = vpop.f32.mrf.mxu0
        %571 = vdwg.mxu0
        %v572 = vsel %vm496, %v569, -inf
        %573 = vmax.xlane.f32.xlu0 %v572
        %v574 = vpop.xlane.xlu0 %573
        %v575 = vsub.f32 %v569, %v574
        %v576 = vmul.f32 %v575, 1.442695
        %v577 = vpow.pop %v576
        %v578 = vsel %vm496, %v577, 0.0
        %579 = vadd.xlane.f32.xlu0 %v578
        %v580 = vpop.xlane.xlu0 %579
        %v581 = vrcp.pop %v580
        %v582 = vmul.f32 %v577, %v581
        %v584 = vsel %vm496, %v582, 0
        %586 = vmatprep.subr.mxu0 0.0
        %587 = vmatpush1.msra.mxu0 0.0
        %588 = vmatprep.subr.mxu0 0.0
        %589 = vmatpush1.msra.mxu0 0.0
        %590 = vmatprep.subr.mxu0 0.0
        %591 = vmatpush1.msra.mxu0 0.0
        %592 = vmatprep.subr.mxu0 0.0
        %593 = vmatpush1.msra.mxu0 0.0
        %594 = vmatprep.subr.mxu0 0.0
        %595 = vmatpush1.msra.mxu0 0.0
        %596 = vmatprep.subr.mxu0 0.0
        %597 = vmatpush1.msra.mxu0 0.0
        %598 = vmatprep.subr.mxu0 0.0
        %599 = vmatpush1.msra.mxu0 0.0
        %600 = vmatprep.subr.mxu0 0.0
        %601 = vmatpush1.msra.mxu0 0.0
        %602 = vmatprep.subr.mxu0 0.0
        %603 = vmatpush1.msra.mxu0 0.0
        %604 = vmatprep.subr.mxu0 0.0
        %605 = vmatpush1.msra.mxu0 0.0
        %606 = vmatprep.subr.mxu0 0.0
        %607 = vmatpush1.msra.mxu0 0.0
        %608 = vmatprep.subr.mxu0 0.0
        %609 = vmatpush1.msra.mxu0 0.0
        %610 = vmatprep.subr.mxu0 0.0
        %611 = vmatpush1.msra.mxu0 0.0
        %612 = vmatprep.subr.mxu0 0.0
        %613 = vmatpush1.msra.mxu0 0.0
        %614 = vmatprep.subr.mxu0 0.0
        %615 = vmatpush1.msra.mxu0 0.0
        %616 = vmatprep.subr.mxu0 0.0
        %617 = vmatpush1.msra.mxu0 %v487
        %618 = vmatprep.subr.mxu0 0.0
        %619 = vmatpush2.msra.mxu0 0.0
        %620 = vmatprep.subr.mxu0 0.0
        %621 = vmatpush2.msra.mxu0 0.0
        %622 = vmatprep.subr.mxu0 0.0
        %623 = vmatpush2.msra.mxu0 0.0
        %624 = vmatprep.subr.mxu0 0.0
        %625 = vmatpush2.msra.mxu0 0.0
        %626 = vmatprep.subr.mxu0 0.0
        %627 = vmatpush2.msra.mxu0 0.0
        %628 = vmatprep.subr.mxu0 0.0
        %629 = vmatpush2.msra.mxu0 0.0
        %630 = vmatprep.subr.mxu0 0.0
        %631 = vmatpush2.msra.mxu0 0.0
        %632 = vmatprep.subr.mxu0 0.0
        %633 = vmatpush2.msra.mxu0 0.0
        %634 = vmatprep.subr.mxu0 0.0
        %635 = vmatpush2.msra.mxu0 0.0
        %636 = vmatprep.subr.mxu0 0.0
        %637 = vmatpush2.msra.mxu0 0.0
        %638 = vmatprep.subr.mxu0 0.0
        %639 = vmatpush2.msra.mxu0 0.0
        %640 = vmatprep.subr.mxu0 0.0
        %641 = vmatpush2.msra.mxu0 0.0
        %642 = vmatprep.subr.mxu0 0.0
        %643 = vmatpush2.msra.mxu0 0.0
        %644 = vmatprep.subr.mxu0 0.0
        %645 = vmatpush2.msra.mxu0 0.0
        %646 = vmatprep.subr.mxu0 0.0
        %647 = vmatpush2.msra.mxu0 0.0
        %648 = vmatprep.subr.mxu0 0.0
        %649 = vmatpush2.msra.mxu0 0.0
        %650 = vmatprep.mubr.f32.mxu0 0.0
        %651 = vmatmul.mubr.f32.gmra.mxu0 %v584
        %v652 = vpop.f32.mrf.mxu0
        %v653 = vadd.f32 0.0, %v652
        %v654 = vpop.f32.mrf.mxu0
        %655 = vdwg.mxu0
        %656 = vrot.lane.b32.xlu0 %v492, 120
        %v657 = vpop.permute.xlu0 %656
        %658 = vrot.lane.b32.xlu0 %v394, 88
        %v659 = vpop.permute.xlu0 %658
        %v660 = vsel %vm496, %v657, 0
        %v662 = vsel %vm496, %v659, 0
        %664 = vmatprep.subr.mxu0 0.0
        %665 = vmatpush1.xpose.msra.mxu0 0.0
        %666 = vmatprep.subr.mxu0 0.0
        %667 = vmatpush1.xpose.msra.mxu0 0.0
        %668 = vmatprep.subr.mxu0 0.0
        %669 = vmatpush1.xpose.msra.mxu0 0.0
        %670 = vmatprep.subr.mxu0 0.0
        %671 = vmatpush1.xpose.msra.mxu0 0.0
        %672 = vmatprep.subr.mxu0 0.0
        %673 = vmatpush1.xpose.msra.mxu0 0.0
        %674 = vmatprep.subr.mxu0 0.0
        %675 = vmatpush1.xpose.msra.mxu0 0.0
        %676 = vmatprep.subr.mxu0 0.0
        %677 = vmatpush1.xpose.msra.mxu0 0.0
        %678 = vmatprep.subr.mxu0 0.0
        %679 = vmatpush1.xpose.msra.mxu0 0.0
        %680 = vmatprep.subr.mxu0 0.0
        %681 = vmatpush1.xpose.msra.mxu0 0.0
        %682 = vmatprep.subr.mxu0 0.0
        %683 = vmatpush1.xpose.msra.mxu0 0.0
        %684 = vmatprep.subr.mxu0 0.0
        %685 = vmatpush1.xpose.msra.mxu0 0.0
        %686 = vmatprep.subr.mxu0 0.0
        %687 = vmatpush1.xpose.msra.mxu0 0.0
        %688 = vmatprep.subr.mxu0 0.0
        %689 = vmatpush1.xpose.msra.mxu0 0.0
        %690 = vmatprep.subr.mxu0 0.0
        %691 = vmatpush1.xpose.msra.mxu0 0.0
        %692 = vmatprep.subr.mxu0 0.0
        %693 = vmatpush1.xpose.msra.mxu0 0.0
        %694 = vmatprep.subr.mxu0 0.0
        %695 = vmatpush1.xpose.msra.mxu0 %v662
        %696 = vmatprep.subr.mxu0 0.0
        %697 = vmatpush2.xpose.msra.mxu0 0.0
        %698 = vmatprep.subr.mxu0 0.0
        %699 = vmatpush2.xpose.msra.mxu0 0.0
        %700 = vmatprep.subr.mxu0 0.0
        %701 = vmatpush2.xpose.msra.mxu0 0.0
        %702 = vmatprep.subr.mxu0 0.0
        %703 = vmatpush2.xpose.msra.mxu0 0.0
        %704 = vmatprep.subr.mxu0 0.0
        %705 = vmatpush2.xpose.msra.mxu0 0.0
        %706 = vmatprep.subr.mxu0 0.0
        %707 = vmatpush2.xpose.msra.mxu0 0.0
        %708 = vmatprep.subr.mxu0 0.0
        %709 = vmatpush2.xpose.msra.mxu0 0.0
        %710 = vmatprep.subr.mxu0 0.0
        %711 = vmatpush2.xpose.msra.mxu0 0.0
        %712 = vmatprep.subr.mxu0 0.0
        %713 = vmatpush2.xpose.msra.mxu0 0.0
        %714 = vmatprep.subr.mxu0 0.0
        %715 = vmatpush2.xpose.msra.mxu0 0.0
        %716 = vmatprep.subr.mxu0 0.0
        %717 = vmatpush2.xpose.msra.mxu0 0.0
        %718 = vmatprep.subr.mxu0 0.0
        %719 = vmatpush2.xpose.msra.mxu0 0.0
        %720 = vmatprep.subr.mxu0 0.0
        %721 = vmatpush2.xpose.msra.mxu0 0.0
        %722 = vmatprep.subr.mxu0 0.0
        %723 = vmatpush2.xpose.msra.mxu0 0.0
        %724 = vmatprep.subr.mxu0 0.0
        %725 = vmatpush2.xpose.msra.mxu0 0.0
        %726 = vmatprep.subr.mxu0 0.0
        %727 = vmatpush2.xpose.msra.mxu0 0.0
        %728 = vmatprep.mubr.f32.mxu0 0.0
        %729 = vmatmul.mubr.f32.gmra.mxu0 %v660
        %v730 = vpop.f32.mrf.mxu0
        %v731 = vadd.f32 0.0, %v730
        %v732 = vpop.f32.mrf.mxu0
        %733 = vdwg.mxu0
        %v734 = vsel %vm496, %v731, -inf
        %735 = vmax.xlane.f32.xlu0 %v734
        %v736 = vpop.xlane.xlu0 %735
        %v737 = vsub.f32 %v731, %v736
        %v738 = vmul.f32 %v737, 1.442695
        %v739 = vpow.pop %v738
        %v740 = vsel %vm496, %v739, 0.0
        %741 = vadd.xlane.f32.xlu0 %v740
        %v742 = vpop.xlane.xlu0 %741
        %v743 = vrcp.pop %v742
        %v744 = vmul.f32 %v739, %v743
        %746 = vrot.lane.b32.xlu0 %v487, 120
        %v747 = vpop.permute.xlu0 %746
        %v750 = vsel %vm496, %v744, 0
        %752 = vmatprep.subr.mxu0 0.0
        %753 = vmatpush1.msra.mxu0 0.0
        %754 = vmatprep.subr.mxu0 0.0
        %755 = vmatpush1.msra.mxu0 0.0
        %756 = vmatprep.subr.mxu0 0.0
        %757 = vmatpush1.msra.mxu0 0.0
        %758 = vmatprep.subr.mxu0 0.0
        %759 = vmatpush1.msra.mxu0 0.0
        %760 = vmatprep.subr.mxu0 0.0
        %761 = vmatpush1.msra.mxu0 0.0
        %762 = vmatprep.subr.mxu0 0.0
        %763 = vmatpush1.msra.mxu0 0.0
        %764 = vmatprep.subr.mxu0 0.0
        %765 = vmatpush1.msra.mxu0 0.0
        %766 = vmatprep.subr.mxu0 0.0
        %767 = vmatpush1.msra.mxu0 0.0
        %768 = vmatprep.subr.mxu0 0.0
        %769 = vmatpush1.msra.mxu0 0.0
        %770 = vmatprep.subr.mxu0 0.0
        %771 = vmatpush1.msra.mxu0 0.0
        %772 = vmatprep.subr.mxu0 0.0
        %773 = vmatpush1.msra.mxu0 0.0
        %774 = vmatprep.subr.mxu0 0.0
        %775 = vmatpush1.msra.mxu0 0.0
        %776 = vmatprep.subr.mxu0 0.0
        %777 = vmatpush1.msra.mxu0 0.0
        %778 = vmatprep.subr.mxu0 0.0
        %779 = vmatpush1.msra.mxu0 0.0
        %780 = vmatprep.subr.mxu0 0.0
        %781 = vmatpush1.msra.mxu0 0.0
        %782 = vmatprep.subr.mxu0 0.0
        %783 = vmatpush1.msra.mxu0 %v747
        %784 = vmatprep.subr.mxu0 0.0
        %785 = vmatpush2.msra.mxu0 0.0
        %786 = vmatprep.subr.mxu0 0.0
        %787 = vmatpush2.msra.mxu0 0.0
        %788 = vmatprep.subr.mxu0 0.0
        %789 = vmatpush2.msra.mxu0 0.0
        %790 = vmatprep.subr.mxu0 0.0
        %791 = vmatpush2.msra.mxu0 0.0
        %792 = vmatprep.subr.mxu0 0.0
        %793 = vmatpush2.msra.mxu0 0.0
        %794 = vmatprep.subr.mxu0 0.0
        %795 = vmatpush2.msra.mxu0 0.0
        %796 = vmatprep.subr.mxu0 0.0
        %797 = vmatpush2.msra.mxu0 0.0
        %798 = vmatprep.subr.mxu0 0.0
        %799 = vmatpush2.msra.mxu0 0.0
        %800 = vmatprep.subr.mxu0 0.0
        %801 = vmatpush2.msra.mxu0 0.0
        %802 = vmatprep.subr.mxu0 0.0
        %803 = vmatpush2.msra.mxu0 0.0
        %804 = vmatprep.subr.mxu0 0.0
        %805 = vmatpush2.msra.mxu0 0.0
        %806 = vmatprep.subr.mxu0 0.0
        %807 = vmatpush2.msra.mxu0 0.0
        %808 = vmatprep.subr.mxu0 0.0
        %809 = vmatpush2.msra.mxu0 0.0
        %810 = vmatprep.subr.mxu0 0.0
        %811 = vmatpush2.msra.mxu0 0.0
        %812 = vmatprep.subr.mxu0 0.0
        %813 = vmatpush2.msra.mxu0 0.0
        %814 = vmatprep.subr.mxu0 0.0
        %815 = vmatpush2.msra.mxu0 0.0
        %816 = vmatprep.mubr.f32.mxu0 0.0
        %817 = vmatmul.mubr.f32.gmra.mxu0 %v750
        %v818 = vpop.f32.mrf.mxu0
        %v819 = vadd.f32 0.0, %v818
        %v820 = vpop.f32.mrf.mxu0
        %821 = vdwg.mxu0
        %822 = vrot.lane.b32.xlu0 %v492, 112
        %v823 = vpop.permute.xlu0 %822
        %824 = vrot.lane.b32.xlu0 %v394, 80
        %v825 = vpop.permute.xlu0 %824
        %v826 = vsel %vm496, %v823, 0
        %v828 = vsel %vm496, %v825, 0
        %830 = vmatprep.subr.mxu0 0.0
        %831 = vmatpush1.xpose.msra.mxu0 0.0
        %832 = vmatprep.subr.mxu0 0.0
        %833 = vmatpush1.xpose.msra.mxu0 0.0
        %834 = vmatprep.subr.mxu0 0.0
        %835 = vmatpush1.xpose.msra.mxu0 0.0
        %836 = vmatprep.subr.mxu0 0.0
        %837 = vmatpush1.xpose.msra.mxu0 0.0
        %838 = vmatprep.subr.mxu0 0.0
        %839 = vmatpush1.xpose.msra.mxu0 0.0
        %840 = vmatprep.subr.mxu0 0.0
        %841 = vmatpush1.xpose.msra.mxu0 0.0
        %842 = vmatprep.subr.mxu0 0.0
        %843 = vmatpush1.xpose.msra.mxu0 0.0
        %844 = vmatprep.subr.mxu0 0.0
        %845 = vmatpush1.xpose.msra.mxu0 0.0
        %846 = vmatprep.subr.mxu0 0.0
        %847 = vmatpush1.xpose.msra.mxu0 0.0
        %848 = vmatprep.subr.mxu0 0.0
        %849 = vmatpush1.xpose.msra.mxu0 0.0
        %850 = vmatprep.subr.mxu0 0.0
        %851 = vmatpush1.xpose.msra.mxu0 0.0
        %852 = vmatprep.subr.mxu0 0.0
        %853 = vmatpush1.xpose.msra.mxu0 0.0
        %854 = vmatprep.subr.mxu0 0.0
        %855 = vmatpush1.xpose.msra.mxu0 0.0
        %856 = vmatprep.subr.mxu0 0.0
        %857 = vmatpush1.xpose.msra.mxu0 0.0
        %858 = vmatprep.subr.mxu0 0.0
        %859 = vmatpush1.xpose.msra.mxu0 0.0
        %860 = vmatprep.subr.mxu0 0.0
        %861 = vmatpush1.xpose.msra.mxu0 %v828
        %862 = vmatprep.subr.mxu0 0.0
        %863 = vmatpush2.xpose.msra.mxu0 0.0
        %864 = vmatprep.subr.mxu0 0.0
        %865 = vmatpush2.xpose.msra.mxu0 0.0
        %866 = vmatprep.subr.mxu0 0.0
        %867 = vmatpush2.xpose.msra.mxu0 0.0
        %868 = vmatprep.subr.mxu0 0.0
        %869 = vmatpush2.xpose.msra.mxu0 0.0
        %870 = vmatprep.subr.mxu0 0.0
        %871 = vmatpush2.xpose.msra.mxu0 0.0
        %872 = vmatprep.subr.mxu0 0.0
        %873 = vmatpush2.xpose.msra.mxu0 0.0
        %874 = vmatprep.subr.mxu0 0.0
        %875 = vmatpush2.xpose.msra.mxu0 0.0
        %876 = vmatprep.subr.mxu0 0.0
        %877 = vmatpush2.xpose.msra.mxu0 0.0
        %878 = vmatprep.subr.mxu0 0.0
        %879 = vmatpush2.xpose.msra.mxu0 0.0
        %880 = vmatprep.subr.mxu0 0.0
        %881 = vmatpush2.xpose.msra.mxu0 0.0
        %882 = vmatprep.subr.mxu0 0.0
        %883 = vmatpush2.xpose.msra.mxu0 0.0
        %884 = vmatprep.subr.mxu0 0.0
        %885 = vmatpush2.xpose.msra.mxu0 0.0
        %886 = vmatprep.subr.mxu0 0.0
        %887 = vmatpush2.xpose.msra.mxu0 0.0
        %888 = vmatprep.subr.mxu0 0.0
        %889 = vmatpush2.xpose.msra.mxu0 0.0
        %890 = vmatprep.subr.mxu0 0.0
        %891 = vmatpush2.xpose.msra.mxu0 0.0
        %892 = vmatprep.subr.mxu0 0.0
        %893 = vmatpush2.xpose.msra.mxu0 0.0
        %894 = vmatprep.mubr.f32.mxu0 0.0
        %895 = vmatmul.mubr.f32.gmra.mxu0 %v826
        %v896 = vpop.f32.mrf.mxu0
        %v897 = vadd.f32 0.0, %v896
        %v898 = vpop.f32.mrf.mxu0
        %899 = vdwg.mxu0
        %v900 = vsel %vm496, %v897, -inf
        %901 = vmax.xlane.f32.xlu0 %v900
        %v902 = vpop.xlane.xlu0 %901
        %v903 = vsub.f32 %v897, %v902
        %v904 = vmul.f32 %v903, 1.442695
        %v905 = vpow.pop %v904
        %v906 = vsel %vm496, %v905, 0.0
        %907 = vadd.xlane.f32.xlu0 %v906
        %v908 = vpop.xlane.xlu0 %907
        %v909 = vrcp.pop %v908
        %v910 = vmul.f32 %v905, %v909
        %911 = vrot.lane.b32.xlu0 %v487, 112
        %v912 = vpop.permute.xlu0 %911
        %v915 = vsel %vm496, %v910, 0
        %917 = vmatprep.subr.mxu0 0.0
        %918 = vmatpush1.msra.mxu0 0.0
        %919 = vmatprep.subr.mxu0 0.0
        %920 = vmatpush1.msra.mxu0 0.0
        %921 = vmatprep.subr.mxu0 0.0
        %922 = vmatpush1.msra.mxu0 0.0
        %923 = vmatprep.subr.mxu0 0.0
        %924 = vmatpush1.msra.mxu0 0.0
        %925 = vmatprep.subr.mxu0 0.0
        %926 = vmatpush1.msra.mxu0 0.0
        %927 = vmatprep.subr.mxu0 0.0
        %928 = vmatpush1.msra.mxu0 0.0
        %929 = vmatprep.subr.mxu0 0.0
        %930 = vmatpush1.msra.mxu0 0.0
        %931 = vmatprep.subr.mxu0 0.0
        %932 = vmatpush1.msra.mxu0 0.0
        %933 = vmatprep.subr.mxu0 0.0
        %934 = vmatpush1.msra.mxu0 0.0
        %935 = vmatprep.subr.mxu0 0.0
        %936 = vmatpush1.msra.mxu0 0.0
        %937 = vmatprep.subr.mxu0 0.0
        %938 = vmatpush1.msra.mxu0 0.0
        %939 = vmatprep.subr.mxu0 0.0
        %940 = vmatpush1.msra.mxu0 0.0
        %941 = vmatprep.subr.mxu0 0.0
        %942 = vmatpush1.msra.mxu0 0.0
        %943 = vmatprep.subr.mxu0 0.0
        %944 = vmatpush1.msra.mxu0 0.0
        %945 = vmatprep.subr.mxu0 0.0
        %946 = vmatpush1.msra.mxu0 0.0
        %947 = vmatprep.subr.mxu0 0.0
        %948 = vmatpush1.msra.mxu0 %v912
        %949 = vmatprep.subr.mxu0 0.0
        %950 = vmatpush2.msra.mxu0 0.0
        %951 = vmatprep.subr.mxu0 0.0
        %952 = vmatpush2.msra.mxu0 0.0
        %953 = vmatprep.subr.mxu0 0.0
        %954 = vmatpush2.msra.mxu0 0.0
        %955 = vmatprep.subr.mxu0 0.0
        %956 = vmatpush2.msra.mxu0 0.0
        %957 = vmatprep.subr.mxu0 0.0
        %958 = vmatpush2.msra.mxu0 0.0
        %959 = vmatprep.subr.mxu0 0.0
        %960 = vmatpush2.msra.mxu0 0.0
        %961 = vmatprep.subr.mxu0 0.0
        %962 = vmatpush2.msra.mxu0 0.0
        %963 = vmatprep.subr.mxu0 0.0
        %964 = vmatpush2.msra.mxu0 0.0
        %965 = vmatprep.subr.mxu0 0.0
        %966 = vmatpush2.msra.mxu0 0.0
        %967 = vmatprep.subr.mxu0 0.0
        %968 = vmatpush2.msra.mxu0 0.0
        %969 = vmatprep.subr.mxu0 0.0
        %970 = vmatpush2.msra.mxu0 0.0
        %971 = vmatprep.subr.mxu0 0.0
        %972 = vmatpush2.msra.mxu0 0.0
        %973 = vmatprep.subr.mxu0 0.0
        %974 = vmatpush2.msra.mxu0 0.0
        %975 = vmatprep.subr.mxu0 0.0
        %976 = vmatpush2.msra.mxu0 0.0
        %977 = vmatprep.subr.mxu0 0.0
        %978 = vmatpush2.msra.mxu0 0.0
        %979 = vmatprep.subr.mxu0 0.0
        %980 = vmatpush2.msra.mxu0 0.0
        %981 = vmatprep.mubr.f32.mxu0 0.0
        %982 = vmatmul.mubr.f32.gmra.mxu0 %v915
        %v983 = vpop.f32.mrf.mxu0
        %v984 = vadd.f32 0.0, %v983
        %v985 = vpop.f32.mrf.mxu0
        %986 = vdwg.mxu0
        %987 = vrot.lane.b32.xlu0 %v492, 104
        %v988 = vpop.permute.xlu0 %987
        %989 = vrot.lane.b32.xlu0 %v394, 72
        %v990 = vpop.permute.xlu0 %989
        %v991 = vsel %vm496, %v988, 0
        %v993 = vsel %vm496, %v990, 0
        %995 = vmatprep.subr.mxu0 0.0
        %996 = vmatpush1.xpose.msra.mxu0 0.0
        %997 = vmatprep.subr.mxu0 0.0
        %998 = vmatpush1.xpose.msra.mxu0 0.0
        %999 = vmatprep.subr.mxu0 0.0
        %1000 = vmatpush1.xpose.msra.mxu0 0.0
        %1001 = vmatprep.subr.mxu0 0.0
        %1002 = vmatpush1.xpose.msra.mxu0 0.0
        %1003 = vmatprep.subr.mxu0 0.0
        %1004 = vmatpush1.xpose.msra.mxu0 0.0
        %1005 = vmatprep.subr.mxu0 0.0
        %1006 = vmatpush1.xpose.msra.mxu0 0.0
        %1007 = vmatprep.subr.mxu0 0.0
        %1008 = vmatpush1.xpose.msra.mxu0 0.0
        %1009 = vmatprep.subr.mxu0 0.0
        %1010 = vmatpush1.xpose.msra.mxu0 0.0
        %1011 = vmatprep.subr.mxu0 0.0
        %1012 = vmatpush1.xpose.msra.mxu0 0.0
        %1013 = vmatprep.subr.mxu0 0.0
        %1014 = vmatpush1.xpose.msra.mxu0 0.0
        %1015 = vmatprep.subr.mxu0 0.0
        %1016 = vmatpush1.xpose.msra.mxu0 0.0
        %1017 = vmatprep.subr.mxu0 0.0
        %1018 = vmatpush1.xpose.msra.mxu0 0.0
        %1019 = vmatprep.subr.mxu0 0.0
        %1020 = vmatpush1.xpose.msra.mxu0 0.0
        %1021 = vmatprep.subr.mxu0 0.0
        %1022 = vmatpush1.xpose.msra.mxu0 0.0
        %1023 = vmatprep.subr.mxu0 0.0
        %1024 = vmatpush1.xpose.msra.mxu0 0.0
        %1025 = vmatprep.subr.mxu0 0.0
        %1026 = vmatpush1.xpose.msra.mxu0 %v993
        %1027 = vmatprep.subr.mxu0 0.0
        %1028 = vmatpush2.xpose.msra.mxu0 0.0
        %1029 = vmatprep.subr.mxu0 0.0
        %1030 = vmatpush2.xpose.msra.mxu0 0.0
        %1031 = vmatprep.subr.mxu0 0.0
        %1032 = vmatpush2.xpose.msra.mxu0 0.0
        %1033 = vmatprep.subr.mxu0 0.0
        %1034 = vmatpush2.xpose.msra.mxu0 0.0
        %1035 = vmatprep.subr.mxu0 0.0
        %1036 = vmatpush2.xpose.msra.mxu0 0.0
        %1037 = vmatprep.subr.mxu0 0.0
        %1038 = vmatpush2.xpose.msra.mxu0 0.0
        %1039 = vmatprep.subr.mxu0 0.0
        %1040 = vmatpush2.xpose.msra.mxu0 0.0
        %1041 = vmatprep.subr.mxu0 0.0
        %1042 = vmatpush2.xpose.msra.mxu0 0.0
        %1043 = vmatprep.subr.mxu0 0.0
        %1044 = vmatpush2.xpose.msra.mxu0 0.0
        %1045 = vmatprep.subr.mxu0 0.0
        %1046 = vmatpush2.xpose.msra.mxu0 0.0
        %1047 = vmatprep.subr.mxu0 0.0
        %1048 = vmatpush2.xpose.msra.mxu0 0.0
        %1049 = vmatprep.subr.mxu0 0.0
        %1050 = vmatpush2.xpose.msra.mxu0 0.0
        %1051 = vmatprep.subr.mxu0 0.0
        %1052 = vmatpush2.xpose.msra.mxu0 0.0
        %1053 = vmatprep.subr.mxu0 0.0
        %1054 = vmatpush2.xpose.msra.mxu0 0.0
        %1055 = vmatprep.subr.mxu0 0.0
        %1056 = vmatpush2.xpose.msra.mxu0 0.0
        %1057 = vmatprep.subr.mxu0 0.0
        %1058 = vmatpush2.xpose.msra.mxu0 0.0
        %1059 = vmatprep.mubr.f32.mxu0 0.0
        %1060 = vmatmul.mubr.f32.gmra.mxu0 %v991
        %v1061 = vpop.f32.mrf.mxu0
        %v1062 = vadd.f32 0.0, %v1061
        %v1063 = vpop.f32.mrf.mxu0
        %1064 = vdwg.mxu0
        %v1065 = vsel %vm496, %v1062, -inf
        %1066 = vmax.xlane.f32.xlu0 %v1065
        %v1067 = vpop.xlane.xlu0 %1066
        %v1068 = vsub.f32 %v1062, %v1067
        %v1069 = vmul.f32 %v1068, 1.442695
        %v1070 = vpow.pop %v1069
        %v1071 = vsel %vm496, %v1070, 0.0
        %1072 = vadd.xlane.f32.xlu0 %v1071
        %v1073 = vpop.xlane.xlu0 %1072
        %v1074 = vrcp.pop %v1073
        %v1075 = vmul.f32 %v1070, %v1074
        %1076 = vrot.lane.b32.xlu0 %v487, 104
        %v1077 = vpop.permute.xlu0 %1076
        %v1080 = vsel %vm496, %v1075, 0
        %1082 = vmatprep.subr.mxu0 0.0
        %1083 = vmatpush1.msra.mxu0 0.0
        %1084 = vmatprep.subr.mxu0 0.0
        %1085 = vmatpush1.msra.mxu0 0.0
        %1086 = vmatprep.subr.mxu0 0.0
        %1087 = vmatpush1.msra.mxu0 0.0
        %1088 = vmatprep.subr.mxu0 0.0
        %1089 = vmatpush1.msra.mxu0 0.0
        %1090 = vmatprep.subr.mxu0 0.0
        %1091 = vmatpush1.msra.mxu0 0.0
        %1092 = vmatprep.subr.mxu0 0.0
        %1093 = vmatpush1.msra.mxu0 0.0
        %1094 = vmatprep.subr.mxu0 0.0
        %1095 = vmatpush1.msra.mxu0 0.0
        %1096 = vmatprep.subr.mxu0 0.0
        %1097 = vmatpush1.msra.mxu0 0.0
        %1098 = vmatprep.subr.mxu0 0.0
        %1099 = vmatpush1.msra.mxu0 0.0
        %1100 = vmatprep.subr.mxu0 0.0
        %1101 = vmatpush1.msra.mxu0 0.0
        %1102 = vmatprep.subr.mxu0 0.0
        %1103 = vmatpush1.msra.mxu0 0.0
        %1104 = vmatprep.subr.mxu0 0.0
        %1105 = vmatpush1.msra.mxu0 0.0
        %1106 = vmatprep.subr.mxu0 0.0
        %1107 = vmatpush1.msra.mxu0 0.0
        %1108 = vmatprep.subr.mxu0 0.0
        %1109 = vmatpush1.msra.mxu0 0.0
        %1110 = vmatprep.subr.mxu0 0.0
        %1111 = vmatpush1.msra.mxu0 0.0
        %1112 = vmatprep.subr.mxu0 0.0
        %1113 = vmatpush1.msra.mxu0 %v1077
        %1114 = vmatprep.subr.mxu0 0.0
        %1115 = vmatpush2.msra.mxu0 0.0
        %1116 = vmatprep.subr.mxu0 0.0
        %1117 = vmatpush2.msra.mxu0 0.0
        %1118 = vmatprep.subr.mxu0 0.0
        %1119 = vmatpush2.msra.mxu0 0.0
        %1120 = vmatprep.subr.mxu0 0.0
        %1121 = vmatpush2.msra.mxu0 0.0
        %1122 = vmatprep.subr.mxu0 0.0
        %1123 = vmatpush2.msra.mxu0 0.0
        %1124 = vmatprep.subr.mxu0 0.0
        %1125 = vmatpush2.msra.mxu0 0.0
        %1126 = vmatprep.subr.mxu0 0.0
        %1127 = vmatpush2.msra.mxu0 0.0
        %1128 = vmatprep.subr.mxu0 0.0
        %1129 = vmatpush2.msra.mxu0 0.0
        %1130 = vmatprep.subr.mxu0 0.0
        %1131 = vmatpush2.msra.mxu0 0.0
        %1132 = vmatprep.subr.mxu0 0.0
        %1133 = vmatpush2.msra.mxu0 0.0
        %1134 = vmatprep.subr.mxu0 0.0
        %1135 = vmatpush2.msra.mxu0 0.0
        %1136 = vmatprep.subr.mxu0 0.0
        %1137 = vmatpush2.msra.mxu0 0.0
        %1138 = vmatprep.subr.mxu0 0.0
        %1139 = vmatpush2.msra.mxu0 0.0
        %1140 = vmatprep.subr.mxu0 0.0
        %1141 = vmatpush2.msra.mxu0 0.0
        %1142 = vmatprep.subr.mxu0 0.0
        %1143 = vmatpush2.msra.mxu0 0.0
        %1144 = vmatprep.subr.mxu0 0.0
        %1145 = vmatpush2.msra.mxu0 0.0
        %1146 = vmatprep.mubr.f32.mxu0 0.0
        %1147 = vmatmul.mubr.f32.gmra.mxu0 %v1080
        %v1148 = vpop.f32.mrf.mxu0
        %v1149 = vadd.f32 0.0, %v1148
        %v1150 = vpop.f32.mrf.mxu0
        %1151 = vdwg.mxu0
        %1153 = vrot.lane.b32.xlu0 %v819, 8
        %v1154 = vpop.permute.xlu0 %1153
        %1157 = vrot.lane.b32.xlu0 %v984, 16
        %v1158 = vpop.permute.xlu0 %1157
        %1161 = vrot.lane.b32.xlu0 %v1149, 24
        %v1162 = vpop.permute.xlu0 %1161
        %v1164 = vsel %vm496, %v653, %v1154
        %vm1165 = vcmask 130048
        %v1166 = vsel %vm1165, %v1164, %v1158
        %vm1167 = vcmask 195584
        %v1168 = vsel %vm1167, %v1166, %v1162
        %v1169 = vpack.c.bf16 %v1168, %v1168
        %v1170 = vlaneseq
        %v1171 = vshrl.u32 %v1170, 7
        %v1172 = vsub.s32 0, %v1171
        %v1173 = vrot.slane %v298, %v1172
        %v1178 = vunpack.c.l.b16 %v292
        %v1179 = vunpack.c.l.b16 %v293
        %v1180 = vunpack.c.l.b16 %v294
        %v1181 = vunpack.c.l.b16 %v295
        %v1182 = vpack.c.b16 %v1179, %v1178
        %v1183 = vpack.c.b16 %v1181, %v1180
        %vm1186 = vcmask 261120
        %v1188 = vsel %vm1186, %v1169, 0
        %1190 = vmatprep.subr.bf16.mxu0 0
        %1191 = vmatpush1.bf16.msra.mxu0 0
        %1192 = vmatprep.subr.bf16.mxu0 0
        %1193 = vmatpush1.bf16.msra.mxu0 0
        %1194 = vmatprep.subr.bf16.mxu0 0
        %1195 = vmatpush1.bf16.msra.mxu0 0
        %1196 = vmatprep.subr.bf16.mxu0 0
        %1197 = vmatpush1.bf16.msra.mxu0 0
        %1198 = vmatprep.subr.bf16.mxu0 0
        %1199 = vmatpush1.bf16.msra.mxu0 0
        %1200 = vmatprep.subr.bf16.mxu0 0
        %1201 = vmatpush1.bf16.msra.mxu0 0
        %1202 = vmatprep.subr.bf16.mxu0 0
        %1203 = vmatpush1.bf16.msra.mxu0 %v1183
        %1204 = vmatprep.subr.bf16.mxu0 0
        %1205 = vmatpush1.bf16.msra.mxu0 %v1182
        %1206 = vmatprep.subr.bf16.mxu0 0
        %1207 = vmatpush2.bf16.msra.mxu0 0
        %1208 = vmatprep.subr.bf16.mxu0 0
        %1209 = vmatpush2.bf16.msra.mxu0 0
        %1210 = vmatprep.subr.bf16.mxu0 0
        %1211 = vmatpush2.bf16.msra.mxu0 0
        %1212 = vmatprep.subr.bf16.mxu0 0
        %1213 = vmatpush2.bf16.msra.mxu0 0
        %1214 = vmatprep.subr.bf16.mxu0 0
        %1215 = vmatpush2.bf16.msra.mxu0 0
        %1216 = vmatprep.subr.bf16.mxu0 0
        %1217 = vmatpush2.bf16.msra.mxu0 0
        %1218 = vmatprep.subr.bf16.mxu0 0
        %1219 = vmatpush2.bf16.msra.mxu0 0
        %1220 = vmatprep.subr.bf16.mxu0 0
        %1221 = vmatpush2.bf16.msra.mxu0 0
        %1222 = vmatprep.mubr.bf16.mxu0 0
        %1223 = vmatmul.mubr.bf16.gmra.mxu0 %v1188
        %v1224 = vpop.f32.mrf.mxu0
        %v1225 = vadd.f32 %v1173, %v1224
        %v1226 = vpop.f32.mrf.mxu0
        %v1227 = vpop.f32.mrf.mxu0
        %v1228 = vpop.f32.mrf.mxu0
        %1229 = vdwg.mxu0
        %v1230 = vadd.f32 %v226, %v1225
        %1231 = vadd.xlane.f32.xlu0 %v1230
        %v1232 = vpop.xlane.xlu0 %1231
        %v1233 = vmul.f32 %v1232, 0.03125
        %v1234 = vmul.f32 %v1230, %v1230
        %1235 = vadd.xlane.f32.xlu0 %v1234
        %v1236 = vpop.xlane.xlu0 %1235
        %v1237 = vmul.f32 %v1236, 0.03125
        %v1238 = vmul.f32 %v1233, %v1233
        %v1239 = vsub.f32 %v1237, %v1238
        %v1240 = vsub.f32 %v1230, %v1233
        %v1241 = vadd.f32 %v1239, 1e-05
        %v1242 = vrsqrt.pop %v1241
        %v1243 = vmul.f32 %v1240, %v1242
        %v1244 = vlaneseq
        %v1245 = vshrl.u32 %v1244, 7
        %v1246 = vsub.s32 0, %v1245
        %v1247 = vrot.slane %v301, %v1246
        %v1248 = vmul.f32 %v1243, %v1247
        %v1249 = vlaneseq
        %v1250 = vshrl.u32 %v1249, 7
        %v1251 = vsub.s32 0, %v1250
        %v1252 = vrot.slane %v302, %v1251
        %v1253 = vadd.f32 %v1248, %v1252
        %v1254 = vpack.c.bf16 %v1253, %v1253
        %v1255 = vlaneseq
        %v1256 = vshrl.u32 %v1255, 7
        %v1257 = vsub.s32 0, %v1256
        %v1258 = vrot.slane %v299, %v1257
        %v1275 = vunpack.c.l.b16 %v260
        %v1276 = vunpack.c.l.b16 %v261
        %v1277 = vunpack.c.l.b16 %v262
        %v1278 = vunpack.c.l.b16 %v263
        %v1279 = vunpack.c.l.b16 %v264
        %v1280 = vunpack.c.l.b16 %v265
        %v1281 = vunpack.c.l.b16 %v266
        %v1282 = vunpack.c.l.b16 %v267
        %v1283 = vunpack.c.l.b16 %v268
        %v1284 = vunpack.c.l.b16 %v269
        %v1285 = vunpack.c.l.b16 %v270
        %v1286 = vunpack.c.l.b16 %v271
        %v1287 = vunpack.c.l.b16 %v272
        %v1288 = vunpack.c.l.b16 %v273
        %v1289 = vunpack.c.l.b16 %v274
        %v1290 = vunpack.c.l.b16 %v275
        %v1291 = vpack.c.b16 %v1276, %v1275
        %v1292 = vpack.c.b16 %v1278, %v1277
        %v1293 = vpack.c.b16 %v1280, %v1279
        %v1294 = vpack.c.b16 %v1282, %v1281
        %v1295 = vpack.c.b16 %v1284, %v1283
        %v1296 = vpack.c.b16 %v1286, %v1285
        %v1297 = vpack.c.b16 %v1288, %v1287
        %v1298 = vpack.c.b16 %v1290, %v1289
        %1307 = vmatprep.subr.bf16.mxu0 0
        %1308 = vmatpush1.bf16.msra.mxu0 %v1298
        %1309 = vmatprep.subr.bf16.mxu0 0
        %1310 = vmatpush1.bf16.msra.mxu0 %v1297
        %1311 = vmatprep.subr.bf16.mxu0 0
        %1312 = vmatpush1.bf16.msra.mxu0 %v1296
        %1313 = vmatprep.subr.bf16.mxu0 0
        %1314 = vmatpush1.bf16.msra.mxu0 %v1295
        %1315 = vmatprep.subr.bf16.mxu0 0
        %1316 = vmatpush1.bf16.msra.mxu0 %v1294
        %1317 = vmatprep.subr.bf16.mxu0 0
        %1318 = vmatpush1.bf16.msra.mxu0 %v1293
        %1319 = vmatprep.subr.bf16.mxu0 0
        %1320 = vmatpush1.bf16.msra.mxu0 %v1292
        %1321 = vmatprep.subr.bf16.mxu0 0
        %1322 = vmatpush1.bf16.msra.mxu0 %v1291
        %1323 = vmatprep.subr.bf16.mxu0 0
        %1324 = vmatpush2.bf16.msra.mxu0 0
        %1325 = vmatprep.subr.bf16.mxu0 0
        %1326 = vmatpush2.bf16.msra.mxu0 0
        %1327 = vmatprep.subr.bf16.mxu0 0
        %1328 = vmatpush2.bf16.msra.mxu0 0
        %1329 = vmatprep.subr.bf16.mxu0 0
        %1330 = vmatpush2.bf16.msra.mxu0 0
        %1331 = vmatprep.subr.bf16.mxu0 0
        %1332 = vmatpush2.bf16.msra.mxu0 0
        %1333 = vmatprep.subr.bf16.mxu0 0
        %1334 = vmatpush2.bf16.msra.mxu0 0
        %1335 = vmatprep.subr.bf16.mxu0 0
        %1336 = vmatpush2.bf16.msra.mxu0 0
        %1337 = vmatprep.subr.bf16.mxu0 0
        %1338 = vmatpush2.bf16.msra.mxu0 0
        %1339 = vmatprep.mubr.bf16.mxu0 0
        %1340 = vmatmul.mubr.bf16.gmra.mxu0 %v1254
        %v1341 = vpop.f32.mrf.mxu0
        %v1342 = vadd.f32 %v1258, %v1341
        %v1343 = vpop.f32.mrf.mxu0
        %v1344 = vpop.f32.mrf.mxu0
        %v1345 = vpop.f32.mrf.mxu0
        %1346 = vdwg.mxu0
        %v1347 = vmax.f32 %v1342, 0.0
        %v1348 = vpack.c.bf16 %v1347, %v1347
        %v1349 = vlaneseq
        %v1350 = vshrl.u32 %v1349, 7
        %v1351 = vsub.s32 0, %v1350
        %v1352 = vrot.slane %v300, %v1351
        %v1369 = vunpack.c.l.b16 %v276
        %v1370 = vunpack.c.l.b16 %v277
        %v1371 = vunpack.c.l.b16 %v278
        %v1372 = vunpack.c.l.b16 %v279
        %v1373 = vunpack.c.l.b16 %v280
        %v1374 = vunpack.c.l.b16 %v281
        %v1375 = vunpack.c.l.b16 %v282
        %v1376 = vunpack.c.l.b16 %v283
        %v1377 = vunpack.c.l.b16 %v284
        %v1378 = vunpack.c.l.b16 %v285
        %v1379 = vunpack.c.l.b16 %v286
        %v1380 = vunpack.c.l.b16 %v287
        %v1381 = vunpack.c.l.b16 %v288
        %v1382 = vunpack.c.l.b16 %v289
        %v1383 = vunpack.c.l.b16 %v290
        %v1384 = vunpack.c.l.b16 %v291
        %v1385 = vpack.c.b16 %v1370, %v1369
        %v1386 = vpack.c.b16 %v1372, %v1371
        %v1387 = vpack.c.b16 %v1374, %v1373
        %v1388 = vpack.c.b16 %v1376, %v1375
        %v1389 = vpack.c.b16 %v1378, %v1377
        %v1390 = vpack.c.b16 %v1380, %v1379
        %v1391 = vpack.c.b16 %v1382, %v1381
        %v1392 = vpack.c.b16 %v1384, %v1383
        %1401 = vmatprep.subr.bf16.mxu0 0
        %1402 = vmatpush1.bf16.msra.mxu0 %v1392
        %1403 = vmatprep.subr.bf16.mxu0 0
        %1404 = vmatpush1.bf16.msra.mxu0 %v1391
        %1405 = vmatprep.subr.bf16.mxu0 0
        %1406 = vmatpush1.bf16.msra.mxu0 %v1390
        %1407 = vmatprep.subr.bf16.mxu0 0
        %1408 = vmatpush1.bf16.msra.mxu0 %v1389
        %1409 = vmatprep.subr.bf16.mxu0 0
        %1410 = vmatpush1.bf16.msra.mxu0 %v1388
        %1411 = vmatprep.subr.bf16.mxu0 0
        %1412 = vmatpush1.bf16.msra.mxu0 %v1387
        %1413 = vmatprep.subr.bf16.mxu0 0
        %1414 = vmatpush1.bf16.msra.mxu0 %v1386
        %1415 = vmatprep.subr.bf16.mxu0 0
        %1416 = vmatpush1.bf16.msra.mxu0 %v1385
        %1417 = vmatprep.subr.bf16.mxu0 0
        %1418 = vmatpush2.bf16.msra.mxu0 0
        %1419 = vmatprep.subr.bf16.mxu0 0
        %1420 = vmatpush2.bf16.msra.mxu0 0
        %1421 = vmatprep.subr.bf16.mxu0 0
        %1422 = vmatpush2.bf16.msra.mxu0 0
        %1423 = vmatprep.subr.bf16.mxu0 0
        %1424 = vmatpush2.bf16.msra.mxu0 0
        %1425 = vmatprep.subr.bf16.mxu0 0
        %1426 = vmatpush2.bf16.msra.mxu0 0
        %1427 = vmatprep.subr.bf16.mxu0 0
        %1428 = vmatpush2.bf16.msra.mxu0 0
        %1429 = vmatprep.subr.bf16.mxu0 0
        %1430 = vmatpush2.bf16.msra.mxu0 0
        %1431 = vmatprep.subr.bf16.mxu0 0
        %1432 = vmatpush2.bf16.msra.mxu0 0
        %1433 = vmatprep.mubr.bf16.mxu0 0
        %1434 = vmatmul.mubr.bf16.gmra.mxu0 %v1348
        %v1435 = vpop.f32.mrf.mxu0
        %v1436 = vadd.f32 %v1352, %v1435
        %v1437 = vpop.f32.mrf.mxu0
        %v1438 = vpop.f32.mrf.mxu0
        %v1439 = vpop.f32.mrf.mxu0
        %1440 = vdwg.mxu0
        %v1441 = vadd.f32 %v1253, %v1436
        %1442 = vadd.xlane.f32.xlu0 %v1441
        %v1443 = vpop.xlane.xlu0 %1442
        %v1444 = vmul.f32 %v1443, 0.03125
        %v1445 = vmul.f32 %v1441, %v1441
        %1446 = vadd.xlane.f32.xlu0 %v1445
        %v1447 = vpop.xlane.xlu0 %1446
        %v1448 = vmul.f32 %v1447, 0.03125
        %v1449 = vmul.f32 %v1444, %v1444
        %v1450 = vsub.f32 %v1448, %v1449
        %v1451 = vsub.f32 %v1441, %v1444
        %v1452 = vadd.f32 %v1450, 1e-05
        %v1453 = vrsqrt.pop %v1452
        %v1454 = vmul.f32 %v1451, %v1453
        %v1455 = vlaneseq
        %v1456 = vshrl.u32 %v1455, 7
        %v1457 = vsub.s32 0, %v1456
        %v1458 = vrot.slane %v303, %v1457
        %v1459 = vmul.f32 %v1454, %v1458
        %v1460 = vlaneseq
        %v1461 = vshrl.u32 %v1460, 7
        %v1462 = vsub.s32 0, %v1461
        %v1463 = vrot.slane %v304, %v1462
        %v1464 = vadd.f32 %v1459, %v1463
        %s1465 = scalar_lea.vmem [#allocation2], 272
        %v1466 = vld [vmem:[%s1465] sm:$0xf]
        %v1467 = vld [vmem:[%s1465 + $0x4] sm:$0xf]
        %v1468 = vld [vmem:[%s1465 + $0x8] sm:$0xf]
        %v1469 = vld [vmem:[%s1465 + $0xc] sm:$0xf]
        %v1470 = vld [vmem:[%s1465 + $0x10] sm:$0xf]
        %v1471 = vld [vmem:[%s1465 + $0x14] sm:$0xf]
        %v1472 = vld [vmem:[%s1465 + $0x18] sm:$0xf]
        %v1473 = vld [vmem:[%s1465 + $0x1c] sm:$0xf]
        %v1474 = vld [vmem:[%s1465 + $0x20] sm:$0xf]
        %v1475 = vld [vmem:[%s1465 + $0x24] sm:$0xf]
        %v1476 = vld [vmem:[%s1465 + $0x28] sm:$0xf]
        %v1477 = vld [vmem:[%s1465 + $0x2c] sm:$0xf]
        %v1478 = vld [vmem:[%s1465 + $0x30] sm:$0xf]
        %v1479 = vld [vmem:[%s1465 + $0x34] sm:$0xf]
        %v1480 = vld [vmem:[%s1465 + $0x38] sm:$0xf]
        %v1481 = vld [vmem:[%s1465 + $0x3c] sm:$0xf]
        %v1482 = vld [vmem:[%s1465 + $0x40] sm:$0xf]
        %v1483 = vld [vmem:[%s1465 + $0x44] sm:$0xf]
        %v1484 = vld [vmem:[%s1465 + $0x48] sm:$0xf]
        %v1485 = vld [vmem:[%s1465 + $0x4c] sm:$0xf]
        %v1486 = vld [vmem:[%s1465 + $0x50] sm:$0xf]
        %v1487 = vld [vmem:[%s1465 + $0x54] sm:$0xf]
        %v1488 = vld [vmem:[%s1465 + $0x58] sm:$0xf]
        %v1489 = vld [vmem:[%s1465 + $0x5c] sm:$0xf]
        %v1490 = vld [vmem:[%s1465 + $0x60] sm:$0xf]
        %v1491 = vld [vmem:[%s1465 + $0x64] sm:$0xf]
        %v1492 = vld [vmem:[%s1465 + $0x68] sm:$0xf]
        %v1493 = vld [vmem:[%s1465 + $0x6c] sm:$0xf]
        %v1494 = vld [vmem:[%s1465 + $0x70] sm:$0xf]
        %v1495 = vld [vmem:[%s1465 + $0x74] sm:$0xf]
        %v1496 = vld [vmem:[%s1465 + $0x78] sm:$0xf]
        %v1497 = vld [vmem:[%s1465 + $0x7c] sm:$0xf]
        %v1498 = vld [vmem:[%s1465 + $0x80] sm:$0xf]
        %v1499 = vld [vmem:[%s1465 + $0x84] sm:$0xf]
        %v1500 = vld [vmem:[%s1465 + $0x88] sm:$0xf]
        %v1501 = vld [vmem:[%s1465 + $0x8c] sm:$0xf]
        %v1502 = vld [vmem:[%s1465 + $0x90] sm:$0xf]
        %v1503 = vld [vmem:[%s1465 + $0x94] sm:$0xf]
        %v1504 = vld [vmem:[%s1465 + $0x98] sm:$0xf]
        %v1505 = vld [vmem:[%s1465 + $0x9c] sm:$0xf]
        %v1506 = vld [vmem:[%s1465 + $0xa0] sm:$0xf]
        %v1507 = vld [vmem:[%s1465 + $0xa4] sm:$0xf]
        %v1508 = vld [vmem:[%s1465 + $0xa8] sm:$0xf]
        %v1509 = vld [vmem:[%s1465 + $0xac] sm:$0xf]
        %v1510 = vld [vmem:[%s1465 + $0xb0] sm:$0xf]
        %v1511 = vld [vmem:[%s1465 + $0xb4] sm:$0xf]
        %v1512 = vld [vmem:[%s1465 + $0xb8] sm:$0xf]
        %v1513 = vld [vmem:[%s1465 + $0xbc] sm:$0xf]
        %v1514 = vld [vmem:[%s1465 + $0xc0] sm:$0xf]
        %v1515 = vld [vmem:[%s1465 + $0xc4] sm:$0xf]
        %v1516 = vld [vmem:[%s1465 + $0xc8] sm:$0xf]
        %v1517 = vld [vmem:[%s1465 + $0xcc] sm:$0xf]
        %v1518 = vld [vmem:[%s1465 + $0xd0] sm:$0xf]
        %v1519 = vld [vmem:[%s1465 + $0xd4] sm:$0xf]
        %v1520 = vld [vmem:[%s1465 + $0xd8] sm:$0xf]
        %v1521 = vld [vmem:[%s1465 + $0xdc] sm:$0xf]
        %v1522 = vld [vmem:[%s1465 + $0xe0] sm:$0xf]
        %v1523 = vld [vmem:[%s1465 + $0xe4] sm:$0xf]
        %v1524 = vld [vmem:[%s1465 + $0xe8] sm:$0xf]
        %v1525 = vld [vmem:[%s1465 + $0xec] sm:$0xf]
        %v1526 = vld [vmem:[%s1465 + $0xf0] sm:$0xf]
        %v1527 = vld [vmem:[%s1465 + $0xf4] sm:$0xf]
        %v1528 = vld [vmem:[%s1465 + $0xf8] sm:$0xf]
        %v1529 = vld [vmem:[%s1465 + $0xfc] sm:$0xf]
        %v1530 = vld [vmem:[%s1465 + $0x100] sm:$0xf]
        %v1531 = vld [vmem:[%s1465 + $0x104] sm:$0xf]
        %v1532 = vld [vmem:[%s1465 + $0x108] sm:$0xf]
        %v1533 = vld [vmem:[%s1465 + $0x10c] sm:$0xf]
        %s1534 = scalar_lea.vmem %s3, 16
        %v1535 = vld [vmem:[%s1534] sm:$0x1]
        %v1536 = vld [vmem:[%s1534 + $0x1] sm:$0x1]
        %v1537 = vld [vmem:[%s1534 + $0x2] sm:$0x1]
        %v1538 = vld [vmem:[%s1534 + $0x3] sm:$0x1]
        %v1539 = vld [vmem:[%s1534 + $0x4] sm:$0x1]
        %v1540 = vld [vmem:[%s1534 + $0x5] sm:$0x1]
        %v1541 = vld [vmem:[%s1534 + $0x6] sm:$0x1]
        %v1542 = vld [vmem:[%s1534 + $0x7] sm:$0x1]
        %v1543 = vld [vmem:[%s1534 + $0x8] sm:$0x1]
        %v1544 = vadd.f32 %v1464, %v227
        %v1545 = vpack.c.bf16 %v1544, %v1544
        %v1546 = vlaneseq
        %v1547 = vshrl.u32 %v1546, 7
        %v1548 = vsub.s32 0, %v1547
        %v1549 = vrot.slane %v1535, %v1548
        %v1566 = vunpack.c.l.b16 %v1466
        %v1567 = vunpack.c.l.b16 %v1467
        %v1568 = vunpack.c.l.b16 %v1468
        %v1569 = vunpack.c.l.b16 %v1469
        %v1570 = vunpack.c.l.b16 %v1470
        %v1571 = vunpack.c.l.b16 %v1471
        %v1572 = vunpack.c.l.b16 %v1472
        %v1573 = vunpack.c.l.b16 %v1473
        %v1574 = vunpack.c.l.b16 %v1474
        %v1575 = vunpack.c.l.b16 %v1475
        %v1576 = vunpack.c.l.b16 %v1476
        %v1577 = vunpack.c.l.b16 %v1477
        %v1578 = vunpack.c.l.b16 %v1478
        %v1579 = vunpack.c.l.b16 %v1479
        %v1580 = vunpack.c.l.b16 %v1480
        %v1581 = vunpack.c.l.b16 %v1481
        %v1582 = vpack.c.b16 %v1567, %v1566
        %v1583 = vpack.c.b16 %v1569, %v1568
        %v1584 = vpack.c.b16 %v1571, %v1570
        %v1585 = vpack.c.b16 %v1573, %v1572
        %v1586 = vpack.c.b16 %v1575, %v1574
        %v1587 = vpack.c.b16 %v1577, %v1576
        %v1588 = vpack.c.b16 %v1579, %v1578
        %v1589 = vpack.c.b16 %v1581, %v1580
        %1598 = vmatprep.subr.bf16.mxu0 0
        %1599 = vmatpush1.bf16.msra.mxu0 %v1589
        %1600 = vmatprep.subr.bf16.mxu0 0
        %1601 = vmatpush1.bf16.msra.mxu0 %v1588
        %1602 = vmatprep.subr.bf16.mxu0 0
        %1603 = vmatpush1.bf16.msra.mxu0 %v1587
        %1604 = vmatprep.subr.bf16.mxu0 0
        %1605 = vmatpush1.bf16.msra.mxu0 %v1586
        %1606 = vmatprep.subr.bf16.mxu0 0
        %1607 = vmatpush1.bf16.msra.mxu0 %v1585
        %1608 = vmatprep.subr.bf16.mxu0 0
        %1609 = vmatpush1.bf16.msra.mxu0 %v1584
        %1610 = vmatprep.subr.bf16.mxu0 0
        %1611 = vmatpush1.bf16.msra.mxu0 %v1583
        %1612 = vmatprep.subr.bf16.mxu0 0
        %1613 = vmatpush1.bf16.msra.mxu0 %v1582
        %1614 = vmatprep.subr.bf16.mxu0 0
        %1615 = vmatpush2.bf16.msra.mxu0 0
        %1616 = vmatprep.subr.bf16.mxu0 0
        %1617 = vmatpush2.bf16.msra.mxu0 0
        %1618 = vmatprep.subr.bf16.mxu0 0
        %1619 = vmatpush2.bf16.msra.mxu0 0
        %1620 = vmatprep.subr.bf16.mxu0 0
        %1621 = vmatpush2.bf16.msra.mxu0 0
        %1622 = vmatprep.subr.bf16.mxu0 0
        %1623 = vmatpush2.bf16.msra.mxu0 0
        %1624 = vmatprep.subr.bf16.mxu0 0
        %1625 = vmatpush2.bf16.msra.mxu0 0
        %1626 = vmatprep.subr.bf16.mxu0 0
        %1627 = vmatpush2.bf16.msra.mxu0 0
        %1628 = vmatprep.subr.bf16.mxu0 0
        %1629 = vmatpush2.bf16.msra.mxu0 0
        %1630 = vmatprep.mubr.bf16.mxu0 0
        %1631 = vmatmul.mubr.bf16.gmra.mxu0 %v1545
        %v1632 = vpop.f32.mrf.mxu0
        %v1633 = vadd.f32 %v1549, %v1632
        %v1634 = vpop.f32.mrf.mxu0
        %v1635 = vpop.f32.mrf.mxu0
        %v1636 = vpop.f32.mrf.mxu0
        %1637 = vdwg.mxu0
        %v1638 = vpack.c.bf16 %v1464, %v1464
        %v1639 = vlaneseq
        %v1640 = vshrl.u32 %v1639, 7
        %v1641 = vsub.s32 0, %v1640
        %v1642 = vrot.slane %v1536, %v1641
        %v1659 = vunpack.c.l.b16 %v1482
        %v1660 = vunpack.c.l.b16 %v1483
        %v1661 = vunpack.c.l.b16 %v1484
        %v1662 = vunpack.c.l.b16 %v1485
        %v1663 = vunpack.c.l.b16 %v1486
        %v1664 = vunpack.c.l.b16 %v1487
        %v1665 = vunpack.c.l.b16 %v1488
        %v1666 = vunpack.c.l.b16 %v1489
        %v1667 = vunpack.c.l.b16 %v1490
        %v1668 = vunpack.c.l.b16 %v1491
        %v1669 = vunpack.c.l.b16 %v1492
        %v1670 = vunpack.c.l.b16 %v1493
        %v1671 = vunpack.c.l.b16 %v1494
        %v1672 = vunpack.c.l.b16 %v1495
        %v1673 = vunpack.c.l.b16 %v1496
        %v1674 = vunpack.c.l.b16 %v1497
        %v1675 = vpack.c.b16 %v1660, %v1659
        %v1676 = vpack.c.b16 %v1662, %v1661
        %v1677 = vpack.c.b16 %v1664, %v1663
        %v1678 = vpack.c.b16 %v1666, %v1665
        %v1679 = vpack.c.b16 %v1668, %v1667
        %v1680 = vpack.c.b16 %v1670, %v1669
        %v1681 = vpack.c.b16 %v1672, %v1671
        %v1682 = vpack.c.b16 %v1674, %v1673
        %1691 = vmatprep.subr.bf16.mxu0 0
        %1692 = vmatpush1.bf16.msra.mxu0 %v1682
        %1693 = vmatprep.subr.bf16.mxu0 0
        %1694 = vmatpush1.bf16.msra.mxu0 %v1681
        %1695 = vmatprep.subr.bf16.mxu0 0
        %1696 = vmatpush1.bf16.msra.mxu0 %v1680
        %1697 = vmatprep.subr.bf16.mxu0 0
        %1698 = vmatpush1.bf16.msra.mxu0 %v1679
        %1699 = vmatprep.subr.bf16.mxu0 0
        %1700 = vmatpush1.bf16.msra.mxu0 %v1678
        %1701 = vmatprep.subr.bf16.mxu0 0
        %1702 = vmatpush1.bf16.msra.mxu0 %v1677
        %1703 = vmatprep.subr.bf16.mxu0 0
        %1704 = vmatpush1.bf16.msra.mxu0 %v1676
        %1705 = vmatprep.subr.bf16.mxu0 0
        %1706 = vmatpush1.bf16.msra.mxu0 %v1675
        %1707 = vmatprep.subr.bf16.mxu0 0
        %1708 = vmatpush2.bf16.msra.mxu0 0
        %1709 = vmatprep.subr.bf16.mxu0 0
        %1710 = vmatpush2.bf16.msra.mxu0 0
        %1711 = vmatprep.subr.bf16.mxu0 0
        %1712 = vmatpush2.bf16.msra.mxu0 0
        %1713 = vmatprep.subr.bf16.mxu0 0
        %1714 = vmatpush2.bf16.msra.mxu0 0
        %1715 = vmatprep.subr.bf16.mxu0 0
        %1716 = vmatpush2.bf16.msra.mxu0 0
        %1717 = vmatprep.subr.bf16.mxu0 0
        %1718 = vmatpush2.bf16.msra.mxu0 0
        %1719 = vmatprep.subr.bf16.mxu0 0
        %1720 = vmatpush2.bf16.msra.mxu0 0
        %1721 = vmatprep.subr.bf16.mxu0 0
        %1722 = vmatpush2.bf16.msra.mxu0 0
        %1723 = vmatprep.mubr.bf16.mxu0 0
        %1724 = vmatmul.mubr.bf16.gmra.mxu0 %v1638
        %v1725 = vpop.f32.mrf.mxu0
        %v1726 = vadd.f32 %v1642, %v1725
        %v1727 = vpop.f32.mrf.mxu0
        %v1728 = vpop.f32.mrf.mxu0
        %v1729 = vpop.f32.mrf.mxu0
        %1730 = vdwg.mxu0
        %v1731 = vmul.f32 %v1633, 0.35355338
        %1733 = vrot.lane.b32.xlu0 %v1633, 96
        %v1734 = vpop.permute.xlu0 %1733
        %v1736 = vsel %vm496, %v1731, 0
        %v1738 = vsel %vm496, %v1734, 0
        %1740 = vmatprep.subr.mxu0 0.0
        %1741 = vmatpush1.xpose.msra.mxu0 0.0
        %1742 = vmatprep.subr.mxu0 0.0
        %1743 = vmatpush1.xpose.msra.mxu0 0.0
        %1744 = vmatprep.subr.mxu0 0.0
        %1745 = vmatpush1.xpose.msra.mxu0 0.0
        %1746 = vmatprep.subr.mxu0 0.0
        %1747 = vmatpush1.xpose.msra.mxu0 0.0
        %1748 = vmatprep.subr.mxu0 0.0
        %1749 = vmatpush1.xpose.msra.mxu0 0.0
        %1750 = vmatprep.subr.mxu0 0.0
        %1751 = vmatpush1.xpose.msra.mxu0 0.0
        %1752 = vmatprep.subr.mxu0 0.0
        %1753 = vmatpush1.xpose.msra.mxu0 0.0
        %1754 = vmatprep.subr.mxu0 0.0
        %1755 = vmatpush1.xpose.msra.mxu0 0.0
        %1756 = vmatprep.subr.mxu0 0.0
        %1757 = vmatpush1.xpose.msra.mxu0 0.0
        %1758 = vmatprep.subr.mxu0 0.0
        %1759 = vmatpush1.xpose.msra.mxu0 0.0
        %1760 = vmatprep.subr.mxu0 0.0
        %1761 = vmatpush1.xpose.msra.mxu0 0.0
        %1762 = vmatprep.subr.mxu0 0.0
        %1763 = vmatpush1.xpose.msra.mxu0 0.0
        %1764 = vmatprep.subr.mxu0 0.0
        %1765 = vmatpush1.xpose.msra.mxu0 0.0
        %1766 = vmatprep.subr.mxu0 0.0
        %1767 = vmatpush1.xpose.msra.mxu0 0.0
        %1768 = vmatprep.subr.mxu0 0.0
        %1769 = vmatpush1.xpose.msra.mxu0 0.0
        %1770 = vmatprep.subr.mxu0 0.0
        %1771 = vmatpush1.xpose.msra.mxu0 %v1738
        %1772 = vmatprep.subr.mxu0 0.0
        %1773 = vmatpush2.xpose.msra.mxu0 0.0
        %1774 = vmatprep.subr.mxu0 0.0
        %1775 = vmatpush2.xpose.msra.mxu0 0.0
        %1776 = vmatprep.subr.mxu0 0.0
        %1777 = vmatpush2.xpose.msra.mxu0 0.0
        %1778 = vmatprep.subr.mxu0 0.0
        %1779 = vmatpush2.xpose.msra.mxu0 0.0
        %1780 = vmatprep.subr.mxu0 0.0
        %1781 = vmatpush2.xpose.msra.mxu0 0.0
        %1782 = vmatprep.subr.mxu0 0.0
        %1783 = vmatpush2.xpose.msra.mxu0 0.0
        %1784 = vmatprep.subr.mxu0 0.0
        %1785 = vmatpush2.xpose.msra.mxu0 0.0
        %1786 = vmatprep.subr.mxu0 0.0
        %1787 = vmatpush2.xpose.msra.mxu0 0.0
        %1788 = vmatprep.subr.mxu0 0.0
        %1789 = vmatpush2.xpose.msra.mxu0 0.0
        %1790 = vmatprep.subr.mxu0 0.0
        %1791 = vmatpush2.xpose.msra.mxu0 0.0
        %1792 = vmatprep.subr.mxu0 0.0
        %1793 = vmatpush2.xpose.msra.mxu0 0.0
        %1794 = vmatprep.subr.mxu0 0.0
        %1795 = vmatpush2.xpose.msra.mxu0 0.0
        %1796 = vmatprep.subr.mxu0 0.0
        %1797 = vmatpush2.xpose.msra.mxu0 0.0
        %1798 = vmatprep.subr.mxu0 0.0
        %1799 = vmatpush2.xpose.msra.mxu0 0.0
        %1800 = vmatprep.subr.mxu0 0.0
        %1801 = vmatpush2.xpose.msra.mxu0 0.0
        %1802 = vmatprep.subr.mxu0 0.0
        %1803 = vmatpush2.xpose.msra.mxu0 0.0
        %1804 = vmatprep.mubr.f32.mxu0 0.0
        %1805 = vmatmul.mubr.f32.gmra.mxu0 %v1736
        %v1806 = vpop.f32.mrf.mxu0
        %v1807 = vadd.f32 0.0, %v1806
        %v1808 = vpop.f32.mrf.mxu0
        %1809 = vdwg.mxu0
        %v1810 = vsel %vm496, %v1807, -inf
        %1811 = vmax.xlane.f32.xlu0 %v1810
        %v1812 = vpop.xlane.xlu0 %1811
        %v1813 = vsub.f32 %v1807, %v1812
        %v1814 = vmul.f32 %v1813, 1.442695
        %v1815 = vpow.pop %v1814
        %v1816 = vsel %vm496, %v1815, 0.0
        %1817 = vadd.xlane.f32.xlu0 %v1816
        %v1818 = vpop.xlane.xlu0 %1817
        %v1819 = vrcp.pop %v1818
        %v1820 = vmul.f32 %v1815, %v1819
        %v1822 = vsel %vm496, %v1820, 0
        %1824 = vmatprep.subr.mxu0 0.0
        %1825 = vmatpush1.msra.mxu0 0.0
        %1826 = vmatprep.subr.mxu0 0.0
        %1827 = vmatpush1.msra.mxu0 0.0
        %1828 = vmatprep.subr.mxu0 0.0
        %1829 = vmatpush1.msra.mxu0 0.0
        %1830 = vmatprep.subr.mxu0 0.0
        %1831 = vmatpush1.msra.mxu0 0.0
        %1832 = vmatprep.subr.mxu0 0.0
        %1833 = vmatpush1.msra.mxu0 0.0
        %1834 = vmatprep.subr.mxu0 0.0
        %1835 = vmatpush1.msra.mxu0 0.0
        %1836 = vmatprep.subr.mxu0 0.0
        %1837 = vmatpush1.msra.mxu0 0.0
        %1838 = vmatprep.subr.mxu0 0.0
        %1839 = vmatpush1.msra.mxu0 0.0
        %1840 = vmatprep.subr.mxu0 0.0
        %1841 = vmatpush1.msra.mxu0 0.0
        %1842 = vmatprep.subr.mxu0 0.0
        %1843 = vmatpush1.msra.mxu0 0.0
        %1844 = vmatprep.subr.mxu0 0.0
        %1845 = vmatpush1.msra.mxu0 0.0
        %1846 = vmatprep.subr.mxu0 0.0
        %1847 = vmatpush1.msra.mxu0 0.0
        %1848 = vmatprep.subr.mxu0 0.0
        %1849 = vmatpush1.msra.mxu0 0.0
        %1850 = vmatprep.subr.mxu0 0.0
        %1851 = vmatpush1.msra.mxu0 0.0
        %1852 = vmatprep.subr.mxu0 0.0
        %1853 = vmatpush1.msra.mxu0 0.0
        %1854 = vmatprep.subr.mxu0 0.0
        %1855 = vmatpush1.msra.mxu0 %v1726
        %1856 = vmatprep.subr.mxu0 0.0
        %1857 = vmatpush2.msra.mxu0 0.0
        %1858 = vmatprep.subr.mxu0 0.0
        %1859 = vmatpush2.msra.mxu0 0.0
        %1860 = vmatprep.subr.mxu0 0.0
        %1861 = vmatpush2.msra.mxu0 0.0
        %1862 = vmatprep.subr.mxu0 0.0
        %1863 = vmatpush2.msra.mxu0 0.0
        %1864 = vmatprep.subr.mxu0 0.0
        %1865 = vmatpush2.msra.mxu0 0.0
        %1866 = vmatprep.subr.mxu0 0.0
        %1867 = vmatpush2.msra.mxu0 0.0
        %1868 = vmatprep.subr.mxu0 0.0
        %1869 = vmatpush2.msra.mxu0 0.0
        %1870 = vmatprep.subr.mxu0 0.0
        %1871 = vmatpush2.msra.mxu0 0.0
        %1872 = vmatprep.subr.mxu0 0.0
        %1873 = vmatpush2.msra.mxu0 0.0
        %1874 = vmatprep.subr.mxu0 0.0
        %1875 = vmatpush2.msra.mxu0 0.0
        %1876 = vmatprep.subr.mxu0 0.0
        %1877 = vmatpush2.msra.mxu0 0.0
        %1878 = vmatprep.subr.mxu0 0.0
        %1879 = vmatpush2.msra.mxu0 0.0
        %1880 = vmatprep.subr.mxu0 0.0
        %1881 = vmatpush2.msra.mxu0 0.0
        %1882 = vmatprep.subr.mxu0 0.0
        %1883 = vmatpush2.msra.mxu0 0.0
        %1884 = vmatprep.subr.mxu0 0.0
        %1885 = vmatpush2.msra.mxu0 0.0
        %1886 = vmatprep.subr.mxu0 0.0
        %1887 = vmatpush2.msra.mxu0 0.0
        %1888 = vmatprep.mubr.f32.mxu0 0.0
        %1889 = vmatmul.mubr.f32.gmra.mxu0 %v1822
        %v1890 = vpop.f32.mrf.mxu0
        %v1891 = vadd.f32 0.0, %v1890
        %v1892 = vpop.f32.mrf.mxu0
        %1893 = vdwg.mxu0
        %1894 = vrot.lane.b32.xlu0 %v1731, 120
        %v1895 = vpop.permute.xlu0 %1894
        %1896 = vrot.lane.b32.xlu0 %v1633, 88
        %v1897 = vpop.permute.xlu0 %1896
        %v1898 = vsel %vm496, %v1895, 0
        %v1900 = vsel %vm496, %v1897, 0
        %1902 = vmatprep.subr.mxu0 0.0
        %1903 = vmatpush1.xpose.msra.mxu0 0.0
        %1904 = vmatprep.subr.mxu0 0.0
        %1905 = vmatpush1.xpose.msra.mxu0 0.0
        %1906 = vmatprep.subr.mxu0 0.0
        %1907 = vmatpush1.xpose.msra.mxu0 0.0
        %1908 = vmatprep.subr.mxu0 0.0
        %1909 = vmatpush1.xpose.msra.mxu0 0.0
        %1910 = vmatprep.subr.mxu0 0.0
        %1911 = vmatpush1.xpose.msra.mxu0 0.0
        %1912 = vmatprep.subr.mxu0 0.0
        %1913 = vmatpush1.xpose.msra.mxu0 0.0
        %1914 = vmatprep.subr.mxu0 0.0
        %1915 = vmatpush1.xpose.msra.mxu0 0.0
        %1916 = vmatprep.subr.mxu0 0.0
        %1917 = vmatpush1.xpose.msra.mxu0 0.0
        %1918 = vmatprep.subr.mxu0 0.0
        %1919 = vmatpush1.xpose.msra.mxu0 0.0
        %1920 = vmatprep.subr.mxu0 0.0
        %1921 = vmatpush1.xpose.msra.mxu0 0.0
        %1922 = vmatprep.subr.mxu0 0.0
        %1923 = vmatpush1.xpose.msra.mxu0 0.0
        %1924 = vmatprep.subr.mxu0 0.0
        %1925 = vmatpush1.xpose.msra.mxu0 0.0
        %1926 = vmatprep.subr.mxu0 0.0
        %1927 = vmatpush1.xpose.msra.mxu0 0.0
        %1928 = vmatprep.subr.mxu0 0.0
        %1929 = vmatpush1.xpose.msra.mxu0 0.0
        %1930 = vmatprep.subr.mxu0 0.0
        %1931 = vmatpush1.xpose.msra.mxu0 0.0
        %1932 = vmatprep.subr.mxu0 0.0
        %1933 = vmatpush1.xpose.msra.mxu0 %v1900
        %1934 = vmatprep.subr.mxu0 0.0
        %1935 = vmatpush2.xpose.msra.mxu0 0.0
        %1936 = vmatprep.subr.mxu0 0.0
        %1937 = vmatpush2.xpose.msra.mxu0 0.0
        %1938 = vmatprep.subr.mxu0 0.0
        %1939 = vmatpush2.xpose.msra.mxu0 0.0
        %1940 = vmatprep.subr.mxu0 0.0
        %1941 = vmatpush2.xpose.msra.mxu0 0.0
        %1942 = vmatprep.subr.mxu0 0.0
        %1943 = vmatpush2.xpose.msra.mxu0 0.0
        %1944 = vmatprep.subr.mxu0 0.0
        %1945 = vmatpush2.xpose.msra.mxu0 0.0
        %1946 = vmatprep.subr.mxu0 0.0
        %1947 = vmatpush2.xpose.msra.mxu0 0.0
        %1948 = vmatprep.subr.mxu0 0.0
        %1949 = vmatpush2.xpose.msra.mxu0 0.0
        %1950 = vmatprep.subr.mxu0 0.0
        %1951 = vmatpush2.xpose.msra.mxu0 0.0
        %1952 = vmatprep.subr.mxu0 0.0
        %1953 = vmatpush2.xpose.msra.mxu0 0.0
        %1954 = vmatprep.subr.mxu0 0.0
        %1955 = vmatpush2.xpose.msra.mxu0 0.0
        %1956 = vmatprep.subr.mxu0 0.0
        %1957 = vmatpush2.xpose.msra.mxu0 0.0
        %1958 = vmatprep.subr.mxu0 0.0
        %1959 = vmatpush2.xpose.msra.mxu0 0.0
        %1960 = vmatprep.subr.mxu0 0.0
        %1961 = vmatpush2.xpose.msra.mxu0 0.0
        %1962 = vmatprep.subr.mxu0 0.0
        %1963 = vmatpush2.xpose.msra.mxu0 0.0
        %1964 = vmatprep.subr.mxu0 0.0
        %1965 = vmatpush2.xpose.msra.mxu0 0.0
        %1966 = vmatprep.mubr.f32.mxu0 0.0
        %1967 = vmatmul.mubr.f32.gmra.mxu0 %v1898
        %v1968 = vpop.f32.mrf.mxu0
        %v1969 = vadd.f32 0.0, %v1968
        %v1970 = vpop.f32.mrf.mxu0
        %1971 = vdwg.mxu0
        %v1972 = vsel %vm496, %v1969, -inf
        %1973 = vmax.xlane.f32.xlu0 %v1972
        %v1974 = vpop.xlane.xlu0 %1973
        %v1975 = vsub.f32 %v1969, %v1974
        %v1976 = vmul.f32 %v1975, 1.442695
        %v1977 = vpow.pop %v1976
        %v1978 = vsel %vm496, %v1977, 0.0
        %1979 = vadd.xlane.f32.xlu0 %v1978
        %v1980 = vpop.xlane.xlu0 %1979
        %v1981 = vrcp.pop %v1980
        %v1982 = vmul.f32 %v1977, %v1981
        %1984 = vrot.lane.b32.xlu0 %v1726, 120
        %v1985 = vpop.permute.xlu0 %1984
        %v1988 = vsel %vm496, %v1982, 0
        %1990 = vmatprep.subr.mxu0 0.0
        %1991 = vmatpush1.msra.mxu0 0.0
        %1992 = vmatprep.subr.mxu0 0.0
        %1993 = vmatpush1.msra.mxu0 0.0
        %1994 = vmatprep.subr.mxu0 0.0
        %1995 = vmatpush1.msra.mxu0 0.0
        %1996 = vmatprep.subr.mxu0 0.0
        %1997 = vmatpush1.msra.mxu0 0.0
        %1998 = vmatprep.subr.mxu0 0.0
        %1999 = vmatpush1.msra.mxu0 0.0
        %2000 = vmatprep.subr.mxu0 0.0
        %2001 = vmatpush1.msra.mxu0 0.0
        %2002 = vmatprep.subr.mxu0 0.0
        %2003 = vmatpush1.msra.mxu0 0.0
        %2004 = vmatprep.subr.mxu0 0.0
        %2005 = vmatpush1.msra.mxu0 0.0
        %2006 = vmatprep.subr.mxu0 0.0
        %2007 = vmatpush1.msra.mxu0 0.0
        %2008 = vmatprep.subr.mxu0 0.0
        %2009 = vmatpush1.msra.mxu0 0.0
        %2010 = vmatprep.subr.mxu0 0.0
        %2011 = vmatpush1.msra.mxu0 0.0
        %2012 = vmatprep.subr.mxu0 0.0
        %2013 = vmatpush1.msra.mxu0 0.0
        %2014 = vmatprep.subr.mxu0 0.0
        %2015 = vmatpush1.msra.mxu0 0.0
        %2016 = vmatprep.subr.mxu0 0.0
        %2017 = vmatpush1.msra.mxu0 0.0
        %2018 = vmatprep.subr.mxu0 0.0
        %2019 = vmatpush1.msra.mxu0 0.0
        %2020 = vmatprep.subr.mxu0 0.0
        %2021 = vmatpush1.msra.mxu0 %v1985
        %2022 = vmatprep.subr.mxu0 0.0
        %2023 = vmatpush2.msra.mxu0 0.0
        %2024 = vmatprep.subr.mxu0 0.0
        %2025 = vmatpush2.msra.mxu0 0.0
        %2026 = vmatprep.subr.mxu0 0.0
        %2027 = vmatpush2.msra.mxu0 0.0
        %2028 = vmatprep.subr.mxu0 0.0
        %2029 = vmatpush2.msra.mxu0 0.0
        %2030 = vmatprep.subr.mxu0 0.0
        %2031 = vmatpush2.msra.mxu0 0.0
        %2032 = vmatprep.subr.mxu0 0.0
        %2033 = vmatpush2.msra.mxu0 0.0
        %2034 = vmatprep.subr.mxu0 0.0
        %2035 = vmatpush2.msra.mxu0 0.0
        %2036 = vmatprep.subr.mxu0 0.0
        %2037 = vmatpush2.msra.mxu0 0.0
        %2038 = vmatprep.subr.mxu0 0.0
        %2039 = vmatpush2.msra.mxu0 0.0
        %2040 = vmatprep.subr.mxu0 0.0
        %2041 = vmatpush2.msra.mxu0 0.0
        %2042 = vmatprep.subr.mxu0 0.0
        %2043 = vmatpush2.msra.mxu0 0.0
        %2044 = vmatprep.subr.mxu0 0.0
        %2045 = vmatpush2.msra.mxu0 0.0
        %2046 = vmatprep.subr.mxu0 0.0
        %2047 = vmatpush2.msra.mxu0 0.0
        %2048 = vmatprep.subr.mxu0 0.0
        %2049 = vmatpush2.msra.mxu0 0.0
        %2050 = vmatprep.subr.mxu0 0.0
        %2051 = vmatpush2.msra.mxu0 0.0
        %2052 = vmatprep.subr.mxu0 0.0
        %2053 = vmatpush2.msra.mxu0 0.0
        %2054 = vmatprep.mubr.f32.mxu0 0.0
        %2055 = vmatmul.mubr.f32.gmra.mxu0 %v1988
        %v2056 = vpop.f32.mrf.mxu0
        %v2057 = vadd.f32 0.0, %v2056
        %v2058 = vpop.f32.mrf.mxu0
        %2059 = vdwg.mxu0
        %2060 = vrot.lane.b32.xlu0 %v1731, 112
        %v2061 = vpop.permute.xlu0 %2060
        %2062 = vrot.lane.b32.xlu0 %v1633, 80
        %v2063 = vpop.permute.xlu0 %2062
        %v2064 = vsel %vm496, %v2061, 0
        %v2066 = vsel %vm496, %v2063, 0
        %2068 = vmatprep.subr.mxu0 0.0
        %2069 = vmatpush1.xpose.msra.mxu0 0.0
        %2070 = vmatprep.subr.mxu0 0.0
        %2071 = vmatpush1.xpose.msra.mxu0 0.0
        %2072 = vmatprep.subr.mxu0 0.0
        %2073 = vmatpush1.xpose.msra.mxu0 0.0
        %2074 = vmatprep.subr.mxu0 0.0
        %2075 = vmatpush1.xpose.msra.mxu0 0.0
        %2076 = vmatprep.subr.mxu0 0.0
        %2077 = vmatpush1.xpose.msra.mxu0 0.0
        %2078 = vmatprep.subr.mxu0 0.0
        %2079 = vmatpush1.xpose.msra.mxu0 0.0
        %2080 = vmatprep.subr.mxu0 0.0
        %2081 = vmatpush1.xpose.msra.mxu0 0.0
        %2082 = vmatprep.subr.mxu0 0.0
        %2083 = vmatpush1.xpose.msra.mxu0 0.0
        %2084 = vmatprep.subr.mxu0 0.0
        %2085 = vmatpush1.xpose.msra.mxu0 0.0
        %2086 = vmatprep.subr.mxu0 0.0
        %2087 = vmatpush1.xpose.msra.mxu0 0.0
        %2088 = vmatprep.subr.mxu0 0.0
        %2089 = vmatpush1.xpose.msra.mxu0 0.0
        %2090 = vmatprep.subr.mxu0 0.0
        %2091 = vmatpush1.xpose.msra.mxu0 0.0
        %2092 = vmatprep.subr.mxu0 0.0
        %2093 = vmatpush1.xpose.msra.mxu0 0.0
        %2094 = vmatprep.subr.mxu0 0.0
        %2095 = vmatpush1.xpose.msra.mxu0 0.0
        %2096 = vmatprep.subr.mxu0 0.0
        %2097 = vmatpush1.xpose.msra.mxu0 0.0
        %2098 = vmatprep.subr.mxu0 0.0
        %2099 = vmatpush1.xpose.msra.mxu0 %v2066
        %2100 = vmatprep.subr.mxu0 0.0
        %2101 = vmatpush2.xpose.msra.mxu0 0.0
        %2102 = vmatprep.subr.mxu0 0.0
        %2103 = vmatpush2.xpose.msra.mxu0 0.0
        %2104 = vmatprep.subr.mxu0 0.0
        %2105 = vmatpush2.xpose.msra.mxu0 0.0
        %2106 = vmatprep.subr.mxu0 0.0
        %2107 = vmatpush2.xpose.msra.mxu0 0.0
        %2108 = vmatprep.subr.mxu0 0.0
        %2109 = vmatpush2.xpose.msra.mxu0 0.0
        %2110 = vmatprep.subr.mxu0 0.0
        %2111 = vmatpush2.xpose.msra.mxu0 0.0
        %2112 = vmatprep.subr.mxu0 0.0
        %2113 = vmatpush2.xpose.msra.mxu0 0.0
        %2114 = vmatprep.subr.mxu0 0.0
        %2115 = vmatpush2.xpose.msra.mxu0 0.0
        %2116 = vmatprep.subr.mxu0 0.0
        %2117 = vmatpush2.xpose.msra.mxu0 0.0
        %2118 = vmatprep.subr.mxu0 0.0
        %2119 = vmatpush2.xpose.msra.mxu0 0.0
        %2120 = vmatprep.subr.mxu0 0.0
        %2121 = vmatpush2.xpose.msra.mxu0 0.0
        %2122 = vmatprep.subr.mxu0 0.0
        %2123 = vmatpush2.xpose.msra.mxu0 0.0
        %2124 = vmatprep.subr.mxu0 0.0
        %2125 = vmatpush2.xpose.msra.mxu0 0.0
        %2126 = vmatprep.subr.mxu0 0.0
        %2127 = vmatpush2.xpose.msra.mxu0 0.0
        %2128 = vmatprep.subr.mxu0 0.0
        %2129 = vmatpush2.xpose.msra.mxu0 0.0
        %2130 = vmatprep.subr.mxu0 0.0
        %2131 = vmatpush2.xpose.msra.mxu0 0.0
        %2132 = vmatprep.mubr.f32.mxu0 0.0
        %2133 = vmatmul.mubr.f32.gmra.mxu0 %v2064
        %v2134 = vpop.f32.mrf.mxu0
        %v2135 = vadd.f32 0.0, %v2134
        %v2136 = vpop.f32.mrf.mxu0
        %2137 = vdwg.mxu0
        %v2138 = vsel %vm496, %v2135, -inf
        %2139 = vmax.xlane.f32.xlu0 %v2138
        %v2140 = vpop.xlane.xlu0 %2139
        %v2141 = vsub.f32 %v2135, %v2140
        %v2142 = vmul.f32 %v2141, 1.442695
        %v2143 = vpow.pop %v2142
        %v2144 = vsel %vm496, %v2143, 0.0
        %2145 = vadd.xlane.f32.xlu0 %v2144
        %v2146 = vpop.xlane.xlu0 %2145
        %v2147 = vrcp.pop %v2146
        %v2148 = vmul.f32 %v2143, %v2147
        %2149 = vrot.lane.b32.xlu0 %v1726, 112
        %v2150 = vpop.permute.xlu0 %2149
        %v2153 = vsel %vm496, %v2148, 0
        %2155 = vmatprep.subr.mxu0 0.0
        %2156 = vmatpush1.msra.mxu0 0.0
        %2157 = vmatprep.subr.mxu0 0.0
        %2158 = vmatpush1.msra.mxu0 0.0
        %2159 = vmatprep.subr.mxu0 0.0
        %2160 = vmatpush1.msra.mxu0 0.0
        %2161 = vmatprep.subr.mxu0 0.0
        %2162 = vmatpush1.msra.mxu0 0.0
        %2163 = vmatprep.subr.mxu0 0.0
        %2164 = vmatpush1.msra.mxu0 0.0
        %2165 = vmatprep.subr.mxu0 0.0
        %2166 = vmatpush1.msra.mxu0 0.0
        %2167 = vmatprep.subr.mxu0 0.0
        %2168 = vmatpush1.msra.mxu0 0.0
        %2169 = vmatprep.subr.mxu0 0.0
        %2170 = vmatpush1.msra.mxu0 0.0
        %2171 = vmatprep.subr.mxu0 0.0
        %2172 = vmatpush1.msra.mxu0 0.0
        %2173 = vmatprep.subr.mxu0 0.0
        %2174 = vmatpush1.msra.mxu0 0.0
        %2175 = vmatprep.subr.mxu0 0.0
        %2176 = vmatpush1.msra.mxu0 0.0
        %2177 = vmatprep.subr.mxu0 0.0
        %2178 = vmatpush1.msra.mxu0 0.0
        %2179 = vmatprep.subr.mxu0 0.0
        %2180 = vmatpush1.msra.mxu0 0.0
        %2181 = vmatprep.subr.mxu0 0.0
        %2182 = vmatpush1.msra.mxu0 0.0
        %2183 = vmatprep.subr.mxu0 0.0
        %2184 = vmatpush1.msra.mxu0 0.0
        %2185 = vmatprep.subr.mxu0 0.0
        %2186 = vmatpush1.msra.mxu0 %v2150
        %2187 = vmatprep.subr.mxu0 0.0
        %2188 = vmatpush2.msra.mxu0 0.0
        %2189 = vmatprep.subr.mxu0 0.0
        %2190 = vmatpush2.msra.mxu0 0.0
        %2191 = vmatprep.subr.mxu0 0.0
        %2192 = vmatpush2.msra.mxu0 0.0
        %2193 = vmatprep.subr.mxu0 0.0
        %2194 = vmatpush2.msra.mxu0 0.0
        %2195 = vmatprep.subr.mxu0 0.0
        %2196 = vmatpush2.msra.mxu0 0.0
        %2197 = vmatprep.subr.mxu0 0.0
        %2198 = vmatpush2.msra.mxu0 0.0
        %2199 = vmatprep.subr.mxu0 0.0
        %2200 = vmatpush2.msra.mxu0 0.0
        %2201 = vmatprep.subr.mxu0 0.0
        %2202 = vmatpush2.msra.mxu0 0.0
        %2203 = vmatprep.subr.mxu0 0.0
        %2204 = vmatpush2.msra.mxu0 0.0
        %2205 = vmatprep.subr.mxu0 0.0
        %2206 = vmatpush2.msra.mxu0 0.0
        %2207 = vmatprep.subr.mxu0 0.0
        %2208 = vmatpush2.msra.mxu0 0.0
        %2209 = vmatprep.subr.mxu0 0.0
        %2210 = vmatpush2.msra.mxu0 0.0
        %2211 = vmatprep.subr.mxu0 0.0
        %2212 = vmatpush2.msra.mxu0 0.0
        %2213 = vmatprep.subr.mxu0 0.0
        %2214 = vmatpush2.msra.mxu0 0.0
        %2215 = vmatprep.subr.mxu0 0.0
        %2216 = vmatpush2.msra.mxu0 0.0
        %2217 = vmatprep.subr.mxu0 0.0
        %2218 = vmatpush2.msra.mxu0 0.0
        %2219 = vmatprep.mubr.f32.mxu0 0.0
        %2220 = vmatmul.mubr.f32.gmra.mxu0 %v2153
        %v2221 = vpop.f32.mrf.mxu0
        %v2222 = vadd.f32 0.0, %v2221
        %v2223 = vpop.f32.mrf.mxu0
        %2224 = vdwg.mxu0
        %2225 = vrot.lane.b32.xlu0 %v1731, 104
        %v2226 = vpop.permute.xlu0 %2225
        %2227 = vrot.lane.b32.xlu0 %v1633, 72
        %v2228 = vpop.permute.xlu0 %2227
        %v2229 = vsel %vm496, %v2226, 0
        %v2231 = vsel %vm496, %v2228, 0
        %2233 = vmatprep.subr.mxu0 0.0
        %2234 = vmatpush1.xpose.msra.mxu0 0.0
        %2235 = vmatprep.subr.mxu0 0.0
        %2236 = vmatpush1.xpose.msra.mxu0 0.0
        %2237 = vmatprep.subr.mxu0 0.0
        %2238 = vmatpush1.xpose.msra.mxu0 0.0
        %2239 = vmatprep.subr.mxu0 0.0
        %2240 = vmatpush1.xpose.msra.mxu0 0.0
        %2241 = vmatprep.subr.mxu0 0.0
        %2242 = vmatpush1.xpose.msra.mxu0 0.0
        %2243 = vmatprep.subr.mxu0 0.0
        %2244 = vmatpush1.xpose.msra.mxu0 0.0
        %2245 = vmatprep.subr.mxu0 0.0
        %2246 = vmatpush1.xpose.msra.mxu0 0.0
        %2247 = vmatprep.subr.mxu0 0.0
        %2248 = vmatpush1.xpose.msra.mxu0 0.0
        %2249 = vmatprep.subr.mxu0 0.0
        %2250 = vmatpush1.xpose.msra.mxu0 0.0
        %2251 = vmatprep.subr.mxu0 0.0
        %2252 = vmatpush1.xpose.msra.mxu0 0.0
        %2253 = vmatprep.subr.mxu0 0.0
        %2254 = vmatpush1.xpose.msra.mxu0 0.0
        %2255 = vmatprep.subr.mxu0 0.0
        %2256 = vmatpush1.xpose.msra.mxu0 0.0
        %2257 = vmatprep.subr.mxu0 0.0
        %2258 = vmatpush1.xpose.msra.mxu0 0.0
        %2259 = vmatprep.subr.mxu0 0.0
        %2260 = vmatpush1.xpose.msra.mxu0 0.0
        %2261 = vmatprep.subr.mxu0 0.0
        %2262 = vmatpush1.xpose.msra.mxu0 0.0
        %2263 = vmatprep.subr.mxu0 0.0
        %2264 = vmatpush1.xpose.msra.mxu0 %v2231
        %2265 = vmatprep.subr.mxu0 0.0
        %2266 = vmatpush2.xpose.msra.mxu0 0.0
        %2267 = vmatprep.subr.mxu0 0.0
        %2268 = vmatpush2.xpose.msra.mxu0 0.0
        %2269 = vmatprep.subr.mxu0 0.0
        %2270 = vmatpush2.xpose.msra.mxu0 0.0
        %2271 = vmatprep.subr.mxu0 0.0
        %2272 = vmatpush2.xpose.msra.mxu0 0.0
        %2273 = vmatprep.subr.mxu0 0.0
        %2274 = vmatpush2.xpose.msra.mxu0 0.0
        %2275 = vmatprep.subr.mxu0 0.0
        %2276 = vmatpush2.xpose.msra.mxu0 0.0
        %2277 = vmatprep.subr.mxu0 0.0
        %2278 = vmatpush2.xpose.msra.mxu0 0.0
        %2279 = vmatprep.subr.mxu0 0.0
        %2280 = vmatpush2.xpose.msra.mxu0 0.0
        %2281 = vmatprep.subr.mxu0 0.0
        %2282 = vmatpush2.xpose.msra.mxu0 0.0
        %2283 = vmatprep.subr.mxu0 0.0
        %2284 = vmatpush2.xpose.msra.mxu0 0.0
        %2285 = vmatprep.subr.mxu0 0.0
        %2286 = vmatpush2.xpose.msra.mxu0 0.0
        %2287 = vmatprep.subr.mxu0 0.0
        %2288 = vmatpush2.xpose.msra.mxu0 0.0
        %2289 = vmatprep.subr.mxu0 0.0
        %2290 = vmatpush2.xpose.msra.mxu0 0.0
        %2291 = vmatprep.subr.mxu0 0.0
        %2292 = vmatpush2.xpose.msra.mxu0 0.0
        %2293 = vmatprep.subr.mxu0 0.0
        %2294 = vmatpush2.xpose.msra.mxu0 0.0
        %2295 = vmatprep.subr.mxu0 0.0
        %2296 = vmatpush2.xpose.msra.mxu0 0.0
        %2297 = vmatprep.mubr.f32.mxu0 0.0
        %2298 = vmatmul.mubr.f32.gmra.mxu0 %v2229
        %v2299 = vpop.f32.mrf.mxu0
        %v2300 = vadd.f32 0.0, %v2299
        %v2301 = vpop.f32.mrf.mxu0
        %2302 = vdwg.mxu0
        %v2303 = vsel %vm496, %v2300, -inf
        %2304 = vmax.xlane.f32.xlu0 %v2303
        %v2305 = vpop.xlane.xlu0 %2304
        %v2306 = vsub.f32 %v2300, %v2305
        %v2307 = vmul.f32 %v2306, 1.442695
        %v2308 = vpow.pop %v2307
        %v2309 = vsel %vm496, %v2308, 0.0
        %2310 = vadd.xlane.f32.xlu0 %v2309
        %v2311 = vpop.xlane.xlu0 %2310
        %v2312 = vrcp.pop %v2311
        %v2313 = vmul.f32 %v2308, %v2312
        %2314 = vrot.lane.b32.xlu0 %v1726, 104
        %v2315 = vpop.permute.xlu0 %2314
        %v2318 = vsel %vm496, %v2313, 0
        %2320 = vmatprep.subr.mxu0 0.0
        %2321 = vmatpush1.msra.mxu0 0.0
        %2322 = vmatprep.subr.mxu0 0.0
        %2323 = vmatpush1.msra.mxu0 0.0
        %2324 = vmatprep.subr.mxu0 0.0
        %2325 = vmatpush1.msra.mxu0 0.0
        %2326 = vmatprep.subr.mxu0 0.0
        %2327 = vmatpush1.msra.mxu0 0.0
        %2328 = vmatprep.subr.mxu0 0.0
        %2329 = vmatpush1.msra.mxu0 0.0
        %2330 = vmatprep.subr.mxu0 0.0
        %2331 = vmatpush1.msra.mxu0 0.0
        %2332 = vmatprep.subr.mxu0 0.0
        %2333 = vmatpush1.msra.mxu0 0.0
        %2334 = vmatprep.subr.mxu0 0.0
        %2335 = vmatpush1.msra.mxu0 0.0
        %2336 = vmatprep.subr.mxu0 0.0
        %2337 = vmatpush1.msra.mxu0 0.0
        %2338 = vmatprep.subr.mxu0 0.0
        %2339 = vmatpush1.msra.mxu0 0.0
        %2340 = vmatprep.subr.mxu0 0.0
        %2341 = vmatpush1.msra.mxu0 0.0
        %2342 = vmatprep.subr.mxu0 0.0
        %2343 = vmatpush1.msra.mxu0 0.0
        %2344 = vmatprep.subr.mxu0 0.0
        %2345 = vmatpush1.msra.mxu0 0.0
        %2346 = vmatprep.subr.mxu0 0.0
        %2347 = vmatpush1.msra.mxu0 0.0
        %2348 = vmatprep.subr.mxu0 0.0
        %2349 = vmatpush1.msra.mxu0 0.0
        %2350 = vmatprep.subr.mxu0 0.0
        %2351 = vmatpush1.msra.mxu0 %v2315
        %2352 = vmatprep.subr.mxu0 0.0
        %2353 = vmatpush2.msra.mxu0 0.0
        %2354 = vmatprep.subr.mxu0 0.0
        %2355 = vmatpush2.msra.mxu0 0.0
        %2356 = vmatprep.subr.mxu0 0.0
        %2357 = vmatpush2.msra.mxu0 0.0
        %2358 = vmatprep.subr.mxu0 0.0
        %2359 = vmatpush2.msra.mxu0 0.0
        %2360 = vmatprep.subr.mxu0 0.0
        %2361 = vmatpush2.msra.mxu0 0.0
        %2362 = vmatprep.subr.mxu0 0.0
        %2363 = vmatpush2.msra.mxu0 0.0
        %2364 = vmatprep.subr.mxu0 0.0
        %2365 = vmatpush2.msra.mxu0 0.0
        %2366 = vmatprep.subr.mxu0 0.0
        %2367 = vmatpush2.msra.mxu0 0.0
        %2368 = vmatprep.subr.mxu0 0.0
        %2369 = vmatpush2.msra.mxu0 0.0
        %2370 = vmatprep.subr.mxu0 0.0
        %2371 = vmatpush2.msra.mxu0 0.0
        %2372 = vmatprep.subr.mxu0 0.0
        %2373 = vmatpush2.msra.mxu0 0.0
        %2374 = vmatprep.subr.mxu0 0.0
        %2375 = vmatpush2.msra.mxu0 0.0
        %2376 = vmatprep.subr.mxu0 0.0
        %2377 = vmatpush2.msra.mxu0 0.0
        %2378 = vmatprep.subr.mxu0 0.0
        %2379 = vmatpush2.msra.mxu0 0.0
        %2380 = vmatprep.subr.mxu0 0.0
        %2381 = vmatpush2.msra.mxu0 0.0
        %2382 = vmatprep.subr.mxu0 0.0
        %2383 = vmatpush2.msra.mxu0 0.0
        %2384 = vmatprep.mubr.f32.mxu0 0.0
        %2385 = vmatmul.mubr.f32.gmra.mxu0 %v2318
        %v2386 = vpop.f32.mrf.mxu0
        %v2387 = vadd.f32 0.0, %v2386
        %v2388 = vpop.f32.mrf.mxu0
        %2389 = vdwg.mxu0
        %2391 = vrot.lane.b32.xlu0 %v2057, 8
        %v2392 = vpop.permute.xlu0 %2391
        %2395 = vrot.lane.b32.xlu0 %v2222, 16
        %v2396 = vpop.permute.xlu0 %2395
        %2399 = vrot.lane.b32.xlu0 %v2387, 24
        %v2400 = vpop.permute.xlu0 %2399
        %v2402 = vsel %vm496, %v1891, %v2392
        %v2403 = vsel %vm1165, %v2402, %v2396
        %v2404 = vsel %vm1167, %v2403, %v2400
        %v2405 = vpack.c.bf16 %v2404, %v2404
        %v2406 = vlaneseq
        %v2407 = vshrl.u32 %v2406, 7
        %v2408 = vsub.s32 0, %v2407
        %v2409 = vrot.slane %v1537, %v2408
        %v2414 = vunpack.c.l.b16 %v1530
        %v2415 = vunpack.c.l.b16 %v1531
        %v2416 = vunpack.c.l.b16 %v1532
        %v2417 = vunpack.c.l.b16 %v1533
        %v2418 = vpack.c.b16 %v2415, %v2414
        %v2419 = vpack.c.b16 %v2417, %v2416
        %v2423 = vsel %vm1186, %v2405, 0
        %2425 = vmatprep.subr.bf16.mxu0 0
        %2426 = vmatpush1.bf16.msra.mxu0 0
        %2427 = vmatprep.subr.bf16.mxu0 0
        %2428 = vmatpush1.bf16.msra.mxu0 0
        %2429 = vmatprep.subr.bf16.mxu0 0
        %2430 = vmatpush1.bf16.msra.mxu0 0
        %2431 = vmatprep.subr.bf16.mxu0 0
        %2432 = vmatpush1.bf16.msra.mxu0 0
        %2433 = vmatprep.subr.bf16.mxu0 0
        %2434 = vmatpush1.bf16.msra.mxu0 0
        %2435 = vmatprep.subr.bf16.mxu0 0
        %2436 = vmatpush1.bf16.msra.mxu0 0
        %2437 = vmatprep.subr.bf16.mxu0 0
        %2438 = vmatpush1.bf16.msra.mxu0 %v2419
        %2439 = vmatprep.subr.bf16.mxu0 0
        %2440 = vmatpush1.bf16.msra.mxu0 %v2418
        %2441 = vmatprep.subr.bf16.mxu0 0
        %2442 = vmatpush2.bf16.msra.mxu0 0
        %2443 = vmatprep.subr.bf16.mxu0 0
        %2444 = vmatpush2.bf16.msra.mxu0 0
        %2445 = vmatprep.subr.bf16.mxu0 0
        %2446 = vmatpush2.bf16.msra.mxu0 0
        %2447 = vmatprep.subr.bf16.mxu0 0
        %2448 = vmatpush2.bf16.msra.mxu0 0
        %2449 = vmatprep.subr.bf16.mxu0 0
        %2450 = vmatpush2.bf16.msra.mxu0 0
        %2451 = vmatprep.subr.bf16.mxu0 0
        %2452 = vmatpush2.bf16.msra.mxu0 0
        %2453 = vmatprep.subr.bf16.mxu0 0
        %2454 = vmatpush2.bf16.msra.mxu0 0
        %2455 = vmatprep.subr.bf16.mxu0 0
        %2456 = vmatpush2.bf16.msra.mxu0 0
        %2457 = vmatprep.mubr.bf16.mxu0 0
        %2458 = vmatmul.mubr.bf16.gmra.mxu0 %v2423
        %v2459 = vpop.f32.mrf.mxu0
        %v2460 = vadd.f32 %v2409, %v2459
        %v2461 = vpop.f32.mrf.mxu0
        %v2462 = vpop.f32.mrf.mxu0
        %v2463 = vpop.f32.mrf.mxu0
        %2464 = vdwg.mxu0
        %v2465 = vadd.f32 %v1464, %v2460
        %2466 = vadd.xlane.f32.xlu0 %v2465
        %v2467 = vpop.xlane.xlu0 %2466
        %v2468 = vmul.f32 %v2467, 0.03125
        %v2469 = vmul.f32 %v2465, %v2465
        %2470 = vadd.xlane.f32.xlu0 %v2469
        %v2471 = vpop.xlane.xlu0 %2470
        %v2472 = vmul.f32 %v2471, 0.03125
        %v2473 = vmul.f32 %v2468, %v2468
        %v2474 = vsub.f32 %v2472, %v2473
        %v2475 = vsub.f32 %v2465, %v2468
        %v2476 = vadd.f32 %v2474, 1e-05
        %v2477 = vrsqrt.pop %v2476
        %v2478 = vmul.f32 %v2475, %v2477
        %v2479 = vlaneseq
        %v2480 = vshrl.u32 %v2479, 7
        %v2481 = vsub.s32 0, %v2480
        %v2482 = vrot.slane %v1540, %v2481
        %v2483 = vmul.f32 %v2478, %v2482
        %v2484 = vlaneseq
        %v2485 = vshrl.u32 %v2484, 7
        %v2486 = vsub.s32 0, %v2485
        %v2487 = vrot.slane %v1541, %v2486
        %v2488 = vadd.f32 %v2483, %v2487
        %v2489 = vpack.c.bf16 %v2488, %v2488
        %v2490 = vlaneseq
        %v2491 = vshrl.u32 %v2490, 7
        %v2492 = vsub.s32 0, %v2491
        %v2493 = vrot.slane %v1538, %v2492
        %v2510 = vunpack.c.l.b16 %v1498
        %v2511 = vunpack.c.l.b16 %v1499
        %v2512 = vunpack.c.l.b16 %v1500
        %v2513 = vunpack.c.l.b16 %v1501
        %v2514 = vunpack.c.l.b16 %v1502
        %v2515 = vunpack.c.l.b16 %v1503
        %v2516 = vunpack.c.l.b16 %v1504
        %v2517 = vunpack.c.l.b16 %v1505
        %v2518 = vunpack.c.l.b16 %v1506
        %v2519 = vunpack.c.l.b16 %v1507
        %v2520 = vunpack.c.l.b16 %v1508
        %v2521 = vunpack.c.l.b16 %v1509
        %v2522 = vunpack.c.l.b16 %v1510
        %v2523 = vunpack.c.l.b16 %v1511
        %v2524 = vunpack.c.l.b16 %v1512
        %v2525 = vunpack.c.l.b16 %v1513
        %v2526 = vpack.c.b16 %v2511, %v2510
        %v2527 = vpack.c.b16 %v2513, %v2512
        %v2528 = vpack.c.b16 %v2515, %v2514
        %v2529 = vpack.c.b16 %v2517, %v2516
        %v2530 = vpack.c.b16 %v2519, %v2518
        %v2531 = vpack.c.b16 %v2521, %v2520
        %v2532 = vpack.c.b16 %v2523, %v2522
        %v2533 = vpack.c.b16 %v2525, %v2524
        %2542 = vmatprep.subr.bf16.mxu0 0
        %2543 = vmatpush1.bf16.msra.mxu0 %v2533
        %2544 = vmatprep.subr.bf16.mxu0 0
        %2545 = vmatpush1.bf16.msra.mxu0 %v2532
        %2546 = vmatprep.subr.bf16.mxu0 0
        %2547 = vmatpush1.bf16.msra.mxu0 %v2531
        %2548 = vmatprep.subr.bf16.mxu0 0
        %2549 = vmatpush1.bf16.msra.mxu0 %v2530
        %2550 = vmatprep.subr.bf16.mxu0 0
        %2551 = vmatpush1.bf16.msra.mxu0 %v2529
        %2552 = vmatprep.subr.bf16.mxu0 0
        %2553 = vmatpush1.bf16.msra.mxu0 %v2528
        %2554 = vmatprep.subr.bf16.mxu0 0
        %2555 = vmatpush1.bf16.msra.mxu0 %v2527
        %2556 = vmatprep.subr.bf16.mxu0 0
        %2557 = vmatpush1.bf16.msra.mxu0 %v2526
        %2558 = vmatprep.subr.bf16.mxu0 0
        %2559 = vmatpush2.bf16.msra.mxu0 0
        %2560 = vmatprep.subr.bf16.mxu0 0
        %2561 = vmatpush2.bf16.msra.mxu0 0
        %2562 = vmatprep.subr.bf16.mxu0 0
        %2563 = vmatpush2.bf16.msra.mxu0 0
        %2564 = vmatprep.subr.bf16.mxu0 0
        %2565 = vmatpush2.bf16.msra.mxu0 0
        %2566 = vmatprep.subr.bf16.mxu0 0
        %2567 = vmatpush2.bf16.msra.mxu0 0
        %2568 = vmatprep.subr.bf16.mxu0 0
        %2569 = vmatpush2.bf16.msra.mxu0 0
        %2570 = vmatprep.subr.bf16.mxu0 0
        %2571 = vmatpush2.bf16.msra.mxu0 0
        %2572 = vmatprep.subr.bf16.mxu0 0
        %2573 = vmatpush2.bf16.msra.mxu0 0
        %2574 = vmatprep.mubr.bf16.mxu0 0
        %2575 = vmatmul.mubr.bf16.gmra.mxu0 %v2489
        %v2576 = vpop.f32.mrf.mxu0
        %v2577 = vadd.f32 %v2493, %v2576
        %v2578 = vpop.f32.mrf.mxu0
        %v2579 = vpop.f32.mrf.mxu0
        %v2580 = vpop.f32.mrf.mxu0
        %2581 = vdwg.mxu0
        %v2582 = vmax.f32 %v2577, 0.0
        %v2583 = vpack.c.bf16 %v2582, %v2582
        %v2584 = vlaneseq
        %v2585 = vshrl.u32 %v2584, 7
        %v2586 = vsub.s32 0, %v2585
        %v2587 = vrot.slane %v1539, %v2586
        %v2604 = vunpack.c.l.b16 %v1514
        %v2605 = vunpack.c.l.b16 %v1515
        %v2606 = vunpack.c.l.b16 %v1516
        %v2607 = vunpack.c.l.b16 %v1517
        %v2608 = vunpack.c.l.b16 %v1518
        %v2609 = vunpack.c.l.b16 %v1519
        %v2610 = vunpack.c.l.b16 %v1520
        %v2611 = vunpack.c.l.b16 %v1521
        %v2612 = vunpack.c.l.b16 %v1522
        %v2613 = vunpack.c.l.b16 %v1523
        %v2614 = vunpack.c.l.b16 %v1524
        %v2615 = vunpack.c.l.b16 %v1525
        %v2616 = vunpack.c.l.b16 %v1526
        %v2617 = vunpack.c.l.b16 %v1527
        %v2618 = vunpack.c.l.b16 %v1528
        %v2619 = vunpack.c.l.b16 %v1529
        %v2620 = vpack.c.b16 %v2605, %v2604
        %v2621 = vpack.c.b16 %v2607, %v2606
        %v2622 = vpack.c.b16 %v2609, %v2608
        %v2623 = vpack.c.b16 %v2611, %v2610
        %v2624 = vpack.c.b16 %v2613, %v2612
        %v2625 = vpack.c.b16 %v2615, %v2614
        %v2626 = vpack.c.b16 %v2617, %v2616
        %v2627 = vpack.c.b16 %v2619, %v2618
        %2636 = vmatprep.subr.bf16.mxu0 0
        %2637 = vmatpush1.bf16.msra.mxu0 %v2627
        %2638 = vmatprep.subr.bf16.mxu0 0
        %2639 = vmatpush1.bf16.msra.mxu0 %v2626
        %2640 = vmatprep.subr.bf16.mxu0 0
        %2641 = vmatpush1.bf16.msra.mxu0 %v2625
        %2642 = vmatprep.subr.bf16.mxu0 0
        %2643 = vmatpush1.bf16.msra.mxu0 %v2624
        %2644 = vmatprep.subr.bf16.mxu0 0
        %2645 = vmatpush1.bf16.msra.mxu0 %v2623
        %2646 = vmatprep.subr.bf16.mxu0 0
        %2647 = vmatpush1.bf16.msra.mxu0 %v2622
        %2648 = vmatprep.subr.bf16.mxu0 0
        %2649 = vmatpush1.bf16.msra.mxu0 %v2621
        %2650 = vmatprep.subr.bf16.mxu0 0
        %2651 = vmatpush1.bf16.msra.mxu0 %v2620
        %2652 = vmatprep.subr.bf16.mxu0 0
        %2653 = vmatpush2.bf16.msra.mxu0 0
        %2654 = vmatprep.subr.bf16.mxu0 0
        %2655 = vmatpush2.bf16.msra.mxu0 0
        %2656 = vmatprep.subr.bf16.mxu0 0
        %2657 = vmatpush2.bf16.msra.mxu0 0
        %2658 = vmatprep.subr.bf16.mxu0 0
        %2659 = vmatpush2.bf16.msra.mxu0 0
        %2660 = vmatprep.subr.bf16.mxu0 0
        %2661 = vmatpush2.bf16.msra.mxu0 0
        %2662 = vmatprep.subr.bf16.mxu0 0
        %2663 = vmatpush2.bf16.msra.mxu0 0
        %2664 = vmatprep.subr.bf16.mxu0 0
        %2665 = vmatpush2.bf16.msra.mxu0 0
        %2666 = vmatprep.subr.bf16.mxu0 0
        %2667 = vmatpush2.bf16.msra.mxu0 0
        %2668 = vmatprep.mubr.bf16.mxu0 0
        %2669 = vmatmul.mubr.bf16.gmra.mxu0 %v2583
        %v2670 = vpop.f32.mrf.mxu0
        %v2671 = vadd.f32 %v2587, %v2670
        %v2672 = vpop.f32.mrf.mxu0
        %v2673 = vpop.f32.mrf.mxu0
        %v2674 = vpop.f32.mrf.mxu0
        %2675 = vdwg.mxu0
        %v2676 = vadd.f32 %v2488, %v2671
        %2677 = vadd.xlane.f32.xlu0 %v2676
        %v2678 = vpop.xlane.xlu0 %2677
        %v2679 = vmul.f32 %v2678, 0.03125
        %v2680 = vmul.f32 %v2676, %v2676
        %2681 = vadd.xlane.f32.xlu0 %v2680
        %v2682 = vpop.xlane.xlu0 %2681
        %v2683 = vmul.f32 %v2682, 0.03125
        %v2684 = vmul.f32 %v2679, %v2679
        %v2685 = vsub.f32 %v2683, %v2684
        %v2686 = vsub.f32 %v2676, %v2679
        %v2687 = vadd.f32 %v2685, 1e-05
        %v2688 = vrsqrt.pop %v2687
        %v2689 = vmul.f32 %v2686, %v2688
        %v2690 = vlaneseq
        %v2691 = vshrl.u32 %v2690, 7
        %v2692 = vsub.s32 0, %v2691
        %v2693 = vrot.slane %v1542, %v2692
        %v2694 = vmul.f32 %v2689, %v2693
        %v2695 = vlaneseq
        %v2696 = vshrl.u32 %v2695, 7
        %v2697 = vsub.s32 0, %v2696
        %v2698 = vrot.slane %v1543, %v2697
        %v2699 = vadd.f32 %v2694, %v2698
        %2700 = vst [vmem:[%s224] sm:$0xff] %v2699
        %p2701 = scmp.lt.s32.totalorder %s16, 1
        %s2702 = scalar_select %p2701, %s16, 1
        %s2703 = smul.addr %s2702, 8
        %s2704 = scalar_lea.vmem %s4, %s2703
        // Predicated region
        $region41: #{transformer_encoder.1} parent=35 // pred_check
          %p2705 = pneg %p128
        $region42: #{transformer_encoder.1} parent=35 // pred_check_branch
          %2707 = sbr.rel (%p2705) target = $region44
        $region43: #{transformer_encoder.1} parent=35 // pred_region
          _
        $region44: #{transformer_encoder.1} parent=35 // pred_fallthru
          _
      $region36: #{transformer_encoder.1} parent=5 // pred_fallthru
        _
      %p2708 = scmp.le.s32.totalorder 2, %s11
      // Predicated region
      $region45: #{transformer_encoder.1} parent=5 // pred_check
        %p2709 = pneg %p2708
      $region46: #{transformer_encoder.1} parent=5 // pred_check_branch
        %2711 = sbr.rel (%p2709) target = $region48
      $region47: #{transformer_encoder.1} parent=5 // pred_region
        %s2712 = ssub.s32 %s11, 2
        // Predicated region
        $region49: #{transformer_encoder.1} parent=47 // pred_check
          %p2713 = pneg %p134
        $region50: #{transformer_encoder.1} parent=47 // pred_check_branch
          %2715 = sbr.rel (%p2713) target = $region52
        $region51: #{transformer_encoder.1} parent=47 // pred_region
          %p2716 = scmp.lt.s32.totalorder %s17, 1
          %s2717 = scalar_select %p2716, %s17, 1
          %s2718 = smul.addr %s2717, 8
          %s2719 = scalar_lea.vmem %s4, %s2718
        $region52: #{transformer_encoder.1} parent=47 // pred_fallthru
          _
      $region48: #{transformer_encoder.1} parent=5 // pred_fallthru
        _
    $region6: #{transformer_encoder.1} parent=1 // loop_footer
      %s15 = sadd.s32 1, %s11
    $region7: #{transformer_encoder.1} parent=1 // loop_footer_branch
      %10 = sbr.rel target = $region3
    $region8: #{transformer_encoder.1} parent=1 // loop_exit
      _
    %2720 = vsyncpa [#allocation3], 1
    %s2721 = scalar_lea.sflag [#allocation3], 1
    %2722 = vsyncpa %s2721, 1

</llo_original>
